<compile_context>
chip_gen: v6e
topology: v6e:2x2x1
jax: 0.10.0
libtpu: 0.0.40
codegen_flags: <defaults>
</compile_context>

<pallas_src>
import functools

import jax
import jax.numpy as jnp
from jax.experimental import pallas as pl
from jax.experimental.pallas import tpu as pltpu


# ----------------------------------------------------------------------------
# fused kernel body (one batch element per grid step)
# ----------------------------------------------------------------------------
def _mfm_conv(pad_ref, patch_ref, w_ref, b_ref, *, H, W, C):
    """3x3 conv (pre-padded VMEM input) -> +bias -> max-feature-map.

    pad_ref:   (H+2, W+2, C) VMEM, zero halo, data in interior
    patch_ref: (H*W, 9*C)    VMEM im2col scratch
    w_ref:     (9*C, 2*C)    taps flattened (kh, kw, cin) row-major
    b_ref:     (1, 2*C)
    returns:   (H*W, C) f32
    """
    # im2col: write each tap's (H*W, C) slab into its column block, then do a
    # single matmul with contraction depth 9*C instead of 9 K=C matmuls.
    for ki in range(3):
        for kj in range(3):
            t = ki * 3 + kj
            slab = pad_ref[ki:ki + H, kj:kj + W, :].reshape(H * W, C)
            patch_ref[:, t * C:(t + 1) * C] = slab
    y = jnp.dot(patch_ref[...], w_ref[...],
                preferred_element_type=jnp.float32) + b_ref[...]
    # mfm activation: elementwise max of the two channel halves.
    return jnp.maximum(y[:, :C], y[:, C:])


def _resblock_kernel(x_ref, w1_ref, b1_ref, w2_ref, b2_ref, o_ref,
                     xpad_ref, hpad_ref, patch_ref, *, H, W, C):
    # Zero the halo scratches once; interiors are fully rewritten every step
    # and the borders are never touched again.
    @pl.when(pl.program_id(0) == 0)
    def _():
        xpad_ref[...] = jnp.zeros_like(xpad_ref)
        hpad_ref[...] = jnp.zeros_like(hpad_ref)

    # pad x into VMEM (SAME padding for 3x3/stride-1), no HBM padded copy
    xpad_ref[1:H + 1, 1:W + 1, :] = x_ref[0]

    # mfm1: conv3x3 + bias + channel-half max  (stays in VMEM / vregs)
    h1 = _mfm_conv(xpad_ref, patch_ref, w1_ref, b1_ref, H=H, W=W, C=C)

    # pad h1 for the second conv
    hpad_ref[1:H + 1, 1:W + 1, :] = h1.reshape(H, W, C)

    # mfm2
    h2 = _mfm_conv(hpad_ref, patch_ref, w2_ref, b2_ref, H=H, W=W, C=C)

    # residual add + store
    o_ref[0] = (h2.reshape(H, W, C) + x_ref[0]).astype(o_ref.dtype)


# ----------------------------------------------------------------------------
# wrapper: NCHW in / NCHW out, one pallas_call for the whole block
# ----------------------------------------------------------------------------
def resblock_forward(x_nchw, params):
    x = jnp.transpose(x_nchw, (0, 2, 3, 1))  # NCHW -> NHWC
    N, H, W, C = x.shape
    kernel = functools.partial(_resblock_kernel, H=H, W=W, C=C)
    out = pl.pallas_call(
        kernel,
        out_shape=jax.ShapeDtypeStruct((N, H, W, C), jnp.float32),
        grid=(N,),
        in_specs=[
            pl.BlockSpec((1, H, W, C), lambda n: (n, 0, 0, 0)),      # x
            pl.BlockSpec((9 * C, 2 * C), lambda n: (0, 0)),          # w1
            pl.BlockSpec((1, 2 * C), lambda n: (0, 0)),              # b1
            pl.BlockSpec((9 * C, 2 * C), lambda n: (0, 0)),          # w2
            pl.BlockSpec((1, 2 * C), lambda n: (0, 0)),              # b2
        ],
        out_specs=pl.BlockSpec((1, H, W, C), lambda n: (n, 0, 0, 0)),
        scratch_shapes=[
            pltpu.VMEM((H + 2, W + 2, C), jnp.float32),   # padded x
            pltpu.VMEM((H + 2, W + 2, C), jnp.float32),   # padded h1
            pltpu.VMEM((H * W, 9 * C), jnp.float32),      # im2col patches
        ],
        compiler_params=pltpu.CompilerParams(
            dimension_semantics=("parallel",),
            vmem_limit_bytes=32 * 1024 * 1024),
    )(x, params["w1"], params["b1"], params["w2"], params["b2"])
    return jnp.transpose(out, (0, 3, 1, 2))  # NHWC -> NCHW


# ----------------------------------------------------------------------------
# pure-JAX reference (correctness check only)
# ----------------------------------------------------------------------------
def _mfm_ref(x, w_hwio, b, C):
    y = jax.lax.conv_general_dilated(
        x, w_hwio, window_strides=(1, 1), padding="SAME",
        dimension_numbers=("NHWC", "HWIO", "NHWC")) + b
    return jnp.maximum(y[..., :C], y[..., C:])


def resblock_ref(x_nchw, raw, C):
    x = jnp.transpose(x_nchw, (0, 2, 3, 1))
    h = _mfm_ref(x, raw["w1"], raw["b1"], C)
    h = _mfm_ref(h, raw["w2"], raw["b2"], C)
    return jnp.transpose(h + x, (0, 3, 1, 2))


# ----------------------------------------------------------------------------
if __name__ == "__main__":
    # resblock's residual add requires in_channels == out_channels
    N, C, H, W = 2, 4, 16, 16

    key = jax.random.PRNGKey(0)
    kx, k1, k2, kb1, kb2 = jax.random.split(key, 5)

    x = jax.random.normal(kx, (N, C, H, W), jnp.float32)

    # PyTorch conv weights are OIHW with O = 2*out_channels (mfm doubles, then maxes)
    w1_oihw = 0.1 * jax.random.normal(k1, (2 * C, C, 3, 3), jnp.float32)
    w2_oihw = 0.1 * jax.random.normal(k2, (2 * C, C, 3, 3), jnp.float32)
    b1 = 0.05 * jax.random.normal(kb1, (2 * C,), jnp.float32)
    b2 = 0.05 * jax.random.normal(kb2, (2 * C,), jnp.float32)

    # OIHW -> HWIO for the reference conv; flatten taps (kh,kw,cin) for the kernel
    w1_hwio = jnp.transpose(w1_oihw, (2, 3, 1, 0))   # (3, 3, C, 2C)
    w2_hwio = jnp.transpose(w2_oihw, (2, 3, 1, 0))

    params = {
        "w1": w1_hwio.reshape(9 * C, 2 * C), "b1": b1.reshape(1, 2 * C),
        "w2": w2_hwio.reshape(9 * C, 2 * C), "b2": b2.reshape(1, 2 * C),
    }
    raw = {"w1": w1_hwio, "b1": b1, "w2": w2_hwio, "b2": b2}

    out = jax.block_until_ready(resblock_forward(x, params))
    ref = jax.block_until_ready(resblock_ref(x, raw, C))

    assert out.shape == (N, C, H, W), out.shape
    max_err = float(jnp.max(jnp.abs(out - ref)))
    assert jnp.allclose(out, ref, atol=1e-3, rtol=1e-3), max_err

    print("KERNEL_OK")
</pallas_src>

<mosaic_0001>
module attributes {stable_mosaic.version = 11 : i64} {
  func.func @_resblock_kernel(%arg0: i32, %arg1: memref<1x16x16x4xf32, #tpu.memory_space<vmem>>, %arg2: memref<36x8xf32, #tpu.memory_space<vmem>>, %arg3: memref<1x8xf32, #tpu.memory_space<vmem>>, %arg4: memref<36x8xf32, #tpu.memory_space<vmem>>, %arg5: memref<1x8xf32, #tpu.memory_space<vmem>>, %arg6: memref<1x16x16x4xf32, #tpu.memory_space<vmem>>, %arg7: memref<18x18x4xf32, #tpu.memory_space<vmem>>, %arg8: memref<18x18x4xf32, #tpu.memory_space<vmem>>, %arg9: memref<256x36xf32, #tpu.memory_space<vmem>>) attributes {dimension_semantics = [#tpu.dimension_semantics<parallel>], iteration_bounds = array<i64: 2>, scalar_prefetch = 0 : i64, scratch_operands = 3 : i64, tpu.core_type = #tpu.core_type<tc>, window_params = [{transform_indices = @transform_0, window_bounds = array<i64: 1, 16, 16, 4>}, {pipeline_mode = #tpu.pipeline_mode<synchronous>, transform_indices = @transform_1, window_bounds = array<i64: 36, 8>}, {pipeline_mode = #tpu.pipeline_mode<synchronous>, transform_indices = @transform_2, window_bounds = array<i64: 1, 8>}, {pipeline_mode = #tpu.pipeline_mode<synchronous>, transform_indices = @transform_3, window_bounds = array<i64: 36, 8>}, {pipeline_mode = #tpu.pipeline_mode<synchronous>, transform_indices = @transform_4, window_bounds = array<i64: 1, 8>}, {transform_indices = @transform_5, window_bounds = array<i64: 1, 16, 16, 4>}]} {
    %c0_i32 = arith.constant 0 : i32
    %0 = arith.cmpi eq, %arg0, %c0_i32 : i32
    %1 = arith.extui %0 : i1 to i32
    %c0_i32_0 = arith.constant 0 : i32
    %2 = arith.cmpi ne, %1, %c0_i32_0 : i32
    scf.if %2 {
      %cst_111 = arith.constant 0.000000e+00 : f32
      %87 = vector.broadcast %cst_111 : f32 to vector<18x18x4xf32>
      %c0_112 = arith.constant 0 : index
      %c0_113 = arith.constant 0 : index
      %c0_114 = arith.constant 0 : index
      %88 = vector.load %arg7[%c0_112, %c0_113, %c0_114] : memref<18x18x4xf32, #tpu.memory_space<vmem>>, vector<18x18x4xf32>
      tpu.vector_store %arg7[%c0_112, %c0_113, %c0_114], %87 {strides = array<i32>} : memref<18x18x4xf32, #tpu.memory_space<vmem>>, vector<18x18x4xf32>,
      %cst_115 = arith.constant 0.000000e+00 : f32
      %89 = vector.broadcast %cst_115 : f32 to vector<18x18x4xf32>
      %c0_116 = arith.constant 0 : index
      %c0_117 = arith.constant 0 : index
      %c0_118 = arith.constant 0 : index
      %90 = vector.load %arg8[%c0_116, %c0_117, %c0_118] : memref<18x18x4xf32, #tpu.memory_space<vmem>>, vector<18x18x4xf32>
      tpu.vector_store %arg8[%c0_116, %c0_117, %c0_118], %89 {strides = array<i32>} : memref<18x18x4xf32, #tpu.memory_space<vmem>>, vector<18x18x4xf32>,
    } else {
    }
    %c0 = arith.constant 0 : index
    %c0_1 = arith.constant 0 : index
    %c0_2 = arith.constant 0 : index
    %c0_3 = arith.constant 0 : index
    %3 = vector.load %arg1[%c0, %c0_1, %c0_2, %c0_3] : memref<1x16x16x4xf32, #tpu.memory_space<vmem>>, vector<1x16x16x4xf32>
    %4 = vector.shape_cast %3 : vector<1x16x16x4xf32> to vector<16x16x4xf32>
    %c1 = arith.constant 1 : index
    %c1_4 = arith.constant 1 : index
    %c0_5 = arith.constant 0 : index
    %5 = vector.load %arg7[%c1, %c1_4, %c0_5] : memref<18x18x4xf32, #tpu.memory_space<vmem>>, vector<16x16x4xf32>
    tpu.vector_store %arg7[%c1, %c1_4, %c0_5], %4 {strides = array<i32>} : memref<18x18x4xf32, #tpu.memory_space<vmem>>, vector<16x16x4xf32>,
    %c0_6 = arith.constant 0 : index
    %c0_7 = arith.constant 0 : index
    %c0_8 = arith.constant 0 : index
    %6 = vector.load %arg7[%c0_6, %c0_7, %c0_8] : memref<18x18x4xf32, #tpu.memory_space<vmem>>, vector<16x16x4xf32>
    %7 = vector.shape_cast %6 : vector<16x16x4xf32> to vector<256x4xf32>
    %c0_9 = arith.constant 0 : index
    %c0_10 = arith.constant 0 : index
    %8 = vector.load %arg9[%c0_9, %c0_10] : memref<256x36xf32, #tpu.memory_space<vmem>>, vector<256x4xf32>
    tpu.vector_store %arg9[%c0_9, %c0_10], %7 {strides = array<i32>} : memref<256x36xf32, #tpu.memory_space<vmem>>, vector<256x4xf32>,
    %c0_11 = arith.constant 0 : index
    %c1_12 = arith.constant 1 : index
    %c0_13 = arith.constant 0 : index
    %9 = vector.load %arg7[%c0_11, %c1_12, %c0_13] : memref<18x18x4xf32, #tpu.memory_space<vmem>>, vector<16x16x4xf32>
    %10 = vector.shape_cast %9 : vector<16x16x4xf32> to vector<256x4xf32>
    %c0_14 = arith.constant 0 : index
    %c4 = arith.constant 4 : index
    %11 = vector.load %arg9[%c0_14, %c4] : memref<256x36xf32, #tpu.memory_space<vmem>>, vector<256x4xf32>
    tpu.vector_store %arg9[%c0_14, %c4], %10 {strides = array<i32>} : memref<256x36xf32, #tpu.memory_space<vmem>>, vector<256x4xf32>,
    %c0_15 = arith.constant 0 : index
    %c2 = arith.constant 2 : index
    %c0_16 = arith.constant 0 : index
    %12 = vector.load %arg7[%c0_15, %c2, %c0_16] : memref<18x18x4xf32, #tpu.memory_space<vmem>>, vector<16x16x4xf32>
    %13 = vector.shape_cast %12 : vector<16x16x4xf32> to vector<256x4xf32>
    %c0_17 = arith.constant 0 : index
    %c8 = arith.constant 8 : index
    %14 = vector.load %arg9[%c0_17, %c8] : memref<256x36xf32, #tpu.memory_space<vmem>>, vector<256x4xf32>
    tpu.vector_store %arg9[%c0_17, %c8], %13 {strides = array<i32>} : memref<256x36xf32, #tpu.memory_space<vmem>>, vector<256x4xf32>,
    %c1_18 = arith.constant 1 : index
    %c0_19 = arith.constant 0 : index
    %c0_20 = arith.constant 0 : index
    %15 = vector.load %arg7[%c1_18, %c0_19, %c0_20] : memref<18x18x4xf32, #tpu.memory_space<vmem>>, vector<16x16x4xf32>
    %16 = vector.shape_cast %15 : vector<16x16x4xf32> to vector<256x4xf32>
    %c0_21 = arith.constant 0 : index
    %c12 = arith.constant 12 : index
    %17 = vector.load %arg9[%c0_21, %c12] : memref<256x36xf32, #tpu.memory_space<vmem>>, vector<256x4xf32>
    tpu.vector_store %arg9[%c0_21, %c12], %16 {strides = array<i32>} : memref<256x36xf32, #tpu.memory_space<vmem>>, vector<256x4xf32>,
    %c1_22 = arith.constant 1 : index
    %c1_23 = arith.constant 1 : index
    %c0_24 = arith.constant 0 : index
    %18 = vector.load %arg7[%c1_22, %c1_23, %c0_24] : memref<18x18x4xf32, #tpu.memory_space<vmem>>, vector<16x16x4xf32>
    %19 = vector.shape_cast %18 : vector<16x16x4xf32> to vector<256x4xf32>
    %c0_25 = arith.constant 0 : index
    %c16 = arith.constant 16 : index
    %20 = vector.load %arg9[%c0_25, %c16] : memref<256x36xf32, #tpu.memory_space<vmem>>, vector<256x4xf32>
    tpu.vector_store %arg9[%c0_25, %c16], %19 {strides = array<i32>} : memref<256x36xf32, #tpu.memory_space<vmem>>, vector<256x4xf32>,
    %c1_26 = arith.constant 1 : index
    %c2_27 = arith.constant 2 : index
    %c0_28 = arith.constant 0 : index
    %21 = vector.load %arg7[%c1_26, %c2_27, %c0_28] : memref<18x18x4xf32, #tpu.memory_space<vmem>>, vector<16x16x4xf32>
    %22 = vector.shape_cast %21 : vector<16x16x4xf32> to vector<256x4xf32>
    %c0_29 = arith.constant 0 : index
    %c20 = arith.constant 20 : index
    %23 = vector.load %arg9[%c0_29, %c20] : memref<256x36xf32, #tpu.memory_space<vmem>>, vector<256x4xf32>
    tpu.vector_store %arg9[%c0_29, %c20], %22 {strides = array<i32>} : memref<256x36xf32, #tpu.memory_space<vmem>>, vector<256x4xf32>,
    %c2_30 = arith.constant 2 : index
    %c0_31 = arith.constant 0 : index
    %c0_32 = arith.constant 0 : index
    %24 = vector.load %arg7[%c2_30, %c0_31, %c0_32] : memref<18x18x4xf32, #tpu.memory_space<vmem>>, vector<16x16x4xf32>
    %25 = vector.shape_cast %24 : vector<16x16x4xf32> to vector<256x4xf32>
    %c0_33 = arith.constant 0 : index
    %c24 = arith.constant 24 : index
    %26 = vector.load %arg9[%c0_33, %c24] : memref<256x36xf32, #tpu.memory_space<vmem>>, vector<256x4xf32>
    tpu.vector_store %arg9[%c0_33, %c24], %25 {strides = array<i32>} : memref<256x36xf32, #tpu.memory_space<vmem>>, vector<256x4xf32>,
    %c2_34 = arith.constant 2 : index
    %c1_35 = arith.constant 1 : index
    %c0_36 = arith.constant 0 : index
    %27 = vector.load %arg7[%c2_34, %c1_35, %c0_36] : memref<18x18x4xf32, #tpu.memory_space<vmem>>, vector<16x16x4xf32>
    %28 = vector.shape_cast %27 : vector<16x16x4xf32> to vector<256x4xf32>
    %c0_37 = arith.constant 0 : index
    %c28 = arith.constant 28 : index
    %29 = vector.load %arg9[%c0_37, %c28] : memref<256x36xf32, #tpu.memory_space<vmem>>, vector<256x4xf32>
    tpu.vector_store %arg9[%c0_37, %c28], %28 {strides = array<i32>} : memref<256x36xf32, #tpu.memory_space<vmem>>, vector<256x4xf32>,
    %c2_38 = arith.constant 2 : index
    %c2_39 = arith.constant 2 : index
    %c0_40 = arith.constant 0 : index
    %30 = vector.load %arg7[%c2_38, %c2_39, %c0_40] : memref<18x18x4xf32, #tpu.memory_space<vmem>>, vector<16x16x4xf32>
    %31 = vector.shape_cast %30 : vector<16x16x4xf32> to vector<256x4xf32>
    %c0_41 = arith.constant 0 : index
    %c32 = arith.constant 32 : index
    %32 = vector.load %arg9[%c0_41, %c32] : memref<256x36xf32, #tpu.memory_space<vmem>>, vector<256x4xf32>
    tpu.vector_store %arg9[%c0_41, %c32], %31 {strides = array<i32>} : memref<256x36xf32, #tpu.memory_space<vmem>>, vector<256x4xf32>,
    %c0_42 = arith.constant 0 : index
    %c0_43 = arith.constant 0 : index
    %33 = vector.load %arg9[%c0_42, %c0_43] : memref<256x36xf32, #tpu.memory_space<vmem>>, vector<256x36xf32>
    %c0_44 = arith.constant 0 : index
    %c0_45 = arith.constant 0 : index
    %34 = vector.load %arg2[%c0_44, %c0_45] : memref<36x8xf32, #tpu.memory_space<vmem>>, vector<36x8xf32>
    %cst = arith.constant dense<0.000000e+00> : vector<256x8xf32>
    %35 = tpu.matmul %33, %34, %cst {dimension_numbers = #tpu.dot_dimension_numbers<[1], [0], [0], [1], [0, 0, 1, 1], [], []>} : vector<256x36xf32>, vector<36x8xf32>, vector<256x8xf32> -> vector<256x8xf32>
    %c0_46 = arith.constant 0 : index
    %c0_47 = arith.constant 0 : index
    %36 = vector.load %arg3[%c0_46, %c0_47] : memref<1x8xf32, #tpu.memory_space<vmem>>, vector<1x8xf32>
    %37 = vector.broadcast %36 : vector<1x8xf32> to vector<256x8xf32>
    %38 = arith.addf %35, %37 : vector<256x8xf32>
    %39 = vector.extract_strided_slice %38 {offsets = [0, 0], sizes = [256, 4], strides = [1, 1]} : vector<256x8xf32> to vector<256x4xf32>
    %40 = vector.extract_strided_slice %38 {offsets = [0, 4], sizes = [256, 4], strides = [1, 1]} : vector<256x8xf32> to vector<256x4xf32>
    %41 = arith.maximumf %39, %40 : vector<256x4xf32>
    %42 = vector.shape_cast %41 : vector<256x4xf32> to vector<16x16x4xf32>
    %c1_48 = arith.constant 1 : index
    %c1_49 = arith.constant 1 : index
    %c0_50 = arith.constant 0 : index
    %43 = vector.load %arg8[%c1_48, %c1_49, %c0_50] : memref<18x18x4xf32, #tpu.memory_space<vmem>>, vector<16x16x4xf32>
    tpu.vector_store %arg8[%c1_48, %c1_49, %c0_50], %42 {strides = array<i32>} : memref<18x18x4xf32, #tpu.memory_space<vmem>>, vector<16x16x4xf32>,
    %c0_51 = arith.constant 0 : index
    %c0_52 = arith.constant 0 : index
    %c0_53 = arith.constant 0 : index
    %44 = vector.load %arg8[%c0_51, %c0_52, %c0_53] : memref<18x18x4xf32, #tpu.memory_space<vmem>>, vector<16x16x4xf32>
    %45 = vector.shape_cast %44 : vector<16x16x4xf32> to vector<256x4xf32>
    %c0_54 = arith.constant 0 : index
    %c0_55 = arith.constant 0 : index
    %46 = vector.load %arg9[%c0_54, %c0_55] : memref<256x36xf32, #tpu.memory_space<vmem>>, vector<256x4xf32>
    tpu.vector_store %arg9[%c0_54, %c0_55], %45 {strides = array<i32>} : memref<256x36xf32, #tpu.memory_space<vmem>>, vector<256x4xf32>,
    %c0_56 = arith.constant 0 : index
    %c1_57 = arith.constant 1 : index
    %c0_58 = arith.constant 0 : index
    %47 = vector.load %arg8[%c0_56, %c1_57, %c0_58] : memref<18x18x4xf32, #tpu.memory_space<vmem>>, vector<16x16x4xf32>
    %48 = vector.shape_cast %47 : vector<16x16x4xf32> to vector<256x4xf32>
    %c0_59 = arith.constant 0 : index
    %c4_60 = arith.constant 4 : index
    %49 = vector.load %arg9[%c0_59, %c4_60] : memref<256x36xf32, #tpu.memory_space<vmem>>, vector<256x4xf32>
    tpu.vector_store %arg9[%c0_59, %c4_60], %48 {strides = array<i32>} : memref<256x36xf32, #tpu.memory_space<vmem>>, vector<256x4xf32>,
    %c0_61 = arith.constant 0 : index
    %c2_62 = arith.constant 2 : index
    %c0_63 = arith.constant 0 : index
    %50 = vector.load %arg8[%c0_61, %c2_62, %c0_63] : memref<18x18x4xf32, #tpu.memory_space<vmem>>, vector<16x16x4xf32>
    %51 = vector.shape_cast %50 : vector<16x16x4xf32> to vector<256x4xf32>
    %c0_64 = arith.constant 0 : index
    %c8_65 = arith.constant 8 : index
    %52 = vector.load %arg9[%c0_64, %c8_65] : memref<256x36xf32, #tpu.memory_space<vmem>>, vector<256x4xf32>
    tpu.vector_store %arg9[%c0_64, %c8_65], %51 {strides = array<i32>} : memref<256x36xf32, #tpu.memory_space<vmem>>, vector<256x4xf32>,
    %c1_66 = arith.constant 1 : index
    %c0_67 = arith.constant 0 : index
    %c0_68 = arith.constant 0 : index
    %53 = vector.load %arg8[%c1_66, %c0_67, %c0_68] : memref<18x18x4xf32, #tpu.memory_space<vmem>>, vector<16x16x4xf32>
    %54 = vector.shape_cast %53 : vector<16x16x4xf32> to vector<256x4xf32>
    %c0_69 = arith.constant 0 : index
    %c12_70 = arith.constant 12 : index
    %55 = vector.load %arg9[%c0_69, %c12_70] : memref<256x36xf32, #tpu.memory_space<vmem>>, vector<256x4xf32>
    tpu.vector_store %arg9[%c0_69, %c12_70], %54 {strides = array<i32>} : memref<256x36xf32, #tpu.memory_space<vmem>>, vector<256x4xf32>,
    %c1_71 = arith.constant 1 : index
    %c1_72 = arith.constant 1 : index
    %c0_73 = arith.constant 0 : index
    %56 = vector.load %arg8[%c1_71, %c1_72, %c0_73] : memref<18x18x4xf32, #tpu.memory_space<vmem>>, vector<16x16x4xf32>
    %57 = vector.shape_cast %56 : vector<16x16x4xf32> to vector<256x4xf32>
    %c0_74 = arith.constant 0 : index
    %c16_75 = arith.constant 16 : index
    %58 = vector.load %arg9[%c0_74, %c16_75] : memref<256x36xf32, #tpu.memory_space<vmem>>, vector<256x4xf32>
    tpu.vector_store %arg9[%c0_74, %c16_75], %57 {strides = array<i32>} : memref<256x36xf32, #tpu.memory_space<vmem>>, vector<256x4xf32>,
    %c1_76 = arith.constant 1 : index
    %c2_77 = arith.constant 2 : index
    %c0_78 = arith.constant 0 : index
    %59 = vector.load %arg8[%c1_76, %c2_77, %c0_78] : memref<18x18x4xf32, #tpu.memory_space<vmem>>, vector<16x16x4xf32>
    %60 = vector.shape_cast %59 : vector<16x16x4xf32> to vector<256x4xf32>
    %c0_79 = arith.constant 0 : index
    %c20_80 = arith.constant 20 : index
    %61 = vector.load %arg9[%c0_79, %c20_80] : memref<256x36xf32, #tpu.memory_space<vmem>>, vector<256x4xf32>
    tpu.vector_store %arg9[%c0_79, %c20_80], %60 {strides = array<i32>} : memref<256x36xf32, #tpu.memory_space<vmem>>, vector<256x4xf32>,
    %c2_81 = arith.constant 2 : index
    %c0_82 = arith.constant 0 : index
    %c0_83 = arith.constant 0 : index
    %62 = vector.load %arg8[%c2_81, %c0_82, %c0_83] : memref<18x18x4xf32, #tpu.memory_space<vmem>>, vector<16x16x4xf32>
    %63 = vector.shape_cast %62 : vector<16x16x4xf32> to vector<256x4xf32>
    %c0_84 = arith.constant 0 : index
    %c24_85 = arith.constant 24 : index
    %64 = vector.load %arg9[%c0_84, %c24_85] : memref<256x36xf32, #tpu.memory_space<vmem>>, vector<256x4xf32>
    tpu.vector_store %arg9[%c0_84, %c24_85], %63 {strides = array<i32>} : memref<256x36xf32, #tpu.memory_space<vmem>>, vector<256x4xf32>,
    %c2_86 = arith.constant 2 : index
    %c1_87 = arith.constant 1 : index
    %c0_88 = arith.constant 0 : index
    %65 = vector.load %arg8[%c2_86, %c1_87, %c0_88] : memref<18x18x4xf32, #tpu.memory_space<vmem>>, vector<16x16x4xf32>
    %66 = vector.shape_cast %65 : vector<16x16x4xf32> to vector<256x4xf32>
    %c0_89 = arith.constant 0 : index
    %c28_90 = arith.constant 28 : index
    %67 = vector.load %arg9[%c0_89, %c28_90] : memref<256x36xf32, #tpu.memory_space<vmem>>, vector<256x4xf32>
    tpu.vector_store %arg9[%c0_89, %c28_90], %66 {strides = array<i32>} : memref<256x36xf32, #tpu.memory_space<vmem>>, vector<256x4xf32>,
    %c2_91 = arith.constant 2 : index
    %c2_92 = arith.constant 2 : index
    %c0_93 = arith.constant 0 : index
    %68 = vector.load %arg8[%c2_91, %c2_92, %c0_93] : memref<18x18x4xf32, #tpu.memory_space<vmem>>, vector<16x16x4xf32>
    %69 = vector.shape_cast %68 : vector<16x16x4xf32> to vector<256x4xf32>
    %c0_94 = arith.constant 0 : index
    %c32_95 = arith.constant 32 : index
    %70 = vector.load %arg9[%c0_94, %c32_95] : memref<256x36xf32, #tpu.memory_space<vmem>>, vector<256x4xf32>
    tpu.vector_store %arg9[%c0_94, %c32_95], %69 {strides = array<i32>} : memref<256x36xf32, #tpu.memory_space<vmem>>, vector<256x4xf32>,
    %c0_96 = arith.constant 0 : index
    %c0_97 = arith.constant 0 : index
    %71 = vector.load %arg9[%c0_96, %c0_97] : memref<256x36xf32, #tpu.memory_space<vmem>>, vector<256x36xf32>
    %c0_98 = arith.constant 0 : index
    %c0_99 = arith.constant 0 : index
    %72 = vector.load %arg4[%c0_98, %c0_99] : memref<36x8xf32, #tpu.memory_space<vmem>>, vector<36x8xf32>
    %cst_100 = arith.constant dense<0.000000e+00> : vector<256x8xf32>
    %73 = tpu.matmul %71, %72, %cst_100 {dimension_numbers = #tpu.dot_dimension_numbers<[1], [0], [0], [1], [0, 0, 1, 1], [], []>} : vector<256x36xf32>, vector<36x8xf32>, vector<256x8xf32> -> vector<256x8xf32>
    %c0_101 = arith.constant 0 : index
    %c0_102 = arith.constant 0 : index
    %74 = vector.load %arg5[%c0_101, %c0_102] : memref<1x8xf32, #tpu.memory_space<vmem>>, vector<1x8xf32>
    %75 = vector.broadcast %74 : vector<1x8xf32> to vector<256x8xf32>
    %76 = arith.addf %73, %75 : vector<256x8xf32>
    %77 = vector.extract_strided_slice %76 {offsets = [0, 0], sizes = [256, 4], strides = [1, 1]} : vector<256x8xf32> to vector<256x4xf32>
    %78 = vector.extract_strided_slice %76 {offsets = [0, 4], sizes = [256, 4], strides = [1, 1]} : vector<256x8xf32> to vector<256x4xf32>
    %79 = arith.maximumf %77, %78 : vector<256x4xf32>
    %80 = vector.shape_cast %79 : vector<256x4xf32> to vector<16x16x4xf32>
    %c0_103 = arith.constant 0 : index
    %c0_104 = arith.constant 0 : index
    %c0_105 = arith.constant 0 : index
    %c0_106 = arith.constant 0 : index
    %81 = vector.load %arg1[%c0_103, %c0_104, %c0_105, %c0_106] : memref<1x16x16x4xf32, #tpu.memory_space<vmem>>, vector<1x16x16x4xf32>
    %82 = vector.shape_cast %81 : vector<1x16x16x4xf32> to vector<16x16x4xf32>
    %83 = arith.addf %80, %82 : vector<16x16x4xf32>
    %c0_107 = arith.constant 0 : index
    %c0_108 = arith.constant 0 : index
    %c0_109 = arith.constant 0 : index
    %c0_110 = arith.constant 0 : index
    %84 = vector.load %arg6[%c0_107, %c0_108, %c0_109, %c0_110] : memref<1x16x16x4xf32, #tpu.memory_space<vmem>>, vector<1x16x16x4xf32>
    %85 = vector.shape_cast %84 : vector<1x16x16x4xf32> to vector<16x16x4xf32>
    %86 = vector.shape_cast %83 : vector<16x16x4xf32> to vector<1x16x16x4xf32>
    tpu.vector_store %arg6[%c0_107, %c0_108, %c0_109, %c0_110], %86 {strides = array<i32>} : memref<1x16x16x4xf32, #tpu.memory_space<vmem>>, vector<1x16x16x4xf32>,
    return
  }
  func.func @transform_0(%arg0: i32) -> (i32, i32, i32, i32) {
    %c0_i32 = arith.constant 0 : i32
    %c0_i32_0 = arith.constant 0 : i32
    %c0_i32_1 = arith.constant 0 : i32
    %c0_i32_2 = arith.constant 0 : i32
    return %arg0, %c0_i32, %c0_i32_0, %c0_i32_1 : i32, i32, i32, i32
  }
  func.func @transform_1(%arg0: i32) -> (i32, i32) {
    %c0_i32 = arith.constant 0 : i32
    %c0_i32_0 = arith.constant 0 : i32
    %c0_i32_1 = arith.constant 0 : i32
    return %c0_i32, %c0_i32_0 : i32, i32
  }
  func.func @transform_2(%arg0: i32) -> (i32, i32) {
    %c0_i32 = arith.constant 0 : i32
    %c0_i32_0 = arith.constant 0 : i32
    %c0_i32_1 = arith.constant 0 : i32
    return %c0_i32, %c0_i32_0 : i32, i32
  }
  func.func @transform_3(%arg0: i32) -> (i32, i32) {
    %c0_i32 = arith.constant 0 : i32
    %c0_i32_0 = arith.constant 0 : i32
    %c0_i32_1 = arith.constant 0 : i32
    return %c0_i32, %c0_i32_0 : i32, i32
  }
  func.func @transform_4(%arg0: i32) -> (i32, i32) {
    %c0_i32 = arith.constant 0 : i32
    %c0_i32_0 = arith.constant 0 : i32
    %c0_i32_1 = arith.constant 0 : i32
    return %c0_i32, %c0_i32_0 : i32, i32
  }
  func.func @transform_5(%arg0: i32) -> (i32, i32, i32, i32) {
    %c0_i32 = arith.constant 0 : i32
    %c0_i32_0 = arith.constant 0 : i32
    %c0_i32_1 = arith.constant 0 : i32
    %c0_i32_2 = arith.constant 0 : i32
    return %arg0, %c0_i32, %c0_i32_0, %c0_i32_1 : i32, i32, i32, i32
  }
}

</mosaic_0001>

<llo_original>
// kernel: tpu_custom_call.1
$region0: #{tpu_custom_call.1}
  #allocation0 [shape = 'u32[]', space=smem, size = 0x4, offset = 0x4, fixed_abs, tag = 'smem constant byte address 0x4 - core index']
  #allocation1 [shape = 'u32[144,128]{1,0:T(1,128)}', space=vmem, size = 0x12000, scoped, tag = 'internal scratch']
  #allocation2 [shape = 'f32[18,18,4]{2,1,0:T(8,128)}', space=vmem, size = 0x36000, scoped, tag = 'scratch operand']
  #allocation3 [shape = 'f32[18,18,4]{2,1,0:T(8,128)}', space=vmem, size = 0x36000, scoped, tag = 'scratch operand']
  #allocation4 [shape = 'f32[256,36]{1,0:T(8,128)}', space=vmem, size = 0x20000, scoped, tag = 'scratch operand']
  %s0 = inlined_call_operand.vmem [shape: f32[2,16,16,4], index: 0, kind: input, shape index: {}]
  %s1 = inlined_call_operand.vmem [shape: f32[36,8], index: 1, kind: input, shape index: {}]
  %s2 = inlined_call_operand.vmem [shape: f32[1,8], index: 2, kind: input, shape index: {}]
  %s3 = inlined_call_operand.vmem [shape: f32[36,8], index: 3, kind: input, shape index: {}]
  %s4 = inlined_call_operand.vmem [shape: f32[1,8], index: 4, kind: input, shape index: {}]
  %s5 = inlined_call_operand.vmem [shape: f32[2,16,16,4], index: 5, kind: output, shape index: {}]
  %s6 = sld [smem:[#allocation0]]
  $region57: #{tpu_custom_call.1} parent=0
    _
  %s8 = ssub.s32 1, %s6
  %s9 = scalar_select 0, %s8, %s6
  loop: start=0, step=1, limit=4
  $region2: #{tpu_custom_call.1} parent=0 // loop_pre_header
    _
  $region3: #{tpu_custom_call.1} parent=0 // loop_header
    %s11 = sphi 0, %s15
    %p12 = scmp.ge.s32.totalorder %s11, 4
    %s21 = sphi 0, %s23
    %s24 = sphi 0, %s21
    %s25 = sphi 0, %s24
    %s41 = sphi 0, %s25
    %s45 = sphi 0, %s45
    %s47 = sphi 0, %s45
    %s48 = sphi 0, %s47
    %s62 = sphi 0, %s48
    %s66 = sphi 0, %s66
    %s68 = sphi 0, %s66
    %s69 = sphi 0, %s68
    %s83 = sphi 0, %s69
    %s87 = sphi 0, %s87
    %s89 = sphi 0, %s87
    %s90 = sphi 0, %s89
    %s104 = sphi 0, %s90
    %s108 = sphi 0, %s108
    %s110 = sphi 0, %s108
    %s111 = sphi 0, %s110
    %s125 = sphi 0, %s111
    %s131 = sphi 0, %s133
    %s134 = sphi 0, %s131
    %s135 = sphi 0, %s134
    %s151 = sphi 0, %s135
  $region4: #{tpu_custom_call.1} parent=0 // loop_header_branch
    %14 = sbr.rel (%p12) target = $region8
  $region5: #{tpu_custom_call.1} parent=0 // loop_body
    %s16 = ssub.s32 %s11, 1
    %s17 = ssub.s32 %s11, 2
    %s18 = sadd.s32 %s11, 1
    %s19 = ssub.s32 %s11, %s18
    %p20 = scmp.eq.s32.totalorder %s19, 0
    %s22 = sadd.s32 %s21, 1
    %s23 = scalar_select %p20, %s21, %s22
    %p26 = pneg %p20
    %p27 = scmp.eq.s32.totalorder %s11, 1
    %p28 = por %p26, %p27
    %p29 = scmp.ne.s32.totalorder %s21, %s24
    %p30 = scmp.eq.s32.totalorder %s11, 0
    %p31 = por %p29, %p30
    %p32 = scmp.ne.s32.totalorder %s21, %s24
    %p33 = scmp.eq.s32.totalorder %s16, 1
    %p34 = por %p32, %p33
    %p35 = scmp.ne.s32.totalorder %s24, %s25
    %p36 = scmp.eq.s32.totalorder %s16, 0
    %p37 = por %p35, %p36
    %p38 = scmp.ne.s32.totalorder %s24, %s25
    %p39 = scmp.eq.s32.totalorder %s17, 1
    %p40 = por %p38, %p39
    %p42 = scmp.ne.s32.totalorder %s25, %s41
    %p43 = scmp.eq.s32.totalorder %s17, 0
    %p44 = por %p42, %p43
    %s46 = sadd.s32 %s45, 1
    %p49 = scmp.eq.s32.totalorder %s11, 1
    %p50 = scmp.ne.s32.totalorder %s45, %s47
    %p51 = scmp.eq.s32.totalorder %s11, 0
    %p52 = por %p50, %p51
    %p53 = scmp.ne.s32.totalorder %s45, %s47
    %p54 = scmp.eq.s32.totalorder %s16, 1
    %p55 = por %p53, %p54
    %p56 = scmp.ne.s32.totalorder %s47, %s48
    %p57 = scmp.eq.s32.totalorder %s16, 0
    %p58 = por %p56, %p57
    %p59 = scmp.ne.s32.totalorder %s47, %s48
    %p60 = scmp.eq.s32.totalorder %s17, 1
    %p61 = por %p59, %p60
    %p63 = scmp.ne.s32.totalorder %s48, %s62
    %p64 = scmp.eq.s32.totalorder %s17, 0
    %p65 = por %p63, %p64
    %s67 = sadd.s32 %s66, 1
    %p70 = scmp.eq.s32.totalorder %s11, 1
    %p71 = scmp.ne.s32.totalorder %s66, %s68
    %p72 = scmp.eq.s32.totalorder %s11, 0
    %p73 = por %p71, %p72
    %p74 = scmp.ne.s32.totalorder %s66, %s68
    %p75 = scmp.eq.s32.totalorder %s16, 1
    %p76 = por %p74, %p75
    %p77 = scmp.ne.s32.totalorder %s68, %s69
    %p78 = scmp.eq.s32.totalorder %s16, 0
    %p79 = por %p77, %p78
    %p80 = scmp.ne.s32.totalorder %s68, %s69
    %p81 = scmp.eq.s32.totalorder %s17, 1
    %p82 = por %p80, %p81
    %p84 = scmp.ne.s32.totalorder %s69, %s83
    %p85 = scmp.eq.s32.totalorder %s17, 0
    %p86 = por %p84, %p85
    %s88 = sadd.s32 %s87, 1
    %p91 = scmp.eq.s32.totalorder %s11, 1
    %p92 = scmp.ne.s32.totalorder %s87, %s89
    %p93 = scmp.eq.s32.totalorder %s11, 0
    %p94 = por %p92, %p93
    %p95 = scmp.ne.s32.totalorder %s87, %s89
    %p96 = scmp.eq.s32.totalorder %s16, 1
    %p97 = por %p95, %p96
    %p98 = scmp.ne.s32.totalorder %s89, %s90
    %p99 = scmp.eq.s32.totalorder %s16, 0
    %p100 = por %p98, %p99
    %p101 = scmp.ne.s32.totalorder %s89, %s90
    %p102 = scmp.eq.s32.totalorder %s17, 1
    %p103 = por %p101, %p102
    %p105 = scmp.ne.s32.totalorder %s90, %s104
    %p106 = scmp.eq.s32.totalorder %s17, 0
    %p107 = por %p105, %p106
    %s109 = sadd.s32 %s108, 1
    %p112 = scmp.eq.s32.totalorder %s11, 1
    %p113 = scmp.ne.s32.totalorder %s108, %s110
    %p114 = scmp.eq.s32.totalorder %s11, 0
    %p115 = por %p113, %p114
    %p116 = scmp.ne.s32.totalorder %s108, %s110
    %p117 = scmp.eq.s32.totalorder %s16, 1
    %p118 = por %p116, %p117
    %p119 = scmp.ne.s32.totalorder %s110, %s111
    %p120 = scmp.eq.s32.totalorder %s16, 0
    %p121 = por %p119, %p120
    %p122 = scmp.ne.s32.totalorder %s110, %s111
    %p123 = scmp.eq.s32.totalorder %s17, 1
    %p124 = por %p122, %p123
    %p126 = scmp.ne.s32.totalorder %s111, %s125
    %p127 = scmp.eq.s32.totalorder %s17, 0
    %p128 = por %p126, %p127
    %s129 = ssub.s32 %s11, %s18
    %p130 = scmp.eq.s32.totalorder %s129, 0
    %s132 = sadd.s32 %s131, 1
    %s133 = scalar_select %p130, %s131, %s132
    %p136 = pneg %p130
    %p137 = scmp.eq.s32.totalorder %s11, 1
    %p138 = por %p136, %p137
    %p139 = scmp.ne.s32.totalorder %s131, %s134
    %p140 = scmp.eq.s32.totalorder %s11, 0
    %p141 = por %p139, %p140
    %p142 = scmp.ne.s32.totalorder %s131, %s134
    %p143 = scmp.eq.s32.totalorder %s16, 1
    %p144 = por %p142, %p143
    %p145 = scmp.ne.s32.totalorder %s134, %s135
    %p146 = scmp.eq.s32.totalorder %s16, 0
    %p147 = por %p145, %p146
    %p148 = scmp.ne.s32.totalorder %s134, %s135
    %p149 = scmp.eq.s32.totalorder %s17, 1
    %p150 = por %p148, %p149
    %p152 = scmp.ne.s32.totalorder %s135, %s151
    %p153 = scmp.eq.s32.totalorder %s17, 0
    %p154 = por %p152, %p153
    %p155 = scmp.le.s32.totalorder 1, %s11
    %p156 = scmp.lt.s32.totalorder %s11, 3
    %p157 = pnand %p155, %p156
    %p158 = pneg %p157
    // Predicated region
    $region9: #{tpu_custom_call.1} parent=5 // pred_check
      _
    $region10: #{tpu_custom_call.1} parent=5 // pred_check_branch
      %160 = sbr.rel (%p157) target = $region12
    $region11: #{tpu_custom_call.1} parent=5 // pred_region
      %s161 = ssub.s32 %s11, 1
      // Predicated region
      $region13: #{tpu_custom_call.1} parent=11 // pred_check
        %p162 = pneg %p58
      $region14: #{tpu_custom_call.1} parent=11 // pred_check_branch
        %164 = sbr.rel (%p162) target = $region16
      $region15: #{tpu_custom_call.1} parent=11 // pred_region
        _
      $region16: #{tpu_custom_call.1} parent=11 // pred_fallthru
        _
      // Predicated region
      $region17: #{tpu_custom_call.1} parent=11 // pred_check
        %p165 = pneg %p79
      $region18: #{tpu_custom_call.1} parent=11 // pred_check_branch
        %167 = sbr.rel (%p165) target = $region20
      $region19: #{tpu_custom_call.1} parent=11 // pred_region
        _
      $region20: #{tpu_custom_call.1} parent=11 // pred_fallthru
        _
      // Predicated region
      $region21: #{tpu_custom_call.1} parent=11 // pred_check
        %p168 = pneg %p100
      $region22: #{tpu_custom_call.1} parent=11 // pred_check_branch
        %170 = sbr.rel (%p168) target = $region24
      $region23: #{tpu_custom_call.1} parent=11 // pred_region
        _
      $region24: #{tpu_custom_call.1} parent=11 // pred_fallthru
        _
      // Predicated region
      $region25: #{tpu_custom_call.1} parent=11 // pred_check
        %p171 = pneg %p121
      $region26: #{tpu_custom_call.1} parent=11 // pred_check_branch
        %173 = sbr.rel (%p171) target = $region28
      $region27: #{tpu_custom_call.1} parent=11 // pred_region
        _
      $region28: #{tpu_custom_call.1} parent=11 // pred_fallthru
        _
    $region12: #{tpu_custom_call.1} parent=5 // pred_fallthru
      _
    %p174 = scmp.lt.s32.totalorder %s11, 2
    // Predicated region
    $region29: #{tpu_custom_call.1} parent=5 // pred_check
      %p175 = pneg %p174
    $region30: #{tpu_custom_call.1} parent=5 // pred_check_branch
      %177 = sbr.rel (%p175) target = $region32
    $region31: #{tpu_custom_call.1} parent=5 // pred_region
      // Predicated region
      $region33: #{tpu_custom_call.1} parent=31 // pred_check
        %p178 = pneg %p31
      $region34: #{tpu_custom_call.1} parent=31 // pred_check_branch
        %180 = sbr.rel (%p178) target = $region36
      $region35: #{tpu_custom_call.1} parent=31 // pred_region
        %p181 = scmp.lt.s32.totalorder %s11, 1
        %s182 = scalar_select %p181, %s11, 1
        %s183 = smul.addr %s182, 32
        %s184 = smul.addr %s183, 8
        %s185 = scalar_lea.vmem %s0, %s184
      $region36: #{tpu_custom_call.1} parent=31 // pred_fallthru
        _
    $region32: #{tpu_custom_call.1} parent=5 // pred_fallthru
      _
    %p186 = scmp.le.s32.totalorder 1, %s11
    %p187 = scmp.lt.s32.totalorder %s11, 3
    %p188 = pnand %p186, %p187
    %p189 = pneg %p188
    // Predicated region
    $region37: #{tpu_custom_call.1} parent=5 // pred_check
      _
    $region38: #{tpu_custom_call.1} parent=5 // pred_check_branch
      %191 = sbr.rel (%p188) target = $region40
    $region39: #{tpu_custom_call.1} parent=5 // pred_region
      %s192 = ssub.s32 %s11, 1
      %p193 = scmp.lt.s32.totalorder %s16, 1
      %s194 = scalar_select %p193, %s16, 1
      %s195 = smul.addr %s194, 32
      %s196 = smul.addr %s195, 8
      %s197 = scalar_lea.vmem %s0, %s196
      %p198 = pneg %p37
      %p199 = pneg %p34
      %p200 = pneg %p58
      %p201 = pneg %p55
      %p202 = pneg %p79
      %p203 = pneg %p76
      %p204 = pneg %p100
      %p205 = pneg %p97
      %p206 = pneg %p121
      %p207 = pneg %p118
      %p208 = pneg %p147
      %p209 = pneg %p144
      %p210 = scmp.lt.s32.totalorder %s16, 1
      %s211 = scalar_select %p210, %s16, 1
      %s212 = smul.addr %s211, 32
      %s213 = smul.addr %s212, 8
      %s214 = scalar_lea.vmem %s5, %s213
      %p215 = scmp.lt.s32.totalorder %s16, 1
      %s216 = scalar_select %p215, %s16, 1
      %s217 = smul.addr %s216, 32
      %s218 = smul.addr %s217, 8
      %s219 = scalar_lea.vmem %s0, %s218
      %p220 = scmp.lt.s32.totalorder %s16, 1
      %s221 = scalar_select %p220, %s16, 1
      %s222 = smul.addr %s221, 32
      %s223 = smul.addr %s222, 8
      %s224 = scalar_lea.vmem %s5, %s223
      %p225 = scmp.eq.s32.totalorder %s16, 0
      // Predicated region
      $region41: #{tpu_custom_call.1} parent=39 // pred_check
        %p226 = pneg %p225
      $region42: #{tpu_custom_call.1} parent=39 // pred_check_branch
        %228 = sbr.rel (%p226) target = $region44
      $region43: #{tpu_custom_call.1} parent=39 // pred_region
        %vm229 = vcmask 31744
        %230 = vst.msk [vmem:[#allocation2] sm:$0xff] %vm229, 0.0
        %231 = vst.msk [vmem:[#allocation2 + $0x8] sm:$0xff] %vm229, 0.0
        %vm232 = vcmask 25600
        %233 = vst.msk [vmem:[#allocation2 + $0x10] sm:$0x3] %vm232, 0.0
        %234 = vst.msk [vmem:[#allocation2 + $0x18] sm:$0xff] %vm229, 0.0
        %235 = vst.msk [vmem:[#allocation2 + $0x20] sm:$0xff] %vm229, 0.0
        %236 = vst.msk [vmem:[#allocation2 + $0x28] sm:$0x3] %vm232, 0.0
        %237 = vst.msk [vmem:[#allocation2 + $0x30] sm:$0xff] %vm229, 0.0
        %238 = vst.msk [vmem:[#allocation2 + $0x38] sm:$0xff] %vm229, 0.0
        %239 = vst.msk [vmem:[#allocation2 + $0x40] sm:$0x3] %vm232, 0.0
        %240 = vst.msk [vmem:[#allocation2 + $0x48] sm:$0xff] %vm229, 0.0
        %241 = vst.msk [vmem:[#allocation2 + $0x50] sm:$0xff] %vm229, 0.0
        %242 = vst.msk [vmem:[#allocation2 + $0x58] sm:$0x3] %vm232, 0.0
        %243 = vst.msk [vmem:[#allocation2 + $0x60] sm:$0xff] %vm229, 0.0
        %244 = vst.msk [vmem:[#allocation2 + $0x68] sm:$0xff] %vm229, 0.0
        %245 = vst.msk [vmem:[#allocation2 + $0x70] sm:$0x3] %vm232, 0.0
        %246 = vst.msk [vmem:[#allocation2 + $0x78] sm:$0xff] %vm229, 0.0
        %247 = vst.msk [vmem:[#allocation2 + $0x80] sm:$0xff] %vm229, 0.0
        %248 = vst.msk [vmem:[#allocation2 + $0x88] sm:$0x3] %vm232, 0.0
        %249 = vst.msk [vmem:[#allocation2 + $0x90] sm:$0xff] %vm229, 0.0
        %250 = vst.msk [vmem:[#allocation2 + $0x98] sm:$0xff] %vm229, 0.0
        %251 = vst.msk [vmem:[#allocation2 + $0xa0] sm:$0x3] %vm232, 0.0
        %252 = vst.msk [vmem:[#allocation2 + $0xa8] sm:$0xff] %vm229, 0.0
        %253 = vst.msk [vmem:[#allocation2 + $0xb0] sm:$0xff] %vm229, 0.0
        %254 = vst.msk [vmem:[#allocation2 + $0xb8] sm:$0x3] %vm232, 0.0
        %255 = vst.msk [vmem:[#allocation2 + $0xc0] sm:$0xff] %vm229, 0.0
        %256 = vst.msk [vmem:[#allocation2 + $0xc8] sm:$0xff] %vm229, 0.0
        %257 = vst.msk [vmem:[#allocation2 + $0xd0] sm:$0x3] %vm232, 0.0
        %258 = vst.msk [vmem:[#allocation2 + $0xd8] sm:$0xff] %vm229, 0.0
        %259 = vst.msk [vmem:[#allocation2 + $0xe0] sm:$0xff] %vm229, 0.0
        %260 = vst.msk [vmem:[#allocation2 + $0xe8] sm:$0x3] %vm232, 0.0
        %261 = vst.msk [vmem:[#allocation2 + $0xf0] sm:$0xff] %vm229, 0.0
        %262 = vst.msk [vmem:[#allocation2 + $0xf8] sm:$0xff] %vm229, 0.0
        %263 = vst.msk [vmem:[#allocation2 + $0x100] sm:$0x3] %vm232, 0.0
        %264 = vst.msk [vmem:[#allocation2 + $0x108] sm:$0xff] %vm229, 0.0
        %265 = vst.msk [vmem:[#allocation2 + $0x110] sm:$0xff] %vm229, 0.0
        %266 = vst.msk [vmem:[#allocation2 + $0x118] sm:$0x3] %vm232, 0.0
        %267 = vst.msk [vmem:[#allocation2 + $0x120] sm:$0xff] %vm229, 0.0
        %268 = vst.msk [vmem:[#allocation2 + $0x128] sm:$0xff] %vm229, 0.0
        %269 = vst.msk [vmem:[#allocation2 + $0x130] sm:$0x3] %vm232, 0.0
        %270 = vst.msk [vmem:[#allocation2 + $0x138] sm:$0xff] %vm229, 0.0
        %271 = vst.msk [vmem:[#allocation2 + $0x140] sm:$0xff] %vm229, 0.0
        %272 = vst.msk [vmem:[#allocation2 + $0x148] sm:$0x3] %vm232, 0.0
        %273 = vst.msk [vmem:[#allocation2 + $0x150] sm:$0xff] %vm229, 0.0
        %274 = vst.msk [vmem:[#allocation2 + $0x158] sm:$0xff] %vm229, 0.0
        %275 = vst.msk [vmem:[#allocation2 + $0x160] sm:$0x3] %vm232, 0.0
        %276 = vst.msk [vmem:[#allocation2 + $0x168] sm:$0xff] %vm229, 0.0
        %277 = vst.msk [vmem:[#allocation2 + $0x170] sm:$0xff] %vm229, 0.0
        %278 = vst.msk [vmem:[#allocation2 + $0x178] sm:$0x3] %vm232, 0.0
        %279 = vst.msk [vmem:[#allocation2 + $0x180] sm:$0xff] %vm229, 0.0
        %280 = vst.msk [vmem:[#allocation2 + $0x188] sm:$0xff] %vm229, 0.0
        %281 = vst.msk [vmem:[#allocation2 + $0x190] sm:$0x3] %vm232, 0.0
        %282 = vst.msk [vmem:[#allocation2 + $0x198] sm:$0xff] %vm229, 0.0
        %283 = vst.msk [vmem:[#allocation2 + $0x1a0] sm:$0xff] %vm229, 0.0
        %284 = vst.msk [vmem:[#allocation2 + $0x1a8] sm:$0x3] %vm232, 0.0
        %285 = vst.msk [vmem:[#allocation3] sm:$0xff] %vm229, 0.0
        %286 = vst.msk [vmem:[#allocation3 + $0x8] sm:$0xff] %vm229, 0.0
        %287 = vst.msk [vmem:[#allocation3 + $0x10] sm:$0x3] %vm232, 0.0
        %288 = vst.msk [vmem:[#allocation3 + $0x18] sm:$0xff] %vm229, 0.0
        %289 = vst.msk [vmem:[#allocation3 + $0x20] sm:$0xff] %vm229, 0.0
        %290 = vst.msk [vmem:[#allocation3 + $0x28] sm:$0x3] %vm232, 0.0
        %291 = vst.msk [vmem:[#allocation3 + $0x30] sm:$0xff] %vm229, 0.0
        %292 = vst.msk [vmem:[#allocation3 + $0x38] sm:$0xff] %vm229, 0.0
        %293 = vst.msk [vmem:[#allocation3 + $0x40] sm:$0x3] %vm232, 0.0
        %294 = vst.msk [vmem:[#allocation3 + $0x48] sm:$0xff] %vm229, 0.0
        %295 = vst.msk [vmem:[#allocation3 + $0x50] sm:$0xff] %vm229, 0.0
        %296 = vst.msk [vmem:[#allocation3 + $0x58] sm:$0x3] %vm232, 0.0
        %297 = vst.msk [vmem:[#allocation3 + $0x60] sm:$0xff] %vm229, 0.0
        %298 = vst.msk [vmem:[#allocation3 + $0x68] sm:$0xff] %vm229, 0.0
        %299 = vst.msk [vmem:[#allocation3 + $0x70] sm:$0x3] %vm232, 0.0
        %300 = vst.msk [vmem:[#allocation3 + $0x78] sm:$0xff] %vm229, 0.0
        %301 = vst.msk [vmem:[#allocation3 + $0x80] sm:$0xff] %vm229, 0.0
        %302 = vst.msk [vmem:[#allocation3 + $0x88] sm:$0x3] %vm232, 0.0
        %303 = vst.msk [vmem:[#allocation3 + $0x90] sm:$0xff] %vm229, 0.0
        %304 = vst.msk [vmem:[#allocation3 + $0x98] sm:$0xff] %vm229, 0.0
        %305 = vst.msk [vmem:[#allocation3 + $0xa0] sm:$0x3] %vm232, 0.0
        %306 = vst.msk [vmem:[#allocation3 + $0xa8] sm:$0xff] %vm229, 0.0
        %307 = vst.msk [vmem:[#allocation3 + $0xb0] sm:$0xff] %vm229, 0.0
        %308 = vst.msk [vmem:[#allocation3 + $0xb8] sm:$0x3] %vm232, 0.0
        %309 = vst.msk [vmem:[#allocation3 + $0xc0] sm:$0xff] %vm229, 0.0
        %310 = vst.msk [vmem:[#allocation3 + $0xc8] sm:$0xff] %vm229, 0.0
        %311 = vst.msk [vmem:[#allocation3 + $0xd0] sm:$0x3] %vm232, 0.0
        %312 = vst.msk [vmem:[#allocation3 + $0xd8] sm:$0xff] %vm229, 0.0
        %313 = vst.msk [vmem:[#allocation3 + $0xe0] sm:$0xff] %vm229, 0.0
        %314 = vst.msk [vmem:[#allocation3 + $0xe8] sm:$0x3] %vm232, 0.0
        %315 = vst.msk [vmem:[#allocation3 + $0xf0] sm:$0xff] %vm229, 0.0
        %316 = vst.msk [vmem:[#allocation3 + $0xf8] sm:$0xff] %vm229, 0.0
        %317 = vst.msk [vmem:[#allocation3 + $0x100] sm:$0x3] %vm232, 0.0
        %318 = vst.msk [vmem:[#allocation3 + $0x108] sm:$0xff] %vm229, 0.0
        %319 = vst.msk [vmem:[#allocation3 + $0x110] sm:$0xff] %vm229, 0.0
        %320 = vst.msk [vmem:[#allocation3 + $0x118] sm:$0x3] %vm232, 0.0
        %321 = vst.msk [vmem:[#allocation3 + $0x120] sm:$0xff] %vm229, 0.0
        %322 = vst.msk [vmem:[#allocation3 + $0x128] sm:$0xff] %vm229, 0.0
        %323 = vst.msk [vmem:[#allocation3 + $0x130] sm:$0x3] %vm232, 0.0
        %324 = vst.msk [vmem:[#allocation3 + $0x138] sm:$0xff] %vm229, 0.0
        %325 = vst.msk [vmem:[#allocation3 + $0x140] sm:$0xff] %vm229, 0.0
        %326 = vst.msk [vmem:[#allocation3 + $0x148] sm:$0x3] %vm232, 0.0
        %327 = vst.msk [vmem:[#allocation3 + $0x150] sm:$0xff] %vm229, 0.0
        %328 = vst.msk [vmem:[#allocation3 + $0x158] sm:$0xff] %vm229, 0.0
        %329 = vst.msk [vmem:[#allocation3 + $0x160] sm:$0x3] %vm232, 0.0
        %330 = vst.msk [vmem:[#allocation3 + $0x168] sm:$0xff] %vm229, 0.0
        %331 = vst.msk [vmem:[#allocation3 + $0x170] sm:$0xff] %vm229, 0.0
        %332 = vst.msk [vmem:[#allocation3 + $0x178] sm:$0x3] %vm232, 0.0
        %333 = vst.msk [vmem:[#allocation3 + $0x180] sm:$0xff] %vm229, 0.0
        %334 = vst.msk [vmem:[#allocation3 + $0x188] sm:$0xff] %vm229, 0.0
        %335 = vst.msk [vmem:[#allocation3 + $0x190] sm:$0x3] %vm232, 0.0
        %336 = vst.msk [vmem:[#allocation3 + $0x198] sm:$0xff] %vm229, 0.0
        %337 = vst.msk [vmem:[#allocation3 + $0x1a0] sm:$0xff] %vm229, 0.0
        %338 = vst.msk [vmem:[#allocation3 + $0x1a8] sm:$0x3] %vm232, 0.0
      $region44: #{tpu_custom_call.1} parent=39 // pred_fallthru
        _
      %v339 = vld [vmem:[%s219] sm:$0xff]
      %v340 = vld [vmem:[%s219 + $0x8] sm:$0xff]
      %v341 = vld [vmem:[%s219 + $0x10] sm:$0xff]
      %v342 = vld [vmem:[%s219 + $0x18] sm:$0xff]
      %v343 = vld [vmem:[%s219 + $0x20] sm:$0xff]
      %v344 = vld [vmem:[%s219 + $0x28] sm:$0xff]
      %v345 = vld [vmem:[%s219 + $0x30] sm:$0xff]
      %v346 = vld [vmem:[%s219 + $0x38] sm:$0xff]
      %v347 = vld [vmem:[%s219 + $0x40] sm:$0xff]
      %v348 = vld [vmem:[%s219 + $0x48] sm:$0xff]
      %v349 = vld [vmem:[%s219 + $0x50] sm:$0xff]
      %v350 = vld [vmem:[%s219 + $0x58] sm:$0xff]
      %v351 = vld [vmem:[%s219 + $0x60] sm:$0xff]
      %v352 = vld [vmem:[%s219 + $0x68] sm:$0xff]
      %v353 = vld [vmem:[%s219 + $0x70] sm:$0xff]
      %v354 = vld [vmem:[%s219 + $0x78] sm:$0xff]
      %v355 = vld [vmem:[%s219 + $0x80] sm:$0xff]
      %v356 = vld [vmem:[%s219 + $0x88] sm:$0xff]
      %v357 = vld [vmem:[%s219 + $0x90] sm:$0xff]
      %v358 = vld [vmem:[%s219 + $0x98] sm:$0xff]
      %v359 = vld [vmem:[%s219 + $0xa0] sm:$0xff]
      %v360 = vld [vmem:[%s219 + $0xa8] sm:$0xff]
      %v361 = vld [vmem:[%s219 + $0xb0] sm:$0xff]
      %v362 = vld [vmem:[%s219 + $0xb8] sm:$0xff]
      %v363 = vld [vmem:[%s219 + $0xc0] sm:$0xff]
      %v364 = vld [vmem:[%s219 + $0xc8] sm:$0xff]
      %v365 = vld [vmem:[%s219 + $0xd0] sm:$0xff]
      %v366 = vld [vmem:[%s219 + $0xd8] sm:$0xff]
      %v367 = vld [vmem:[%s219 + $0xe0] sm:$0xff]
      %v368 = vld [vmem:[%s219 + $0xe8] sm:$0xff]
      %v369 = vld [vmem:[%s219 + $0xf0] sm:$0xff]
      %v370 = vld [vmem:[%s219 + $0xf8] sm:$0xff]
      %s371 = scalar_lea.vmem [#allocation2], 24
      %vm372 = vcmask 31744
      %373 = vst.msk [vmem:[%s371 + $0x1] sm:$0xff] %vm372, %v339
      %374 = vst.msk [vmem:[%s371 + $0x9] sm:$0xff] %vm372, %v340
      %375 = vst.msk [vmem:[%s371 + $0x19] sm:$0xff] %vm372, %v341
      %376 = vst.msk [vmem:[%s371 + $0x21] sm:$0xff] %vm372, %v342
      %377 = vst.msk [vmem:[%s371 + $0x31] sm:$0xff] %vm372, %v343
      %378 = vst.msk [vmem:[%s371 + $0x39] sm:$0xff] %vm372, %v344
      %379 = vst.msk [vmem:[%s371 + $0x49] sm:$0xff] %vm372, %v345
      %380 = vst.msk [vmem:[%s371 + $0x51] sm:$0xff] %vm372, %v346
      %381 = vst.msk [vmem:[%s371 + $0x61] sm:$0xff] %vm372, %v347
      %382 = vst.msk [vmem:[%s371 + $0x69] sm:$0xff] %vm372, %v348
      %383 = vst.msk [vmem:[%s371 + $0x79] sm:$0xff] %vm372, %v349
      %384 = vst.msk [vmem:[%s371 + $0x81] sm:$0xff] %vm372, %v350
      %385 = vst.msk [vmem:[%s371 + $0x91] sm:$0xff] %vm372, %v351
      %386 = vst.msk [vmem:[%s371 + $0x99] sm:$0xff] %vm372, %v352
      %387 = vst.msk [vmem:[%s371 + $0xa9] sm:$0xff] %vm372, %v353
      %388 = vst.msk [vmem:[%s371 + $0xb1] sm:$0xff] %vm372, %v354
      %389 = vst.msk [vmem:[%s371 + $0xc1] sm:$0xff] %vm372, %v355
      %390 = vst.msk [vmem:[%s371 + $0xc9] sm:$0xff] %vm372, %v356
      %391 = vst.msk [vmem:[%s371 + $0xd9] sm:$0xff] %vm372, %v357
      %392 = vst.msk [vmem:[%s371 + $0xe1] sm:$0xff] %vm372, %v358
      %393 = vst.msk [vmem:[%s371 + $0xf1] sm:$0xff] %vm372, %v359
      %394 = vst.msk [vmem:[%s371 + $0xf9] sm:$0xff] %vm372, %v360
      %395 = vst.msk [vmem:[%s371 + $0x109] sm:$0xff] %vm372, %v361
      %396 = vst.msk [vmem:[%s371 + $0x111] sm:$0xff] %vm372, %v362
      %397 = vst.msk [vmem:[%s371 + $0x121] sm:$0xff] %vm372, %v363
      %398 = vst.msk [vmem:[%s371 + $0x129] sm:$0xff] %vm372, %v364
      %399 = vst.msk [vmem:[%s371 + $0x139] sm:$0xff] %vm372, %v365
      %400 = vst.msk [vmem:[%s371 + $0x141] sm:$0xff] %vm372, %v366
      %401 = vst.msk [vmem:[%s371 + $0x151] sm:$0xff] %vm372, %v367
      %402 = vst.msk [vmem:[%s371 + $0x159] sm:$0xff] %vm372, %v368
      %403 = vst.msk [vmem:[%s371 + $0x169] sm:$0xff] %vm372, %v369
      %404 = vst.msk [vmem:[%s371 + $0x171] sm:$0xff] %vm372, %v370
      %v405 = vld [vmem:[#allocation2] sm:$0xff]
      %v406 = vld [vmem:[#allocation2 + $0x8] sm:$0xff]
      %v407 = vld [vmem:[#allocation2 + $0x18] sm:$0xff]
      %v408 = vld [vmem:[#allocation2 + $0x20] sm:$0xff]
      %v409 = vld [vmem:[#allocation2 + $0x30] sm:$0xff]
      %v410 = vld [vmem:[#allocation2 + $0x38] sm:$0xff]
      %v411 = vld [vmem:[#allocation2 + $0x48] sm:$0xff]
      %v412 = vld [vmem:[#allocation2 + $0x50] sm:$0xff]
      %v413 = vld [vmem:[#allocation2 + $0x60] sm:$0xff]
      %v414 = vld [vmem:[#allocation2 + $0x68] sm:$0xff]
      %v415 = vld [vmem:[#allocation2 + $0x78] sm:$0xff]
      %v416 = vld [vmem:[#allocation2 + $0x80] sm:$0xff]
      %v417 = vld [vmem:[#allocation2 + $0x90] sm:$0xff]
      %v418 = vld [vmem:[#allocation2 + $0x98] sm:$0xff]
      %v419 = vld [vmem:[#allocation2 + $0xa8] sm:$0xff]
      %v420 = vld [vmem:[#allocation2 + $0xb0] sm:$0xff]
      %v421 = vld [vmem:[#allocation2 + $0xc0] sm:$0xff]
      %v422 = vld [vmem:[#allocation2 + $0xc8] sm:$0xff]
      %v423 = vld [vmem:[#allocation2 + $0xd8] sm:$0xff]
      %v424 = vld [vmem:[#allocation2 + $0xe0] sm:$0xff]
      %v425 = vld [vmem:[#allocation2 + $0xf0] sm:$0xff]
      %v426 = vld [vmem:[#allocation2 + $0xf8] sm:$0xff]
      %v427 = vld [vmem:[#allocation2 + $0x108] sm:$0xff]
      %v428 = vld [vmem:[#allocation2 + $0x110] sm:$0xff]
      %v429 = vld [vmem:[#allocation2 + $0x120] sm:$0xff]
      %v430 = vld [vmem:[#allocation2 + $0x128] sm:$0xff]
      %v431 = vld [vmem:[#allocation2 + $0x138] sm:$0xff]
      %v432 = vld [vmem:[#allocation2 + $0x140] sm:$0xff]
      %v433 = vld [vmem:[#allocation2 + $0x150] sm:$0xff]
      %v434 = vld [vmem:[#allocation2 + $0x158] sm:$0xff]
      %v435 = vld [vmem:[#allocation2 + $0x168] sm:$0xff]
      %v436 = vld [vmem:[#allocation2 + $0x170] sm:$0xff]
      %437 = vst.msk [vmem:[#allocation4] sm:$0xff] %vm372, %v405
      %438 = vst.msk [vmem:[#allocation4 + $0x8] sm:$0xff] %vm372, %v406
      %439 = vst.msk [vmem:[#allocation4 + $0x10] sm:$0xff] %vm372, %v407
      %440 = vst.msk [vmem:[#allocation4 + $0x18] sm:$0xff] %vm372, %v408
      %441 = vst.msk [vmem:[#allocation4 + $0x20] sm:$0xff] %vm372, %v409
      %442 = vst.msk [vmem:[#allocation4 + $0x28] sm:$0xff] %vm372, %v410
      %443 = vst.msk [vmem:[#allocation4 + $0x30] sm:$0xff] %vm372, %v411
      %444 = vst.msk [vmem:[#allocation4 + $0x38] sm:$0xff] %vm372, %v412
      %445 = vst.msk [vmem:[#allocation4 + $0x40] sm:$0xff] %vm372, %v413
      %446 = vst.msk [vmem:[#allocation4 + $0x48] sm:$0xff] %vm372, %v414
      %447 = vst.msk [vmem:[#allocation4 + $0x50] sm:$0xff] %vm372, %v415
      %448 = vst.msk [vmem:[#allocation4 + $0x58] sm:$0xff] %vm372, %v416
      %449 = vst.msk [vmem:[#allocation4 + $0x60] sm:$0xff] %vm372, %v417
      %450 = vst.msk [vmem:[#allocation4 + $0x68] sm:$0xff] %vm372, %v418
      %451 = vst.msk [vmem:[#allocation4 + $0x70] sm:$0xff] %vm372, %v419
      %452 = vst.msk [vmem:[#allocation4 + $0x78] sm:$0xff] %vm372, %v420
      %453 = vst.msk [vmem:[#allocation4 + $0x80] sm:$0xff] %vm372, %v421
      %454 = vst.msk [vmem:[#allocation4 + $0x88] sm:$0xff] %vm372, %v422
      %455 = vst.msk [vmem:[#allocation4 + $0x90] sm:$0xff] %vm372, %v423
      %456 = vst.msk [vmem:[#allocation4 + $0x98] sm:$0xff] %vm372, %v424
      %457 = vst.msk [vmem:[#allocation4 + $0xa0] sm:$0xff] %vm372, %v425
      %458 = vst.msk [vmem:[#allocation4 + $0xa8] sm:$0xff] %vm372, %v426
      %459 = vst.msk [vmem:[#allocation4 + $0xb0] sm:$0xff] %vm372, %v427
      %460 = vst.msk [vmem:[#allocation4 + $0xb8] sm:$0xff] %vm372, %v428
      %461 = vst.msk [vmem:[#allocation4 + $0xc0] sm:$0xff] %vm372, %v429
      %462 = vst.msk [vmem:[#allocation4 + $0xc8] sm:$0xff] %vm372, %v430
      %463 = vst.msk [vmem:[#allocation4 + $0xd0] sm:$0xff] %vm372, %v431
      %464 = vst.msk [vmem:[#allocation4 + $0xd8] sm:$0xff] %vm372, %v432
      %465 = vst.msk [vmem:[#allocation4 + $0xe0] sm:$0xff] %vm372, %v433
      %466 = vst.msk [vmem:[#allocation4 + $0xe8] sm:$0xff] %vm372, %v434
      %467 = vst.msk [vmem:[#allocation4 + $0xf0] sm:$0xff] %vm372, %v435
      %468 = vst.msk [vmem:[#allocation4 + $0xf8] sm:$0xff] %vm372, %v436
      %v469 = vld [vmem:[#allocation2 + $0x1] sm:$0xff]
      %v470 = vld [vmem:[#allocation2 + $0x9] sm:$0xff]
      %v471 = vld [vmem:[#allocation2 + $0x19] sm:$0xff]
      %v472 = vld [vmem:[#allocation2 + $0x21] sm:$0xff]
      %v473 = vld [vmem:[#allocation2 + $0x31] sm:$0xff]
      %v474 = vld [vmem:[#allocation2 + $0x39] sm:$0xff]
      %v475 = vld [vmem:[#allocation2 + $0x49] sm:$0xff]
      %v476 = vld [vmem:[#allocation2 + $0x51] sm:$0xff]
      %v477 = vld [vmem:[#allocation2 + $0x61] sm:$0xff]
      %v478 = vld [vmem:[#allocation2 + $0x69] sm:$0xff]
      %v479 = vld [vmem:[#allocation2 + $0x79] sm:$0xff]
      %v480 = vld [vmem:[#allocation2 + $0x81] sm:$0xff]
      %v481 = vld [vmem:[#allocation2 + $0x91] sm:$0xff]
      %v482 = vld [vmem:[#allocation2 + $0x99] sm:$0xff]
      %v483 = vld [vmem:[#allocation2 + $0xa9] sm:$0xff]
      %v484 = vld [vmem:[#allocation2 + $0xb1] sm:$0xff]
      %v485 = vld [vmem:[#allocation2 + $0xc1] sm:$0xff]
      %v486 = vld [vmem:[#allocation2 + $0xc9] sm:$0xff]
      %v487 = vld [vmem:[#allocation2 + $0xd9] sm:$0xff]
      %v488 = vld [vmem:[#allocation2 + $0xe1] sm:$0xff]
      %v489 = vld [vmem:[#allocation2 + $0xf1] sm:$0xff]
      %v490 = vld [vmem:[#allocation2 + $0xf9] sm:$0xff]
      %v491 = vld [vmem:[#allocation2 + $0x109] sm:$0xff]
      %v492 = vld [vmem:[#allocation2 + $0x111] sm:$0xff]
      %v493 = vld [vmem:[#allocation2 + $0x121] sm:$0xff]
      %v494 = vld [vmem:[#allocation2 + $0x129] sm:$0xff]
      %v495 = vld [vmem:[#allocation2 + $0x139] sm:$0xff]
      %v496 = vld [vmem:[#allocation2 + $0x141] sm:$0xff]
      %v497 = vld [vmem:[#allocation2 + $0x151] sm:$0xff]
      %v498 = vld [vmem:[#allocation2 + $0x159] sm:$0xff]
      %v499 = vld [vmem:[#allocation2 + $0x169] sm:$0xff]
      %v500 = vld [vmem:[#allocation2 + $0x171] sm:$0xff]
      %533 = vrot.lane.b32.xlu0 %v469, 4
      %v534 = vpop.permute.xlu0 %533
      %535 = vrot.lane.b32.xlu0 %v470, 4
      %v536 = vpop.permute.xlu0 %535
      %537 = vrot.lane.b32.xlu0 %v471, 4
      %v538 = vpop.permute.xlu0 %537
      %539 = vrot.lane.b32.xlu0 %v472, 4
      %v540 = vpop.permute.xlu0 %539
      %541 = vrot.lane.b32.xlu0 %v473, 4
      %v542 = vpop.permute.xlu0 %541
      %543 = vrot.lane.b32.xlu0 %v474, 4
      %v544 = vpop.permute.xlu0 %543
      %545 = vrot.lane.b32.xlu0 %v475, 4
      %v546 = vpop.permute.xlu0 %545
      %547 = vrot.lane.b32.xlu0 %v476, 4
      %v548 = vpop.permute.xlu0 %547
      %549 = vrot.lane.b32.xlu0 %v477, 4
      %v550 = vpop.permute.xlu0 %549
      %551 = vrot.lane.b32.xlu0 %v478, 4
      %v552 = vpop.permute.xlu0 %551
      %553 = vrot.lane.b32.xlu0 %v479, 4
      %v554 = vpop.permute.xlu0 %553
      %555 = vrot.lane.b32.xlu0 %v480, 4
      %v556 = vpop.permute.xlu0 %555
      %557 = vrot.lane.b32.xlu0 %v481, 4
      %v558 = vpop.permute.xlu0 %557
      %559 = vrot.lane.b32.xlu0 %v482, 4
      %v560 = vpop.permute.xlu0 %559
      %561 = vrot.lane.b32.xlu0 %v483, 4
      %v562 = vpop.permute.xlu0 %561
      %563 = vrot.lane.b32.xlu0 %v484, 4
      %v564 = vpop.permute.xlu0 %563
      %565 = vrot.lane.b32.xlu0 %v485, 4
      %v566 = vpop.permute.xlu0 %565
      %567 = vrot.lane.b32.xlu0 %v486, 4
      %v568 = vpop.permute.xlu0 %567
      %569 = vrot.lane.b32.xlu0 %v487, 4
      %v570 = vpop.permute.xlu0 %569
      %571 = vrot.lane.b32.xlu0 %v488, 4
      %v572 = vpop.permute.xlu0 %571
      %573 = vrot.lane.b32.xlu0 %v489, 4
      %v574 = vpop.permute.xlu0 %573
      %575 = vrot.lane.b32.xlu0 %v490, 4
      %v576 = vpop.permute.xlu0 %575
      %577 = vrot.lane.b32.xlu0 %v491, 4
      %v578 = vpop.permute.xlu0 %577
      %579 = vrot.lane.b32.xlu0 %v492, 4
      %v580 = vpop.permute.xlu0 %579
      %581 = vrot.lane.b32.xlu0 %v493, 4
      %v582 = vpop.permute.xlu0 %581
      %583 = vrot.lane.b32.xlu0 %v494, 4
      %v584 = vpop.permute.xlu0 %583
      %585 = vrot.lane.b32.xlu0 %v495, 4
      %v586 = vpop.permute.xlu0 %585
      %587 = vrot.lane.b32.xlu0 %v496, 4
      %v588 = vpop.permute.xlu0 %587
      %589 = vrot.lane.b32.xlu0 %v497, 4
      %v590 = vpop.permute.xlu0 %589
      %591 = vrot.lane.b32.xlu0 %v498, 4
      %v592 = vpop.permute.xlu0 %591
      %593 = vrot.lane.b32.xlu0 %v499, 4
      %v594 = vpop.permute.xlu0 %593
      %595 = vrot.lane.b32.xlu0 %v500, 4
      %v596 = vpop.permute.xlu0 %595
      %vm629 = vcmask 64544
      %630 = vst.msk [vmem:[#allocation4] sm:$0xff] %vm629, %v534
      %631 = vst.msk [vmem:[#allocation4 + $0x8] sm:$0xff] %vm629, %v536
      %632 = vst.msk [vmem:[#allocation4 + $0x10] sm:$0xff] %vm629, %v538
      %633 = vst.msk [vmem:[#allocation4 + $0x18] sm:$0xff] %vm629, %v540
      %634 = vst.msk [vmem:[#allocation4 + $0x20] sm:$0xff] %vm629, %v542
      %635 = vst.msk [vmem:[#allocation4 + $0x28] sm:$0xff] %vm629, %v544
      %636 = vst.msk [vmem:[#allocation4 + $0x30] sm:$0xff] %vm629, %v546
      %637 = vst.msk [vmem:[#allocation4 + $0x38] sm:$0xff] %vm629, %v548
      %638 = vst.msk [vmem:[#allocation4 + $0x40] sm:$0xff] %vm629, %v550
      %639 = vst.msk [vmem:[#allocation4 + $0x48] sm:$0xff] %vm629, %v552
      %640 = vst.msk [vmem:[#allocation4 + $0x50] sm:$0xff] %vm629, %v554
      %641 = vst.msk [vmem:[#allocation4 + $0x58] sm:$0xff] %vm629, %v556
      %642 = vst.msk [vmem:[#allocation4 + $0x60] sm:$0xff] %vm629, %v558
      %643 = vst.msk [vmem:[#allocation4 + $0x68] sm:$0xff] %vm629, %v560
      %644 = vst.msk [vmem:[#allocation4 + $0x70] sm:$0xff] %vm629, %v562
      %645 = vst.msk [vmem:[#allocation4 + $0x78] sm:$0xff] %vm629, %v564
      %646 = vst.msk [vmem:[#allocation4 + $0x80] sm:$0xff] %vm629, %v566
      %647 = vst.msk [vmem:[#allocation4 + $0x88] sm:$0xff] %vm629, %v568
      %648 = vst.msk [vmem:[#allocation4 + $0x90] sm:$0xff] %vm629, %v570
      %649 = vst.msk [vmem:[#allocation4 + $0x98] sm:$0xff] %vm629, %v572
      %650 = vst.msk [vmem:[#allocation4 + $0xa0] sm:$0xff] %vm629, %v574
      %651 = vst.msk [vmem:[#allocation4 + $0xa8] sm:$0xff] %vm629, %v576
      %652 = vst.msk [vmem:[#allocation4 + $0xb0] sm:$0xff] %vm629, %v578
      %653 = vst.msk [vmem:[#allocation4 + $0xb8] sm:$0xff] %vm629, %v580
      %654 = vst.msk [vmem:[#allocation4 + $0xc0] sm:$0xff] %vm629, %v582
      %655 = vst.msk [vmem:[#allocation4 + $0xc8] sm:$0xff] %vm629, %v584
      %656 = vst.msk [vmem:[#allocation4 + $0xd0] sm:$0xff] %vm629, %v586
      %657 = vst.msk [vmem:[#allocation4 + $0xd8] sm:$0xff] %vm629, %v588
      %658 = vst.msk [vmem:[#allocation4 + $0xe0] sm:$0xff] %vm629, %v590
      %659 = vst.msk [vmem:[#allocation4 + $0xe8] sm:$0xff] %vm629, %v592
      %660 = vst.msk [vmem:[#allocation4 + $0xf0] sm:$0xff] %vm629, %v594
      %661 = vst.msk [vmem:[#allocation4 + $0xf8] sm:$0xff] %vm629, %v596
      %v662 = vld [vmem:[#allocation2 + $0x2] sm:$0xff]
      %v663 = vld [vmem:[#allocation2 + $0xa] sm:$0xff]
      %v664 = vld [vmem:[#allocation2 + $0x1a] sm:$0xff]
      %v665 = vld [vmem:[#allocation2 + $0x22] sm:$0xff]
      %v666 = vld [vmem:[#allocation2 + $0x32] sm:$0xff]
      %v667 = vld [vmem:[#allocation2 + $0x3a] sm:$0xff]
      %v668 = vld [vmem:[#allocation2 + $0x4a] sm:$0xff]
      %v669 = vld [vmem:[#allocation2 + $0x52] sm:$0xff]
      %v670 = vld [vmem:[#allocation2 + $0x62] sm:$0xff]
      %v671 = vld [vmem:[#allocation2 + $0x6a] sm:$0xff]
      %v672 = vld [vmem:[#allocation2 + $0x7a] sm:$0xff]
      %v673 = vld [vmem:[#allocation2 + $0x82] sm:$0xff]
      %v674 = vld [vmem:[#allocation2 + $0x92] sm:$0xff]
      %v675 = vld [vmem:[#allocation2 + $0x9a] sm:$0xff]
      %v676 = vld [vmem:[#allocation2 + $0xaa] sm:$0xff]
      %v677 = vld [vmem:[#allocation2 + $0xb2] sm:$0xff]
      %v678 = vld [vmem:[#allocation2 + $0xc2] sm:$0xff]
      %v679 = vld [vmem:[#allocation2 + $0xca] sm:$0xff]
      %v680 = vld [vmem:[#allocation2 + $0xda] sm:$0xff]
      %v681 = vld [vmem:[#allocation2 + $0xe2] sm:$0xff]
      %v682 = vld [vmem:[#allocation2 + $0xf2] sm:$0xff]
      %v683 = vld [vmem:[#allocation2 + $0xfa] sm:$0xff]
      %v684 = vld [vmem:[#allocation2 + $0x10a] sm:$0xff]
      %v685 = vld [vmem:[#allocation2 + $0x112] sm:$0xff]
      %v686 = vld [vmem:[#allocation2 + $0x122] sm:$0xff]
      %v687 = vld [vmem:[#allocation2 + $0x12a] sm:$0xff]
      %v688 = vld [vmem:[#allocation2 + $0x13a] sm:$0xff]
      %v689 = vld [vmem:[#allocation2 + $0x142] sm:$0xff]
      %v690 = vld [vmem:[#allocation2 + $0x152] sm:$0xff]
      %v691 = vld [vmem:[#allocation2 + $0x15a] sm:$0xff]
      %v692 = vld [vmem:[#allocation2 + $0x16a] sm:$0xff]
      %v693 = vld [vmem:[#allocation2 + $0x172] sm:$0xff]
      %726 = vrot.lane.b32.xlu0 %v662, 8
      %v727 = vpop.permute.xlu0 %726
      %728 = vrot.lane.b32.xlu0 %v663, 8
      %v729 = vpop.permute.xlu0 %728
      %730 = vrot.lane.b32.xlu0 %v664, 8
      %v731 = vpop.permute.xlu0 %730
      %732 = vrot.lane.b32.xlu0 %v665, 8
      %v733 = vpop.permute.xlu0 %732
      %734 = vrot.lane.b32.xlu0 %v666, 8
      %v735 = vpop.permute.xlu0 %734
      %736 = vrot.lane.b32.xlu0 %v667, 8
      %v737 = vpop.permute.xlu0 %736
      %738 = vrot.lane.b32.xlu0 %v668, 8
      %v739 = vpop.permute.xlu0 %738
      %740 = vrot.lane.b32.xlu0 %v669, 8
      %v741 = vpop.permute.xlu0 %740
      %742 = vrot.lane.b32.xlu0 %v670, 8
      %v743 = vpop.permute.xlu0 %742
      %744 = vrot.lane.b32.xlu0 %v671, 8
      %v745 = vpop.permute.xlu0 %744
      %746 = vrot.lane.b32.xlu0 %v672, 8
      %v747 = vpop.permute.xlu0 %746
      %748 = vrot.lane.b32.xlu0 %v673, 8
      %v749 = vpop.permute.xlu0 %748
      %750 = vrot.lane.b32.xlu0 %v674, 8
      %v751 = vpop.permute.xlu0 %750
      %752 = vrot.lane.b32.xlu0 %v675, 8
      %v753 = vpop.permute.xlu0 %752
      %754 = vrot.lane.b32.xlu0 %v676, 8
      %v755 = vpop.permute.xlu0 %754
      %756 = vrot.lane.b32.xlu0 %v677, 8
      %v757 = vpop.permute.xlu0 %756
      %758 = vrot.lane.b32.xlu0 %v678, 8
      %v759 = vpop.permute.xlu0 %758
      %760 = vrot.lane.b32.xlu0 %v679, 8
      %v761 = vpop.permute.xlu0 %760
      %762 = vrot.lane.b32.xlu0 %v680, 8
      %v763 = vpop.permute.xlu0 %762
      %764 = vrot.lane.b32.xlu0 %v681, 8
      %v765 = vpop.permute.xlu0 %764
      %766 = vrot.lane.b32.xlu0 %v682, 8
      %v767 = vpop.permute.xlu0 %766
      %768 = vrot.lane.b32.xlu0 %v683, 8
      %v769 = vpop.permute.xlu0 %768
      %770 = vrot.lane.b32.xlu0 %v684, 8
      %v771 = vpop.permute.xlu0 %770
      %772 = vrot.lane.b32.xlu0 %v685, 8
      %v773 = vpop.permute.xlu0 %772
      %774 = vrot.lane.b32.xlu0 %v686, 8
      %v775 = vpop.permute.xlu0 %774
      %776 = vrot.lane.b32.xlu0 %v687, 8
      %v777 = vpop.permute.xlu0 %776
      %778 = vrot.lane.b32.xlu0 %v688, 8
      %v779 = vpop.permute.xlu0 %778
      %780 = vrot.lane.b32.xlu0 %v689, 8
      %v781 = vpop.permute.xlu0 %780
      %782 = vrot.lane.b32.xlu0 %v690, 8
      %v783 = vpop.permute.xlu0 %782
      %784 = vrot.lane.b32.xlu0 %v691, 8
      %v785 = vpop.permute.xlu0 %784
      %786 = vrot.lane.b32.xlu0 %v692, 8
      %v787 = vpop.permute.xlu0 %786
      %788 = vrot.lane.b32.xlu0 %v693, 8
      %v789 = vpop.permute.xlu0 %788
      %vm822 = vcmask 97344
      %823 = vst.msk [vmem:[#allocation4] sm:$0xff] %vm822, %v727
      %824 = vst.msk [vmem:[#allocation4 + $0x8] sm:$0xff] %vm822, %v729
      %825 = vst.msk [vmem:[#allocation4 + $0x10] sm:$0xff] %vm822, %v731
      %826 = vst.msk [vmem:[#allocation4 + $0x18] sm:$0xff] %vm822, %v733
      %827 = vst.msk [vmem:[#allocation4 + $0x20] sm:$0xff] %vm822, %v735
      %828 = vst.msk [vmem:[#allocation4 + $0x28] sm:$0xff] %vm822, %v737
      %829 = vst.msk [vmem:[#allocation4 + $0x30] sm:$0xff] %vm822, %v739
      %830 = vst.msk [vmem:[#allocation4 + $0x38] sm:$0xff] %vm822, %v741
      %831 = vst.msk [vmem:[#allocation4 + $0x40] sm:$0xff] %vm822, %v743
      %832 = vst.msk [vmem:[#allocation4 + $0x48] sm:$0xff] %vm822, %v745
      %833 = vst.msk [vmem:[#allocation4 + $0x50] sm:$0xff] %vm822, %v747
      %834 = vst.msk [vmem:[#allocation4 + $0x58] sm:$0xff] %vm822, %v749
      %835 = vst.msk [vmem:[#allocation4 + $0x60] sm:$0xff] %vm822, %v751
      %836 = vst.msk [vmem:[#allocation4 + $0x68] sm:$0xff] %vm822, %v753
      %837 = vst.msk [vmem:[#allocation4 + $0x70] sm:$0xff] %vm822, %v755
      %838 = vst.msk [vmem:[#allocation4 + $0x78] sm:$0xff] %vm822, %v757
      %839 = vst.msk [vmem:[#allocation4 + $0x80] sm:$0xff] %vm822, %v759
      %840 = vst.msk [vmem:[#allocation4 + $0x88] sm:$0xff] %vm822, %v761
      %841 = vst.msk [vmem:[#allocation4 + $0x90] sm:$0xff] %vm822, %v763
      %842 = vst.msk [vmem:[#allocation4 + $0x98] sm:$0xff] %vm822, %v765
      %843 = vst.msk [vmem:[#allocation4 + $0xa0] sm:$0xff] %vm822, %v767
      %844 = vst.msk [vmem:[#allocation4 + $0xa8] sm:$0xff] %vm822, %v769
      %845 = vst.msk [vmem:[#allocation4 + $0xb0] sm:$0xff] %vm822, %v771
      %846 = vst.msk [vmem:[#allocation4 + $0xb8] sm:$0xff] %vm822, %v773
      %847 = vst.msk [vmem:[#allocation4 + $0xc0] sm:$0xff] %vm822, %v775
      %848 = vst.msk [vmem:[#allocation4 + $0xc8] sm:$0xff] %vm822, %v777
      %849 = vst.msk [vmem:[#allocation4 + $0xd0] sm:$0xff] %vm822, %v779
      %850 = vst.msk [vmem:[#allocation4 + $0xd8] sm:$0xff] %vm822, %v781
      %851 = vst.msk [vmem:[#allocation4 + $0xe0] sm:$0xff] %vm822, %v783
      %852 = vst.msk [vmem:[#allocation4 + $0xe8] sm:$0xff] %vm822, %v785
      %853 = vst.msk [vmem:[#allocation4 + $0xf0] sm:$0xff] %vm822, %v787
      %854 = vst.msk [vmem:[#allocation4 + $0xf8] sm:$0xff] %vm822, %v789
      %v855 = vld [vmem:[%s371] sm:$0xff]
      %v856 = vld [vmem:[%s371 + $0x8] sm:$0xff]
      %v857 = vld [vmem:[%s371 + $0x18] sm:$0xff]
      %v858 = vld [vmem:[%s371 + $0x20] sm:$0xff]
      %v859 = vld [vmem:[%s371 + $0x30] sm:$0xff]
      %v860 = vld [vmem:[%s371 + $0x38] sm:$0xff]
      %v861 = vld [vmem:[%s371 + $0x48] sm:$0xff]
      %v862 = vld [vmem:[%s371 + $0x50] sm:$0xff]
      %v863 = vld [vmem:[%s371 + $0x60] sm:$0xff]
      %v864 = vld [vmem:[%s371 + $0x68] sm:$0xff]
      %v865 = vld [vmem:[%s371 + $0x78] sm:$0xff]
      %v866 = vld [vmem:[%s371 + $0x80] sm:$0xff]
      %v867 = vld [vmem:[%s371 + $0x90] sm:$0xff]
      %v868 = vld [vmem:[%s371 + $0x98] sm:$0xff]
      %v869 = vld [vmem:[%s371 + $0xa8] sm:$0xff]
      %v870 = vld [vmem:[%s371 + $0xb0] sm:$0xff]
      %v871 = vld [vmem:[%s371 + $0xc0] sm:$0xff]
      %v872 = vld [vmem:[%s371 + $0xc8] sm:$0xff]
      %v873 = vld [vmem:[%s371 + $0xd8] sm:$0xff]
      %v874 = vld [vmem:[%s371 + $0xe0] sm:$0xff]
      %v875 = vld [vmem:[%s371 + $0xf0] sm:$0xff]
      %v876 = vld [vmem:[%s371 + $0xf8] sm:$0xff]
      %v877 = vld [vmem:[%s371 + $0x108] sm:$0xff]
      %v878 = vld [vmem:[%s371 + $0x110] sm:$0xff]
      %v879 = vld [vmem:[%s371 + $0x120] sm:$0xff]
      %v880 = vld [vmem:[%s371 + $0x128] sm:$0xff]
      %v881 = vld [vmem:[%s371 + $0x138] sm:$0xff]
      %v882 = vld [vmem:[%s371 + $0x140] sm:$0xff]
      %v883 = vld [vmem:[%s371 + $0x150] sm:$0xff]
      %v884 = vld [vmem:[%s371 + $0x158] sm:$0xff]
      %v885 = vld [vmem:[%s371 + $0x168] sm:$0xff]
      %v886 = vld [vmem:[%s371 + $0x170] sm:$0xff]
      %919 = vrot.lane.b32.xlu0 %v855, 12
      %v920 = vpop.permute.xlu0 %919
      %921 = vrot.lane.b32.xlu0 %v856, 12
      %v922 = vpop.permute.xlu0 %921
      %923 = vrot.lane.b32.xlu0 %v857, 12
      %v924 = vpop.permute.xlu0 %923
      %925 = vrot.lane.b32.xlu0 %v858, 12
      %v926 = vpop.permute.xlu0 %925
      %927 = vrot.lane.b32.xlu0 %v859, 12
      %v928 = vpop.permute.xlu0 %927
      %929 = vrot.lane.b32.xlu0 %v860, 12
      %v930 = vpop.permute.xlu0 %929
      %931 = vrot.lane.b32.xlu0 %v861, 12
      %v932 = vpop.permute.xlu0 %931
      %933 = vrot.lane.b32.xlu0 %v862, 12
      %v934 = vpop.permute.xlu0 %933
      %935 = vrot.lane.b32.xlu0 %v863, 12
      %v936 = vpop.permute.xlu0 %935
      %937 = vrot.lane.b32.xlu0 %v864, 12
      %v938 = vpop.permute.xlu0 %937
      %939 = vrot.lane.b32.xlu0 %v865, 12
      %v940 = vpop.permute.xlu0 %939
      %941 = vrot.lane.b32.xlu0 %v866, 12
      %v942 = vpop.permute.xlu0 %941
      %943 = vrot.lane.b32.xlu0 %v867, 12
      %v944 = vpop.permute.xlu0 %943
      %945 = vrot.lane.b32.xlu0 %v868, 12
      %v946 = vpop.permute.xlu0 %945
      %947 = vrot.lane.b32.xlu0 %v869, 12
      %v948 = vpop.permute.xlu0 %947
      %949 = vrot.lane.b32.xlu0 %v870, 12
      %v950 = vpop.permute.xlu0 %949
      %951 = vrot.lane.b32.xlu0 %v871, 12
      %v952 = vpop.permute.xlu0 %951
      %953 = vrot.lane.b32.xlu0 %v872, 12
      %v954 = vpop.permute.xlu0 %953
      %955 = vrot.lane.b32.xlu0 %v873, 12
      %v956 = vpop.permute.xlu0 %955
      %957 = vrot.lane.b32.xlu0 %v874, 12
      %v958 = vpop.permute.xlu0 %957
      %959 = vrot.lane.b32.xlu0 %v875, 12
      %v960 = vpop.permute.xlu0 %959
      %961 = vrot.lane.b32.xlu0 %v876, 12
      %v962 = vpop.permute.xlu0 %961
      %963 = vrot.lane.b32.xlu0 %v877, 12
      %v964 = vpop.permute.xlu0 %963
      %965 = vrot.lane.b32.xlu0 %v878, 12
      %v966 = vpop.permute.xlu0 %965
      %967 = vrot.lane.b32.xlu0 %v879, 12
      %v968 = vpop.permute.xlu0 %967
      %969 = vrot.lane.b32.xlu0 %v880, 12
      %v970 = vpop.permute.xlu0 %969
      %971 = vrot.lane.b32.xlu0 %v881, 12
      %v972 = vpop.permute.xlu0 %971
      %973 = vrot.lane.b32.xlu0 %v882, 12
      %v974 = vpop.permute.xlu0 %973
      %975 = vrot.lane.b32.xlu0 %v883, 12
      %v976 = vpop.permute.xlu0 %975
      %977 = vrot.lane.b32.xlu0 %v884, 12
      %v978 = vpop.permute.xlu0 %977
      %979 = vrot.lane.b32.xlu0 %v885, 12
      %v980 = vpop.permute.xlu0 %979
      %981 = vrot.lane.b32.xlu0 %v886, 12
      %v982 = vpop.permute.xlu0 %981
      %vm1015 = vcmask 130144
      %1016 = vst.msk [vmem:[#allocation4] sm:$0xff] %vm1015, %v920
      %1017 = vst.msk [vmem:[#allocation4 + $0x8] sm:$0xff] %vm1015, %v922
      %1018 = vst.msk [vmem:[#allocation4 + $0x10] sm:$0xff] %vm1015, %v924
      %1019 = vst.msk [vmem:[#allocation4 + $0x18] sm:$0xff] %vm1015, %v926
      %1020 = vst.msk [vmem:[#allocation4 + $0x20] sm:$0xff] %vm1015, %v928
      %1021 = vst.msk [vmem:[#allocation4 + $0x28] sm:$0xff] %vm1015, %v930
      %1022 = vst.msk [vmem:[#allocation4 + $0x30] sm:$0xff] %vm1015, %v932
      %1023 = vst.msk [vmem:[#allocation4 + $0x38] sm:$0xff] %vm1015, %v934
      %1024 = vst.msk [vmem:[#allocation4 + $0x40] sm:$0xff] %vm1015, %v936
      %1025 = vst.msk [vmem:[#allocation4 + $0x48] sm:$0xff] %vm1015, %v938
      %1026 = vst.msk [vmem:[#allocation4 + $0x50] sm:$0xff] %vm1015, %v940
      %1027 = vst.msk [vmem:[#allocation4 + $0x58] sm:$0xff] %vm1015, %v942
      %1028 = vst.msk [vmem:[#allocation4 + $0x60] sm:$0xff] %vm1015, %v944
      %1029 = vst.msk [vmem:[#allocation4 + $0x68] sm:$0xff] %vm1015, %v946
      %1030 = vst.msk [vmem:[#allocation4 + $0x70] sm:$0xff] %vm1015, %v948
      %1031 = vst.msk [vmem:[#allocation4 + $0x78] sm:$0xff] %vm1015, %v950
      %1032 = vst.msk [vmem:[#allocation4 + $0x80] sm:$0xff] %vm1015, %v952
      %1033 = vst.msk [vmem:[#allocation4 + $0x88] sm:$0xff] %vm1015, %v954
      %1034 = vst.msk [vmem:[#allocation4 + $0x90] sm:$0xff] %vm1015, %v956
      %1035 = vst.msk [vmem:[#allocation4 + $0x98] sm:$0xff] %vm1015, %v958
      %1036 = vst.msk [vmem:[#allocation4 + $0xa0] sm:$0xff] %vm1015, %v960
      %1037 = vst.msk [vmem:[#allocation4 + $0xa8] sm:$0xff] %vm1015, %v962
      %1038 = vst.msk [vmem:[#allocation4 + $0xb0] sm:$0xff] %vm1015, %v964
      %1039 = vst.msk [vmem:[#allocation4 + $0xb8] sm:$0xff] %vm1015, %v966
      %1040 = vst.msk [vmem:[#allocation4 + $0xc0] sm:$0xff] %vm1015, %v968
      %1041 = vst.msk [vmem:[#allocation4 + $0xc8] sm:$0xff] %vm1015, %v970
      %1042 = vst.msk [vmem:[#allocation4 + $0xd0] sm:$0xff] %vm1015, %v972
      %1043 = vst.msk [vmem:[#allocation4 + $0xd8] sm:$0xff] %vm1015, %v974
      %1044 = vst.msk [vmem:[#allocation4 + $0xe0] sm:$0xff] %vm1015, %v976
      %1045 = vst.msk [vmem:[#allocation4 + $0xe8] sm:$0xff] %vm1015, %v978
      %1046 = vst.msk [vmem:[#allocation4 + $0xf0] sm:$0xff] %vm1015, %v980
      %1047 = vst.msk [vmem:[#allocation4 + $0xf8] sm:$0xff] %vm1015, %v982
      %v1048 = vld [vmem:[%s371 + $0x1] sm:$0xff]
      %v1049 = vld [vmem:[%s371 + $0x9] sm:$0xff]
      %v1050 = vld [vmem:[%s371 + $0x19] sm:$0xff]
      %v1051 = vld [vmem:[%s371 + $0x21] sm:$0xff]
      %v1052 = vld [vmem:[%s371 + $0x31] sm:$0xff]
      %v1053 = vld [vmem:[%s371 + $0x39] sm:$0xff]
      %v1054 = vld [vmem:[%s371 + $0x49] sm:$0xff]
      %v1055 = vld [vmem:[%s371 + $0x51] sm:$0xff]
      %v1056 = vld [vmem:[%s371 + $0x61] sm:$0xff]
      %v1057 = vld [vmem:[%s371 + $0x69] sm:$0xff]
      %v1058 = vld [vmem:[%s371 + $0x79] sm:$0xff]
      %v1059 = vld [vmem:[%s371 + $0x81] sm:$0xff]
      %v1060 = vld [vmem:[%s371 + $0x91] sm:$0xff]
      %v1061 = vld [vmem:[%s371 + $0x99] sm:$0xff]
      %v1062 = vld [vmem:[%s371 + $0xa9] sm:$0xff]
      %v1063 = vld [vmem:[%s371 + $0xb1] sm:$0xff]
      %v1064 = vld [vmem:[%s371 + $0xc1] sm:$0xff]
      %v1065 = vld [vmem:[%s371 + $0xc9] sm:$0xff]
      %v1066 = vld [vmem:[%s371 + $0xd9] sm:$0xff]
      %v1067 = vld [vmem:[%s371 + $0xe1] sm:$0xff]
      %v1068 = vld [vmem:[%s371 + $0xf1] sm:$0xff]
      %v1069 = vld [vmem:[%s371 + $0xf9] sm:$0xff]
      %v1070 = vld [vmem:[%s371 + $0x109] sm:$0xff]
      %v1071 = vld [vmem:[%s371 + $0x111] sm:$0xff]
      %v1072 = vld [vmem:[%s371 + $0x121] sm:$0xff]
      %v1073 = vld [vmem:[%s371 + $0x129] sm:$0xff]
      %v1074 = vld [vmem:[%s371 + $0x139] sm:$0xff]
      %v1075 = vld [vmem:[%s371 + $0x141] sm:$0xff]
      %v1076 = vld [vmem:[%s371 + $0x151] sm:$0xff]
      %v1077 = vld [vmem:[%s371 + $0x159] sm:$0xff]
      %v1078 = vld [vmem:[%s371 + $0x169] sm:$0xff]
      %v1079 = vld [vmem:[%s371 + $0x171] sm:$0xff]
      %1112 = vrot.lane.b32.xlu0 %v1048, 16
      %v1113 = vpop.permute.xlu0 %1112
      %1114 = vrot.lane.b32.xlu0 %v1049, 16
      %v1115 = vpop.permute.xlu0 %1114
      %1116 = vrot.lane.b32.xlu0 %v1050, 16
      %v1117 = vpop.permute.xlu0 %1116
      %1118 = vrot.lane.b32.xlu0 %v1051, 16
      %v1119 = vpop.permute.xlu0 %1118
      %1120 = vrot.lane.b32.xlu0 %v1052, 16
      %v1121 = vpop.permute.xlu0 %1120
      %1122 = vrot.lane.b32.xlu0 %v1053, 16
      %v1123 = vpop.permute.xlu0 %1122
      %1124 = vrot.lane.b32.xlu0 %v1054, 16
      %v1125 = vpop.permute.xlu0 %1124
      %1126 = vrot.lane.b32.xlu0 %v1055, 16
      %v1127 = vpop.permute.xlu0 %1126
      %1128 = vrot.lane.b32.xlu0 %v1056, 16
      %v1129 = vpop.permute.xlu0 %1128
      %1130 = vrot.lane.b32.xlu0 %v1057, 16
      %v1131 = vpop.permute.xlu0 %1130
      %1132 = vrot.lane.b32.xlu0 %v1058, 16
      %v1133 = vpop.permute.xlu0 %1132
      %1134 = vrot.lane.b32.xlu0 %v1059, 16
      %v1135 = vpop.permute.xlu0 %1134
      %1136 = vrot.lane.b32.xlu0 %v1060, 16
      %v1137 = vpop.permute.xlu0 %1136
      %1138 = vrot.lane.b32.xlu0 %v1061, 16
      %v1139 = vpop.permute.xlu0 %1138
      %1140 = vrot.lane.b32.xlu0 %v1062, 16
      %v1141 = vpop.permute.xlu0 %1140
      %1142 = vrot.lane.b32.xlu0 %v1063, 16
      %v1143 = vpop.permute.xlu0 %1142
      %1144 = vrot.lane.b32.xlu0 %v1064, 16
      %v1145 = vpop.permute.xlu0 %1144
      %1146 = vrot.lane.b32.xlu0 %v1065, 16
      %v1147 = vpop.permute.xlu0 %1146
      %1148 = vrot.lane.b32.xlu0 %v1066, 16
      %v1149 = vpop.permute.xlu0 %1148
      %1150 = vrot.lane.b32.xlu0 %v1067, 16
      %v1151 = vpop.permute.xlu0 %1150
      %1152 = vrot.lane.b32.xlu0 %v1068, 16
      %v1153 = vpop.permute.xlu0 %1152
      %1154 = vrot.lane.b32.xlu0 %v1069, 16
      %v1155 = vpop.permute.xlu0 %1154
      %1156 = vrot.lane.b32.xlu0 %v1070, 16
      %v1157 = vpop.permute.xlu0 %1156
      %1158 = vrot.lane.b32.xlu0 %v1071, 16
      %v1159 = vpop.permute.xlu0 %1158
      %1160 = vrot.lane.b32.xlu0 %v1072, 16
      %v1161 = vpop.permute.xlu0 %1160
      %1162 = vrot.lane.b32.xlu0 %v1073, 16
      %v1163 = vpop.permute.xlu0 %1162
      %1164 = vrot.lane.b32.xlu0 %v1074, 16
      %v1165 = vpop.permute.xlu0 %1164
      %1166 = vrot.lane.b32.xlu0 %v1075, 16
      %v1167 = vpop.permute.xlu0 %1166
      %1168 = vrot.lane.b32.xlu0 %v1076, 16
      %v1169 = vpop.permute.xlu0 %1168
      %1170 = vrot.lane.b32.xlu0 %v1077, 16
      %v1171 = vpop.permute.xlu0 %1170
      %1172 = vrot.lane.b32.xlu0 %v1078, 16
      %v1173 = vpop.permute.xlu0 %1172
      %1174 = vrot.lane.b32.xlu0 %v1079, 16
      %v1175 = vpop.permute.xlu0 %1174
      %vm1208 = vcmask 162944
      %1209 = vst.msk [vmem:[#allocation4] sm:$0xff] %vm1208, %v1113
      %1210 = vst.msk [vmem:[#allocation4 + $0x8] sm:$0xff] %vm1208, %v1115
      %1211 = vst.msk [vmem:[#allocation4 + $0x10] sm:$0xff] %vm1208, %v1117
      %1212 = vst.msk [vmem:[#allocation4 + $0x18] sm:$0xff] %vm1208, %v1119
      %1213 = vst.msk [vmem:[#allocation4 + $0x20] sm:$0xff] %vm1208, %v1121
      %1214 = vst.msk [vmem:[#allocation4 + $0x28] sm:$0xff] %vm1208, %v1123
      %1215 = vst.msk [vmem:[#allocation4 + $0x30] sm:$0xff] %vm1208, %v1125
      %1216 = vst.msk [vmem:[#allocation4 + $0x38] sm:$0xff] %vm1208, %v1127
      %1217 = vst.msk [vmem:[#allocation4 + $0x40] sm:$0xff] %vm1208, %v1129
      %1218 = vst.msk [vmem:[#allocation4 + $0x48] sm:$0xff] %vm1208, %v1131
      %1219 = vst.msk [vmem:[#allocation4 + $0x50] sm:$0xff] %vm1208, %v1133
      %1220 = vst.msk [vmem:[#allocation4 + $0x58] sm:$0xff] %vm1208, %v1135
      %1221 = vst.msk [vmem:[#allocation4 + $0x60] sm:$0xff] %vm1208, %v1137
      %1222 = vst.msk [vmem:[#allocation4 + $0x68] sm:$0xff] %vm1208, %v1139
      %1223 = vst.msk [vmem:[#allocation4 + $0x70] sm:$0xff] %vm1208, %v1141
      %1224 = vst.msk [vmem:[#allocation4 + $0x78] sm:$0xff] %vm1208, %v1143
      %1225 = vst.msk [vmem:[#allocation4 + $0x80] sm:$0xff] %vm1208, %v1145
      %1226 = vst.msk [vmem:[#allocation4 + $0x88] sm:$0xff] %vm1208, %v1147
      %1227 = vst.msk [vmem:[#allocation4 + $0x90] sm:$0xff] %vm1208, %v1149
      %1228 = vst.msk [vmem:[#allocation4 + $0x98] sm:$0xff] %vm1208, %v1151
      %1229 = vst.msk [vmem:[#allocation4 + $0xa0] sm:$0xff] %vm1208, %v1153
      %1230 = vst.msk [vmem:[#allocation4 + $0xa8] sm:$0xff] %vm1208, %v1155
      %1231 = vst.msk [vmem:[#allocation4 + $0xb0] sm:$0xff] %vm1208, %v1157
      %1232 = vst.msk [vmem:[#allocation4 + $0xb8] sm:$0xff] %vm1208, %v1159
      %1233 = vst.msk [vmem:[#allocation4 + $0xc0] sm:$0xff] %vm1208, %v1161
      %1234 = vst.msk [vmem:[#allocation4 + $0xc8] sm:$0xff] %vm1208, %v1163
      %1235 = vst.msk [vmem:[#allocation4 + $0xd0] sm:$0xff] %vm1208, %v1165
      %1236 = vst.msk [vmem:[#allocation4 + $0xd8] sm:$0xff] %vm1208, %v1167
      %1237 = vst.msk [vmem:[#allocation4 + $0xe0] sm:$0xff] %vm1208, %v1169
      %1238 = vst.msk [vmem:[#allocation4 + $0xe8] sm:$0xff] %vm1208, %v1171
      %1239 = vst.msk [vmem:[#allocation4 + $0xf0] sm:$0xff] %vm1208, %v1173
      %1240 = vst.msk [vmem:[#allocation4 + $0xf8] sm:$0xff] %vm1208, %v1175
      %v1241 = vld [vmem:[%s371 + $0x2] sm:$0xff]
      %v1242 = vld [vmem:[%s371 + $0xa] sm:$0xff]
      %v1243 = vld [vmem:[%s371 + $0x1a] sm:$0xff]
      %v1244 = vld [vmem:[%s371 + $0x22] sm:$0xff]
      %v1245 = vld [vmem:[%s371 + $0x32] sm:$0xff]
      %v1246 = vld [vmem:[%s371 + $0x3a] sm:$0xff]
      %v1247 = vld [vmem:[%s371 + $0x4a] sm:$0xff]
      %v1248 = vld [vmem:[%s371 + $0x52] sm:$0xff]
      %v1249 = vld [vmem:[%s371 + $0x62] sm:$0xff]
      %v1250 = vld [vmem:[%s371 + $0x6a] sm:$0xff]
      %v1251 = vld [vmem:[%s371 + $0x7a] sm:$0xff]
      %v1252 = vld [vmem:[%s371 + $0x82] sm:$0xff]
      %v1253 = vld [vmem:[%s371 + $0x92] sm:$0xff]
      %v1254 = vld [vmem:[%s371 + $0x9a] sm:$0xff]
      %v1255 = vld [vmem:[%s371 + $0xaa] sm:$0xff]
      %v1256 = vld [vmem:[%s371 + $0xb2] sm:$0xff]
      %v1257 = vld [vmem:[%s371 + $0xc2] sm:$0xff]
      %v1258 = vld [vmem:[%s371 + $0xca] sm:$0xff]
      %v1259 = vld [vmem:[%s371 + $0xda] sm:$0xff]
      %v1260 = vld [vmem:[%s371 + $0xe2] sm:$0xff]
      %v1261 = vld [vmem:[%s371 + $0xf2] sm:$0xff]
      %v1262 = vld [vmem:[%s371 + $0xfa] sm:$0xff]
      %v1263 = vld [vmem:[%s371 + $0x10a] sm:$0xff]
      %v1264 = vld [vmem:[%s371 + $0x112] sm:$0xff]
      %v1265 = vld [vmem:[%s371 + $0x122] sm:$0xff]
      %v1266 = vld [vmem:[%s371 + $0x12a] sm:$0xff]
      %v1267 = vld [vmem:[%s371 + $0x13a] sm:$0xff]
      %v1268 = vld [vmem:[%s371 + $0x142] sm:$0xff]
      %v1269 = vld [vmem:[%s371 + $0x152] sm:$0xff]
      %v1270 = vld [vmem:[%s371 + $0x15a] sm:$0xff]
      %v1271 = vld [vmem:[%s371 + $0x16a] sm:$0xff]
      %v1272 = vld [vmem:[%s371 + $0x172] sm:$0xff]
      %1305 = vrot.lane.b32.xlu0 %v1241, 20
      %v1306 = vpop.permute.xlu0 %1305
      %1307 = vrot.lane.b32.xlu0 %v1242, 20
      %v1308 = vpop.permute.xlu0 %1307
      %1309 = vrot.lane.b32.xlu0 %v1243, 20
      %v1310 = vpop.permute.xlu0 %1309
      %1311 = vrot.lane.b32.xlu0 %v1244, 20
      %v1312 = vpop.permute.xlu0 %1311
      %1313 = vrot.lane.b32.xlu0 %v1245, 20
      %v1314 = vpop.permute.xlu0 %1313
      %1315 = vrot.lane.b32.xlu0 %v1246, 20
      %v1316 = vpop.permute.xlu0 %1315
      %1317 = vrot.lane.b32.xlu0 %v1247, 20
      %v1318 = vpop.permute.xlu0 %1317
      %1319 = vrot.lane.b32.xlu0 %v1248, 20
      %v1320 = vpop.permute.xlu0 %1319
      %1321 = vrot.lane.b32.xlu0 %v1249, 20
      %v1322 = vpop.permute.xlu0 %1321
      %1323 = vrot.lane.b32.xlu0 %v1250, 20
      %v1324 = vpop.permute.xlu0 %1323
      %1325 = vrot.lane.b32.xlu0 %v1251, 20
      %v1326 = vpop.permute.xlu0 %1325
      %1327 = vrot.lane.b32.xlu0 %v1252, 20
      %v1328 = vpop.permute.xlu0 %1327
      %1329 = vrot.lane.b32.xlu0 %v1253, 20
      %v1330 = vpop.permute.xlu0 %1329
      %1331 = vrot.lane.b32.xlu0 %v1254, 20
      %v1332 = vpop.permute.xlu0 %1331
      %1333 = vrot.lane.b32.xlu0 %v1255, 20
      %v1334 = vpop.permute.xlu0 %1333
      %1335 = vrot.lane.b32.xlu0 %v1256, 20
      %v1336 = vpop.permute.xlu0 %1335
      %1337 = vrot.lane.b32.xlu0 %v1257, 20
      %v1338 = vpop.permute.xlu0 %1337
      %1339 = vrot.lane.b32.xlu0 %v1258, 20
      %v1340 = vpop.permute.xlu0 %1339
      %1341 = vrot.lane.b32.xlu0 %v1259, 20
      %v1342 = vpop.permute.xlu0 %1341
      %1343 = vrot.lane.b32.xlu0 %v1260, 20
      %v1344 = vpop.permute.xlu0 %1343
      %1345 = vrot.lane.b32.xlu0 %v1261, 20
      %v1346 = vpop.permute.xlu0 %1345
      %1347 = vrot.lane.b32.xlu0 %v1262, 20
      %v1348 = vpop.permute.xlu0 %1347
      %1349 = vrot.lane.b32.xlu0 %v1263, 20
      %v1350 = vpop.permute.xlu0 %1349
      %1351 = vrot.lane.b32.xlu0 %v1264, 20
      %v1352 = vpop.permute.xlu0 %1351
      %1353 = vrot.lane.b32.xlu0 %v1265, 20
      %v1354 = vpop.permute.xlu0 %1353
      %1355 = vrot.lane.b32.xlu0 %v1266, 20
      %v1356 = vpop.permute.xlu0 %1355
      %1357 = vrot.lane.b32.xlu0 %v1267, 20
      %v1358 = vpop.permute.xlu0 %1357
      %1359 = vrot.lane.b32.xlu0 %v1268, 20
      %v1360 = vpop.permute.xlu0 %1359
      %1361 = vrot.lane.b32.xlu0 %v1269, 20
      %v1362 = vpop.permute.xlu0 %1361
      %1363 = vrot.lane.b32.xlu0 %v1270, 20
      %v1364 = vpop.permute.xlu0 %1363
      %1365 = vrot.lane.b32.xlu0 %v1271, 20
      %v1366 = vpop.permute.xlu0 %1365
      %1367 = vrot.lane.b32.xlu0 %v1272, 20
      %v1368 = vpop.permute.xlu0 %1367
      %vm1401 = vcmask 195744
      %1402 = vst.msk [vmem:[#allocation4] sm:$0xff] %vm1401, %v1306
      %1403 = vst.msk [vmem:[#allocation4 + $0x8] sm:$0xff] %vm1401, %v1308
      %1404 = vst.msk [vmem:[#allocation4 + $0x10] sm:$0xff] %vm1401, %v1310
      %1405 = vst.msk [vmem:[#allocation4 + $0x18] sm:$0xff] %vm1401, %v1312
      %1406 = vst.msk [vmem:[#allocation4 + $0x20] sm:$0xff] %vm1401, %v1314
      %1407 = vst.msk [vmem:[#allocation4 + $0x28] sm:$0xff] %vm1401, %v1316
      %1408 = vst.msk [vmem:[#allocation4 + $0x30] sm:$0xff] %vm1401, %v1318
      %1409 = vst.msk [vmem:[#allocation4 + $0x38] sm:$0xff] %vm1401, %v1320
      %1410 = vst.msk [vmem:[#allocation4 + $0x40] sm:$0xff] %vm1401, %v1322
      %1411 = vst.msk [vmem:[#allocation4 + $0x48] sm:$0xff] %vm1401, %v1324
      %1412 = vst.msk [vmem:[#allocation4 + $0x50] sm:$0xff] %vm1401, %v1326
      %1413 = vst.msk [vmem:[#allocation4 + $0x58] sm:$0xff] %vm1401, %v1328
      %1414 = vst.msk [vmem:[#allocation4 + $0x60] sm:$0xff] %vm1401, %v1330
      %1415 = vst.msk [vmem:[#allocation4 + $0x68] sm:$0xff] %vm1401, %v1332
      %1416 = vst.msk [vmem:[#allocation4 + $0x70] sm:$0xff] %vm1401, %v1334
      %1417 = vst.msk [vmem:[#allocation4 + $0x78] sm:$0xff] %vm1401, %v1336
      %1418 = vst.msk [vmem:[#allocation4 + $0x80] sm:$0xff] %vm1401, %v1338
      %1419 = vst.msk [vmem:[#allocation4 + $0x88] sm:$0xff] %vm1401, %v1340
      %1420 = vst.msk [vmem:[#allocation4 + $0x90] sm:$0xff] %vm1401, %v1342
      %1421 = vst.msk [vmem:[#allocation4 + $0x98] sm:$0xff] %vm1401, %v1344
      %1422 = vst.msk [vmem:[#allocation4 + $0xa0] sm:$0xff] %vm1401, %v1346
      %1423 = vst.msk [vmem:[#allocation4 + $0xa8] sm:$0xff] %vm1401, %v1348
      %1424 = vst.msk [vmem:[#allocation4 + $0xb0] sm:$0xff] %vm1401, %v1350
      %1425 = vst.msk [vmem:[#allocation4 + $0xb8] sm:$0xff] %vm1401, %v1352
      %1426 = vst.msk [vmem:[#allocation4 + $0xc0] sm:$0xff] %vm1401, %v1354
      %1427 = vst.msk [vmem:[#allocation4 + $0xc8] sm:$0xff] %vm1401, %v1356
      %1428 = vst.msk [vmem:[#allocation4 + $0xd0] sm:$0xff] %vm1401, %v1358
      %1429 = vst.msk [vmem:[#allocation4 + $0xd8] sm:$0xff] %vm1401, %v1360
      %1430 = vst.msk [vmem:[#allocation4 + $0xe0] sm:$0xff] %vm1401, %v1362
      %1431 = vst.msk [vmem:[#allocation4 + $0xe8] sm:$0xff] %vm1401, %v1364
      %1432 = vst.msk [vmem:[#allocation4 + $0xf0] sm:$0xff] %vm1401, %v1366
      %1433 = vst.msk [vmem:[#allocation4 + $0xf8] sm:$0xff] %vm1401, %v1368
      %s1434 = scalar_lea.vmem [#allocation2], 48
      %v1435 = vld [vmem:[%s1434] sm:$0xff]
      %v1436 = vld [vmem:[%s1434 + $0x8] sm:$0xff]
      %v1437 = vld [vmem:[%s1434 + $0x18] sm:$0xff]
      %v1438 = vld [vmem:[%s1434 + $0x20] sm:$0xff]
      %v1439 = vld [vmem:[%s1434 + $0x30] sm:$0xff]
      %v1440 = vld [vmem:[%s1434 + $0x38] sm:$0xff]
      %v1441 = vld [vmem:[%s1434 + $0x48] sm:$0xff]
      %v1442 = vld [vmem:[%s1434 + $0x50] sm:$0xff]
      %v1443 = vld [vmem:[%s1434 + $0x60] sm:$0xff]
      %v1444 = vld [vmem:[%s1434 + $0x68] sm:$0xff]
      %v1445 = vld [vmem:[%s1434 + $0x78] sm:$0xff]
      %v1446 = vld [vmem:[%s1434 + $0x80] sm:$0xff]
      %v1447 = vld [vmem:[%s1434 + $0x90] sm:$0xff]
      %v1448 = vld [vmem:[%s1434 + $0x98] sm:$0xff]
      %v1449 = vld [vmem:[%s1434 + $0xa8] sm:$0xff]
      %v1450 = vld [vmem:[%s1434 + $0xb0] sm:$0xff]
      %v1451 = vld [vmem:[%s1434 + $0xc0] sm:$0xff]
      %v1452 = vld [vmem:[%s1434 + $0xc8] sm:$0xff]
      %v1453 = vld [vmem:[%s1434 + $0xd8] sm:$0xff]
      %v1454 = vld [vmem:[%s1434 + $0xe0] sm:$0xff]
      %v1455 = vld [vmem:[%s1434 + $0xf0] sm:$0xff]
      %v1456 = vld [vmem:[%s1434 + $0xf8] sm:$0xff]
      %v1457 = vld [vmem:[%s1434 + $0x108] sm:$0xff]
      %v1458 = vld [vmem:[%s1434 + $0x110] sm:$0xff]
      %v1459 = vld [vmem:[%s1434 + $0x120] sm:$0xff]
      %v1460 = vld [vmem:[%s1434 + $0x128] sm:$0xff]
      %v1461 = vld [vmem:[%s1434 + $0x138] sm:$0xff]
      %v1462 = vld [vmem:[%s1434 + $0x140] sm:$0xff]
      %v1463 = vld [vmem:[%s1434 + $0x150] sm:$0xff]
      %v1464 = vld [vmem:[%s1434 + $0x158] sm:$0xff]
      %v1465 = vld [vmem:[%s1434 + $0x168] sm:$0xff]
      %v1466 = vld [vmem:[%s1434 + $0x170] sm:$0xff]
      %1499 = vrot.lane.b32.xlu0 %v1435, 24
      %v1500 = vpop.permute.xlu0 %1499
      %1501 = vrot.lane.b32.xlu0 %v1436, 24
      %v1502 = vpop.permute.xlu0 %1501
      %1503 = vrot.lane.b32.xlu0 %v1437, 24
      %v1504 = vpop.permute.xlu0 %1503
      %1505 = vrot.lane.b32.xlu0 %v1438, 24
      %v1506 = vpop.permute.xlu0 %1505
      %1507 = vrot.lane.b32.xlu0 %v1439, 24
      %v1508 = vpop.permute.xlu0 %1507
      %1509 = vrot.lane.b32.xlu0 %v1440, 24
      %v1510 = vpop.permute.xlu0 %1509
      %1511 = vrot.lane.b32.xlu0 %v1441, 24
      %v1512 = vpop.permute.xlu0 %1511
      %1513 = vrot.lane.b32.xlu0 %v1442, 24
      %v1514 = vpop.permute.xlu0 %1513
      %1515 = vrot.lane.b32.xlu0 %v1443, 24
      %v1516 = vpop.permute.xlu0 %1515
      %1517 = vrot.lane.b32.xlu0 %v1444, 24
      %v1518 = vpop.permute.xlu0 %1517
      %1519 = vrot.lane.b32.xlu0 %v1445, 24
      %v1520 = vpop.permute.xlu0 %1519
      %1521 = vrot.lane.b32.xlu0 %v1446, 24
      %v1522 = vpop.permute.xlu0 %1521
      %1523 = vrot.lane.b32.xlu0 %v1447, 24
      %v1524 = vpop.permute.xlu0 %1523
      %1525 = vrot.lane.b32.xlu0 %v1448, 24
      %v1526 = vpop.permute.xlu0 %1525
      %1527 = vrot.lane.b32.xlu0 %v1449, 24
      %v1528 = vpop.permute.xlu0 %1527
      %1529 = vrot.lane.b32.xlu0 %v1450, 24
      %v1530 = vpop.permute.xlu0 %1529
      %1531 = vrot.lane.b32.xlu0 %v1451, 24
      %v1532 = vpop.permute.xlu0 %1531
      %1533 = vrot.lane.b32.xlu0 %v1452, 24
      %v1534 = vpop.permute.xlu0 %1533
      %1535 = vrot.lane.b32.xlu0 %v1453, 24
      %v1536 = vpop.permute.xlu0 %1535
      %1537 = vrot.lane.b32.xlu0 %v1454, 24
      %v1538 = vpop.permute.xlu0 %1537
      %1539 = vrot.lane.b32.xlu0 %v1455, 24
      %v1540 = vpop.permute.xlu0 %1539
      %1541 = vrot.lane.b32.xlu0 %v1456, 24
      %v1542 = vpop.permute.xlu0 %1541
      %1543 = vrot.lane.b32.xlu0 %v1457, 24
      %v1544 = vpop.permute.xlu0 %1543
      %1545 = vrot.lane.b32.xlu0 %v1458, 24
      %v1546 = vpop.permute.xlu0 %1545
      %1547 = vrot.lane.b32.xlu0 %v1459, 24
      %v1548 = vpop.permute.xlu0 %1547
      %1549 = vrot.lane.b32.xlu0 %v1460, 24
      %v1550 = vpop.permute.xlu0 %1549
      %1551 = vrot.lane.b32.xlu0 %v1461, 24
      %v1552 = vpop.permute.xlu0 %1551
      %1553 = vrot.lane.b32.xlu0 %v1462, 24
      %v1554 = vpop.permute.xlu0 %1553
      %1555 = vrot.lane.b32.xlu0 %v1463, 24
      %v1556 = vpop.permute.xlu0 %1555
      %1557 = vrot.lane.b32.xlu0 %v1464, 24
      %v1558 = vpop.permute.xlu0 %1557
      %1559 = vrot.lane.b32.xlu0 %v1465, 24
      %v1560 = vpop.permute.xlu0 %1559
      %1561 = vrot.lane.b32.xlu0 %v1466, 24
      %v1562 = vpop.permute.xlu0 %1561
      %vm1595 = vcmask 228544
      %1596 = vst.msk [vmem:[#allocation4] sm:$0xff] %vm1595, %v1500
      %1597 = vst.msk [vmem:[#allocation4 + $0x8] sm:$0xff] %vm1595, %v1502
      %1598 = vst.msk [vmem:[#allocation4 + $0x10] sm:$0xff] %vm1595, %v1504
      %1599 = vst.msk [vmem:[#allocation4 + $0x18] sm:$0xff] %vm1595, %v1506
      %1600 = vst.msk [vmem:[#allocation4 + $0x20] sm:$0xff] %vm1595, %v1508
      %1601 = vst.msk [vmem:[#allocation4 + $0x28] sm:$0xff] %vm1595, %v1510
      %1602 = vst.msk [vmem:[#allocation4 + $0x30] sm:$0xff] %vm1595, %v1512
      %1603 = vst.msk [vmem:[#allocation4 + $0x38] sm:$0xff] %vm1595, %v1514
      %1604 = vst.msk [vmem:[#allocation4 + $0x40] sm:$0xff] %vm1595, %v1516
      %1605 = vst.msk [vmem:[#allocation4 + $0x48] sm:$0xff] %vm1595, %v1518
      %1606 = vst.msk [vmem:[#allocation4 + $0x50] sm:$0xff] %vm1595, %v1520
      %1607 = vst.msk [vmem:[#allocation4 + $0x58] sm:$0xff] %vm1595, %v1522
      %1608 = vst.msk [vmem:[#allocation4 + $0x60] sm:$0xff] %vm1595, %v1524
      %1609 = vst.msk [vmem:[#allocation4 + $0x68] sm:$0xff] %vm1595, %v1526
      %1610 = vst.msk [vmem:[#allocation4 + $0x70] sm:$0xff] %vm1595, %v1528
      %1611 = vst.msk [vmem:[#allocation4 + $0x78] sm:$0xff] %vm1595, %v1530
      %1612 = vst.msk [vmem:[#allocation4 + $0x80] sm:$0xff] %vm1595, %v1532
      %1613 = vst.msk [vmem:[#allocation4 + $0x88] sm:$0xff] %vm1595, %v1534
      %1614 = vst.msk [vmem:[#allocation4 + $0x90] sm:$0xff] %vm1595, %v1536
      %1615 = vst.msk [vmem:[#allocation4 + $0x98] sm:$0xff] %vm1595, %v1538
      %1616 = vst.msk [vmem:[#allocation4 + $0xa0] sm:$0xff] %vm1595, %v1540
      %1617 = vst.msk [vmem:[#allocation4 + $0xa8] sm:$0xff] %vm1595, %v1542
      %1618 = vst.msk [vmem:[#allocation4 + $0xb0] sm:$0xff] %vm1595, %v1544
      %1619 = vst.msk [vmem:[#allocation4 + $0xb8] sm:$0xff] %vm1595, %v1546
      %1620 = vst.msk [vmem:[#allocation4 + $0xc0] sm:$0xff] %vm1595, %v1548
      %1621 = vst.msk [vmem:[#allocation4 + $0xc8] sm:$0xff] %vm1595, %v1550
      %1622 = vst.msk [vmem:[#allocation4 + $0xd0] sm:$0xff] %vm1595, %v1552
      %1623 = vst.msk [vmem:[#allocation4 + $0xd8] sm:$0xff] %vm1595, %v1554
      %1624 = vst.msk [vmem:[#allocation4 + $0xe0] sm:$0xff] %vm1595, %v1556
      %1625 = vst.msk [vmem:[#allocation4 + $0xe8] sm:$0xff] %vm1595, %v1558
      %1626 = vst.msk [vmem:[#allocation4 + $0xf0] sm:$0xff] %vm1595, %v1560
      %1627 = vst.msk [vmem:[#allocation4 + $0xf8] sm:$0xff] %vm1595, %v1562
      %v1628 = vld [vmem:[%s1434 + $0x1] sm:$0xff]
      %v1629 = vld [vmem:[%s1434 + $0x9] sm:$0xff]
      %v1630 = vld [vmem:[%s1434 + $0x19] sm:$0xff]
      %v1631 = vld [vmem:[%s1434 + $0x21] sm:$0xff]
      %v1632 = vld [vmem:[%s1434 + $0x31] sm:$0xff]
      %v1633 = vld [vmem:[%s1434 + $0x39] sm:$0xff]
      %v1634 = vld [vmem:[%s1434 + $0x49] sm:$0xff]
      %v1635 = vld [vmem:[%s1434 + $0x51] sm:$0xff]
      %v1636 = vld [vmem:[%s1434 + $0x61] sm:$0xff]
      %v1637 = vld [vmem:[%s1434 + $0x69] sm:$0xff]
      %v1638 = vld [vmem:[%s1434 + $0x79] sm:$0xff]
      %v1639 = vld [vmem:[%s1434 + $0x81] sm:$0xff]
      %v1640 = vld [vmem:[%s1434 + $0x91] sm:$0xff]
      %v1641 = vld [vmem:[%s1434 + $0x99] sm:$0xff]
      %v1642 = vld [vmem:[%s1434 + $0xa9] sm:$0xff]
      %v1643 = vld [vmem:[%s1434 + $0xb1] sm:$0xff]
      %v1644 = vld [vmem:[%s1434 + $0xc1] sm:$0xff]
      %v1645 = vld [vmem:[%s1434 + $0xc9] sm:$0xff]
      %v1646 = vld [vmem:[%s1434 + $0xd9] sm:$0xff]
      %v1647 = vld [vmem:[%s1434 + $0xe1] sm:$0xff]
      %v1648 = vld [vmem:[%s1434 + $0xf1] sm:$0xff]
      %v1649 = vld [vmem:[%s1434 + $0xf9] sm:$0xff]
      %v1650 = vld [vmem:[%s1434 + $0x109] sm:$0xff]
      %v1651 = vld [vmem:[%s1434 + $0x111] sm:$0xff]
      %v1652 = vld [vmem:[%s1434 + $0x121] sm:$0xff]
      %v1653 = vld [vmem:[%s1434 + $0x129] sm:$0xff]
      %v1654 = vld [vmem:[%s1434 + $0x139] sm:$0xff]
      %v1655 = vld [vmem:[%s1434 + $0x141] sm:$0xff]
      %v1656 = vld [vmem:[%s1434 + $0x151] sm:$0xff]
      %v1657 = vld [vmem:[%s1434 + $0x159] sm:$0xff]
      %v1658 = vld [vmem:[%s1434 + $0x169] sm:$0xff]
      %v1659 = vld [vmem:[%s1434 + $0x171] sm:$0xff]
      %1692 = vrot.lane.b32.xlu0 %v1628, 28
      %v1693 = vpop.permute.xlu0 %1692
      %1694 = vrot.lane.b32.xlu0 %v1629, 28
      %v1695 = vpop.permute.xlu0 %1694
      %1696 = vrot.lane.b32.xlu0 %v1630, 28
      %v1697 = vpop.permute.xlu0 %1696
      %1698 = vrot.lane.b32.xlu0 %v1631, 28
      %v1699 = vpop.permute.xlu0 %1698
      %1700 = vrot.lane.b32.xlu0 %v1632, 28
      %v1701 = vpop.permute.xlu0 %1700
      %1702 = vrot.lane.b32.xlu0 %v1633, 28
      %v1703 = vpop.permute.xlu0 %1702
      %1704 = vrot.lane.b32.xlu0 %v1634, 28
      %v1705 = vpop.permute.xlu0 %1704
      %1706 = vrot.lane.b32.xlu0 %v1635, 28
      %v1707 = vpop.permute.xlu0 %1706
      %1708 = vrot.lane.b32.xlu0 %v1636, 28
      %v1709 = vpop.permute.xlu0 %1708
      %1710 = vrot.lane.b32.xlu0 %v1637, 28
      %v1711 = vpop.permute.xlu0 %1710
      %1712 = vrot.lane.b32.xlu0 %v1638, 28
      %v1713 = vpop.permute.xlu0 %1712
      %1714 = vrot.lane.b32.xlu0 %v1639, 28
      %v1715 = vpop.permute.xlu0 %1714
      %1716 = vrot.lane.b32.xlu0 %v1640, 28
      %v1717 = vpop.permute.xlu0 %1716
      %1718 = vrot.lane.b32.xlu0 %v1641, 28
      %v1719 = vpop.permute.xlu0 %1718
      %1720 = vrot.lane.b32.xlu0 %v1642, 28
      %v1721 = vpop.permute.xlu0 %1720
      %1722 = vrot.lane.b32.xlu0 %v1643, 28
      %v1723 = vpop.permute.xlu0 %1722
      %1724 = vrot.lane.b32.xlu0 %v1644, 28
      %v1725 = vpop.permute.xlu0 %1724
      %1726 = vrot.lane.b32.xlu0 %v1645, 28
      %v1727 = vpop.permute.xlu0 %1726
      %1728 = vrot.lane.b32.xlu0 %v1646, 28
      %v1729 = vpop.permute.xlu0 %1728
      %1730 = vrot.lane.b32.xlu0 %v1647, 28
      %v1731 = vpop.permute.xlu0 %1730
      %1732 = vrot.lane.b32.xlu0 %v1648, 28
      %v1733 = vpop.permute.xlu0 %1732
      %1734 = vrot.lane.b32.xlu0 %v1649, 28
      %v1735 = vpop.permute.xlu0 %1734
      %1736 = vrot.lane.b32.xlu0 %v1650, 28
      %v1737 = vpop.permute.xlu0 %1736
      %1738 = vrot.lane.b32.xlu0 %v1651, 28
      %v1739 = vpop.permute.xlu0 %1738
      %1740 = vrot.lane.b32.xlu0 %v1652, 28
      %v1741 = vpop.permute.xlu0 %1740
      %1742 = vrot.lane.b32.xlu0 %v1653, 28
      %v1743 = vpop.permute.xlu0 %1742
      %1744 = vrot.lane.b32.xlu0 %v1654, 28
      %v1745 = vpop.permute.xlu0 %1744
      %1746 = vrot.lane.b32.xlu0 %v1655, 28
      %v1747 = vpop.permute.xlu0 %1746
      %1748 = vrot.lane.b32.xlu0 %v1656, 28
      %v1749 = vpop.permute.xlu0 %1748
      %1750 = vrot.lane.b32.xlu0 %v1657, 28
      %v1751 = vpop.permute.xlu0 %1750
      %1752 = vrot.lane.b32.xlu0 %v1658, 28
      %v1753 = vpop.permute.xlu0 %1752
      %1754 = vrot.lane.b32.xlu0 %v1659, 28
      %v1755 = vpop.permute.xlu0 %1754
      %vm1788 = vcmask 261344
      %1789 = vst.msk [vmem:[#allocation4] sm:$0xff] %vm1788, %v1693
      %1790 = vst.msk [vmem:[#allocation4 + $0x8] sm:$0xff] %vm1788, %v1695
      %1791 = vst.msk [vmem:[#allocation4 + $0x10] sm:$0xff] %vm1788, %v1697
      %1792 = vst.msk [vmem:[#allocation4 + $0x18] sm:$0xff] %vm1788, %v1699
      %1793 = vst.msk [vmem:[#allocation4 + $0x20] sm:$0xff] %vm1788, %v1701
      %1794 = vst.msk [vmem:[#allocation4 + $0x28] sm:$0xff] %vm1788, %v1703
      %1795 = vst.msk [vmem:[#allocation4 + $0x30] sm:$0xff] %vm1788, %v1705
      %1796 = vst.msk [vmem:[#allocation4 + $0x38] sm:$0xff] %vm1788, %v1707
      %1797 = vst.msk [vmem:[#allocation4 + $0x40] sm:$0xff] %vm1788, %v1709
      %1798 = vst.msk [vmem:[#allocation4 + $0x48] sm:$0xff] %vm1788, %v1711
      %1799 = vst.msk [vmem:[#allocation4 + $0x50] sm:$0xff] %vm1788, %v1713
      %1800 = vst.msk [vmem:[#allocation4 + $0x58] sm:$0xff] %vm1788, %v1715
      %1801 = vst.msk [vmem:[#allocation4 + $0x60] sm:$0xff] %vm1788, %v1717
      %1802 = vst.msk [vmem:[#allocation4 + $0x68] sm:$0xff] %vm1788, %v1719
      %1803 = vst.msk [vmem:[#allocation4 + $0x70] sm:$0xff] %vm1788, %v1721
      %1804 = vst.msk [vmem:[#allocation4 + $0x78] sm:$0xff] %vm1788, %v1723
      %1805 = vst.msk [vmem:[#allocation4 + $0x80] sm:$0xff] %vm1788, %v1725
      %1806 = vst.msk [vmem:[#allocation4 + $0x88] sm:$0xff] %vm1788, %v1727
      %1807 = vst.msk [vmem:[#allocation4 + $0x90] sm:$0xff] %vm1788, %v1729
      %1808 = vst.msk [vmem:[#allocation4 + $0x98] sm:$0xff] %vm1788, %v1731
      %1809 = vst.msk [vmem:[#allocation4 + $0xa0] sm:$0xff] %vm1788, %v1733
      %1810 = vst.msk [vmem:[#allocation4 + $0xa8] sm:$0xff] %vm1788, %v1735
      %1811 = vst.msk [vmem:[#allocation4 + $0xb0] sm:$0xff] %vm1788, %v1737
      %1812 = vst.msk [vmem:[#allocation4 + $0xb8] sm:$0xff] %vm1788, %v1739
      %1813 = vst.msk [vmem:[#allocation4 + $0xc0] sm:$0xff] %vm1788, %v1741
      %1814 = vst.msk [vmem:[#allocation4 + $0xc8] sm:$0xff] %vm1788, %v1743
      %1815 = vst.msk [vmem:[#allocation4 + $0xd0] sm:$0xff] %vm1788, %v1745
      %1816 = vst.msk [vmem:[#allocation4 + $0xd8] sm:$0xff] %vm1788, %v1747
      %1817 = vst.msk [vmem:[#allocation4 + $0xe0] sm:$0xff] %vm1788, %v1749
      %1818 = vst.msk [vmem:[#allocation4 + $0xe8] sm:$0xff] %vm1788, %v1751
      %1819 = vst.msk [vmem:[#allocation4 + $0xf0] sm:$0xff] %vm1788, %v1753
      %1820 = vst.msk [vmem:[#allocation4 + $0xf8] sm:$0xff] %vm1788, %v1755
      %v1821 = vld [vmem:[%s1434 + $0x2] sm:$0xff]
      %v1822 = vld [vmem:[%s1434 + $0xa] sm:$0xff]
      %v1823 = vld [vmem:[%s1434 + $0x1a] sm:$0xff]
      %v1824 = vld [vmem:[%s1434 + $0x22] sm:$0xff]
      %v1825 = vld [vmem:[%s1434 + $0x32] sm:$0xff]
      %v1826 = vld [vmem:[%s1434 + $0x3a] sm:$0xff]
      %v1827 = vld [vmem:[%s1434 + $0x4a] sm:$0xff]
      %v1828 = vld [vmem:[%s1434 + $0x52] sm:$0xff]
      %v1829 = vld [vmem:[%s1434 + $0x62] sm:$0xff]
      %v1830 = vld [vmem:[%s1434 + $0x6a] sm:$0xff]
      %v1831 = vld [vmem:[%s1434 + $0x7a] sm:$0xff]
      %v1832 = vld [vmem:[%s1434 + $0x82] sm:$0xff]
      %v1833 = vld [vmem:[%s1434 + $0x92] sm:$0xff]
      %v1834 = vld [vmem:[%s1434 + $0x9a] sm:$0xff]
      %v1835 = vld [vmem:[%s1434 + $0xaa] sm:$0xff]
      %v1836 = vld [vmem:[%s1434 + $0xb2] sm:$0xff]
      %v1837 = vld [vmem:[%s1434 + $0xc2] sm:$0xff]
      %v1838 = vld [vmem:[%s1434 + $0xca] sm:$0xff]
      %v1839 = vld [vmem:[%s1434 + $0xda] sm:$0xff]
      %v1840 = vld [vmem:[%s1434 + $0xe2] sm:$0xff]
      %v1841 = vld [vmem:[%s1434 + $0xf2] sm:$0xff]
      %v1842 = vld [vmem:[%s1434 + $0xfa] sm:$0xff]
      %v1843 = vld [vmem:[%s1434 + $0x10a] sm:$0xff]
      %v1844 = vld [vmem:[%s1434 + $0x112] sm:$0xff]
      %v1845 = vld [vmem:[%s1434 + $0x122] sm:$0xff]
      %v1846 = vld [vmem:[%s1434 + $0x12a] sm:$0xff]
      %v1847 = vld [vmem:[%s1434 + $0x13a] sm:$0xff]
      %v1848 = vld [vmem:[%s1434 + $0x142] sm:$0xff]
      %v1849 = vld [vmem:[%s1434 + $0x152] sm:$0xff]
      %v1850 = vld [vmem:[%s1434 + $0x15a] sm:$0xff]
      %v1851 = vld [vmem:[%s1434 + $0x16a] sm:$0xff]
      %v1852 = vld [vmem:[%s1434 + $0x172] sm:$0xff]
      %1885 = vrot.lane.b32.xlu0 %v1821, 32
      %v1886 = vpop.permute.xlu0 %1885
      %1887 = vrot.lane.b32.xlu0 %v1822, 32
      %v1888 = vpop.permute.xlu0 %1887
      %1889 = vrot.lane.b32.xlu0 %v1823, 32
      %v1890 = vpop.permute.xlu0 %1889
      %1891 = vrot.lane.b32.xlu0 %v1824, 32
      %v1892 = vpop.permute.xlu0 %1891
      %1893 = vrot.lane.b32.xlu0 %v1825, 32
      %v1894 = vpop.permute.xlu0 %1893
      %1895 = vrot.lane.b32.xlu0 %v1826, 32
      %v1896 = vpop.permute.xlu0 %1895
      %1897 = vrot.lane.b32.xlu0 %v1827, 32
      %v1898 = vpop.permute.xlu0 %1897
      %1899 = vrot.lane.b32.xlu0 %v1828, 32
      %v1900 = vpop.permute.xlu0 %1899
      %1901 = vrot.lane.b32.xlu0 %v1829, 32
      %v1902 = vpop.permute.xlu0 %1901
      %1903 = vrot.lane.b32.xlu0 %v1830, 32
      %v1904 = vpop.permute.xlu0 %1903
      %1905 = vrot.lane.b32.xlu0 %v1831, 32
      %v1906 = vpop.permute.xlu0 %1905
      %1907 = vrot.lane.b32.xlu0 %v1832, 32
      %v1908 = vpop.permute.xlu0 %1907
      %1909 = vrot.lane.b32.xlu0 %v1833, 32
      %v1910 = vpop.permute.xlu0 %1909
      %1911 = vrot.lane.b32.xlu0 %v1834, 32
      %v1912 = vpop.permute.xlu0 %1911
      %1913 = vrot.lane.b32.xlu0 %v1835, 32
      %v1914 = vpop.permute.xlu0 %1913
      %1915 = vrot.lane.b32.xlu0 %v1836, 32
      %v1916 = vpop.permute.xlu0 %1915
      %1917 = vrot.lane.b32.xlu0 %v1837, 32
      %v1918 = vpop.permute.xlu0 %1917
      %1919 = vrot.lane.b32.xlu0 %v1838, 32
      %v1920 = vpop.permute.xlu0 %1919
      %1921 = vrot.lane.b32.xlu0 %v1839, 32
      %v1922 = vpop.permute.xlu0 %1921
      %1923 = vrot.lane.b32.xlu0 %v1840, 32
      %v1924 = vpop.permute.xlu0 %1923
      %1925 = vrot.lane.b32.xlu0 %v1841, 32
      %v1926 = vpop.permute.xlu0 %1925
      %1927 = vrot.lane.b32.xlu0 %v1842, 32
      %v1928 = vpop.permute.xlu0 %1927
      %1929 = vrot.lane.b32.xlu0 %v1843, 32
      %v1930 = vpop.permute.xlu0 %1929
      %1931 = vrot.lane.b32.xlu0 %v1844, 32
      %v1932 = vpop.permute.xlu0 %1931
      %1933 = vrot.lane.b32.xlu0 %v1845, 32
      %v1934 = vpop.permute.xlu0 %1933
      %1935 = vrot.lane.b32.xlu0 %v1846, 32
      %v1936 = vpop.permute.xlu0 %1935
      %1937 = vrot.lane.b32.xlu0 %v1847, 32
      %v1938 = vpop.permute.xlu0 %1937
      %1939 = vrot.lane.b32.xlu0 %v1848, 32
      %v1940 = vpop.permute.xlu0 %1939
      %1941 = vrot.lane.b32.xlu0 %v1849, 32
      %v1942 = vpop.permute.xlu0 %1941
      %1943 = vrot.lane.b32.xlu0 %v1850, 32
      %v1944 = vpop.permute.xlu0 %1943
      %1945 = vrot.lane.b32.xlu0 %v1851, 32
      %v1946 = vpop.permute.xlu0 %1945
      %1947 = vrot.lane.b32.xlu0 %v1852, 32
      %v1948 = vpop.permute.xlu0 %1947
      %vm1981 = vcmask 294144
      %1982 = vst.msk [vmem:[#allocation4] sm:$0xff] %vm1981, %v1886
      %1983 = vst.msk [vmem:[#allocation4 + $0x8] sm:$0xff] %vm1981, %v1888
      %1984 = vst.msk [vmem:[#allocation4 + $0x10] sm:$0xff] %vm1981, %v1890
      %1985 = vst.msk [vmem:[#allocation4 + $0x18] sm:$0xff] %vm1981, %v1892
      %1986 = vst.msk [vmem:[#allocation4 + $0x20] sm:$0xff] %vm1981, %v1894
      %1987 = vst.msk [vmem:[#allocation4 + $0x28] sm:$0xff] %vm1981, %v1896
      %1988 = vst.msk [vmem:[#allocation4 + $0x30] sm:$0xff] %vm1981, %v1898
      %1989 = vst.msk [vmem:[#allocation4 + $0x38] sm:$0xff] %vm1981, %v1900
      %1990 = vst.msk [vmem:[#allocation4 + $0x40] sm:$0xff] %vm1981, %v1902
      %1991 = vst.msk [vmem:[#allocation4 + $0x48] sm:$0xff] %vm1981, %v1904
      %1992 = vst.msk [vmem:[#allocation4 + $0x50] sm:$0xff] %vm1981, %v1906
      %1993 = vst.msk [vmem:[#allocation4 + $0x58] sm:$0xff] %vm1981, %v1908
      %1994 = vst.msk [vmem:[#allocation4 + $0x60] sm:$0xff] %vm1981, %v1910
      %1995 = vst.msk [vmem:[#allocation4 + $0x68] sm:$0xff] %vm1981, %v1912
      %1996 = vst.msk [vmem:[#allocation4 + $0x70] sm:$0xff] %vm1981, %v1914
      %1997 = vst.msk [vmem:[#allocation4 + $0x78] sm:$0xff] %vm1981, %v1916
      %1998 = vst.msk [vmem:[#allocation4 + $0x80] sm:$0xff] %vm1981, %v1918
      %1999 = vst.msk [vmem:[#allocation4 + $0x88] sm:$0xff] %vm1981, %v1920
      %2000 = vst.msk [vmem:[#allocation4 + $0x90] sm:$0xff] %vm1981, %v1922
      %2001 = vst.msk [vmem:[#allocation4 + $0x98] sm:$0xff] %vm1981, %v1924
      %2002 = vst.msk [vmem:[#allocation4 + $0xa0] sm:$0xff] %vm1981, %v1926
      %2003 = vst.msk [vmem:[#allocation4 + $0xa8] sm:$0xff] %vm1981, %v1928
      %2004 = vst.msk [vmem:[#allocation4 + $0xb0] sm:$0xff] %vm1981, %v1930
      %2005 = vst.msk [vmem:[#allocation4 + $0xb8] sm:$0xff] %vm1981, %v1932
      %2006 = vst.msk [vmem:[#allocation4 + $0xc0] sm:$0xff] %vm1981, %v1934
      %2007 = vst.msk [vmem:[#allocation4 + $0xc8] sm:$0xff] %vm1981, %v1936
      %2008 = vst.msk [vmem:[#allocation4 + $0xd0] sm:$0xff] %vm1981, %v1938
      %2009 = vst.msk [vmem:[#allocation4 + $0xd8] sm:$0xff] %vm1981, %v1940
      %2010 = vst.msk [vmem:[#allocation4 + $0xe0] sm:$0xff] %vm1981, %v1942
      %2011 = vst.msk [vmem:[#allocation4 + $0xe8] sm:$0xff] %vm1981, %v1944
      %2012 = vst.msk [vmem:[#allocation4 + $0xf0] sm:$0xff] %vm1981, %v1946
      %2013 = vst.msk [vmem:[#allocation4 + $0xf8] sm:$0xff] %vm1981, %v1948
      %v2014 = vld [vmem:[#allocation4] sm:$0xff]
      %v2015 = vld [vmem:[#allocation4 + $0x8] sm:$0xff]
      %v2016 = vld [vmem:[#allocation4 + $0x10] sm:$0xff]
      %v2017 = vld [vmem:[#allocation4 + $0x18] sm:$0xff]
      %v2018 = vld [vmem:[#allocation4 + $0x20] sm:$0xff]
      %v2019 = vld [vmem:[#allocation4 + $0x28] sm:$0xff]
      %v2020 = vld [vmem:[#allocation4 + $0x30] sm:$0xff]
      %v2021 = vld [vmem:[#allocation4 + $0x38] sm:$0xff]
      %v2022 = vld [vmem:[#allocation4 + $0x40] sm:$0xff]
      %v2023 = vld [vmem:[#allocation4 + $0x48] sm:$0xff]
      %v2024 = vld [vmem:[#allocation4 + $0x50] sm:$0xff]
      %v2025 = vld [vmem:[#allocation4 + $0x58] sm:$0xff]
      %v2026 = vld [vmem:[#allocation4 + $0x60] sm:$0xff]
      %v2027 = vld [vmem:[#allocation4 + $0x68] sm:$0xff]
      %v2028 = vld [vmem:[#allocation4 + $0x70] sm:$0xff]
      %v2029 = vld [vmem:[#allocation4 + $0x78] sm:$0xff]
      %v2030 = vld [vmem:[#allocation4 + $0x80] sm:$0xff]
      %v2031 = vld [vmem:[#allocation4 + $0x88] sm:$0xff]
      %v2032 = vld [vmem:[#allocation4 + $0x90] sm:$0xff]
      %v2033 = vld [vmem:[#allocation4 + $0x98] sm:$0xff]
      %v2034 = vld [vmem:[#allocation4 + $0xa0] sm:$0xff]
      %v2035 = vld [vmem:[#allocation4 + $0xa8] sm:$0xff]
      %v2036 = vld [vmem:[#allocation4 + $0xb0] sm:$0xff]
      %v2037 = vld [vmem:[#allocation4 + $0xb8] sm:$0xff]
      %v2038 = vld [vmem:[#allocation4 + $0xc0] sm:$0xff]
      %v2039 = vld [vmem:[#allocation4 + $0xc8] sm:$0xff]
      %v2040 = vld [vmem:[#allocation4 + $0xd0] sm:$0xff]
      %v2041 = vld [vmem:[#allocation4 + $0xd8] sm:$0xff]
      %v2042 = vld [vmem:[#allocation4 + $0xe0] sm:$0xff]
      %v2043 = vld [vmem:[#allocation4 + $0xe8] sm:$0xff]
      %v2044 = vld [vmem:[#allocation4 + $0xf0] sm:$0xff]
      %v2045 = vld [vmem:[#allocation4 + $0xf8] sm:$0xff]
      %v2046 = vld [vmem:[%s1] sm:$0xff]
      %v2047 = vld [vmem:[%s1 + $0x8] sm:$0xff]
      %v2048 = vld [vmem:[%s1 + $0x10] sm:$0xff]
      %v2049 = vld [vmem:[%s1 + $0x18] sm:$0xff]
      %v2050 = vld [vmem:[%s1 + $0x20] sm:$0xf]
      %v2051 = vld [vmem:[%s2] sm:$0x1]
      %v2053 = vlaneseq
      %v2054 = vshrl.u32 %v2053, 7
      %v2055 = vsub.s32 0, %v2054
      %v2056 = vrot.slane %v2051, %v2055
      %vm2058 = vcmask 293888
      %v2060 = vsel %vm2058, %v2014, 0
      %v2063 = vsel %vm2058, %v2015, 0
      %v2066 = vsel %vm2058, %v2016, 0
      %v2069 = vsel %vm2058, %v2017, 0
      %v2072 = vsel %vm2058, %v2018, 0
      %v2075 = vsel %vm2058, %v2019, 0
      %v2078 = vsel %vm2058, %v2020, 0
      %v2081 = vsel %vm2058, %v2021, 0
      %v2084 = vsel %vm2058, %v2022, 0
      %v2087 = vsel %vm2058, %v2023, 0
      %v2090 = vsel %vm2058, %v2024, 0
      %v2093 = vsel %vm2058, %v2025, 0
      %v2096 = vsel %vm2058, %v2026, 0
      %v2099 = vsel %vm2058, %v2027, 0
      %v2102 = vsel %vm2058, %v2028, 0
      %v2105 = vsel %vm2058, %v2029, 0
      %v2108 = vsel %vm2058, %v2030, 0
      %v2111 = vsel %vm2058, %v2031, 0
      %v2114 = vsel %vm2058, %v2032, 0
      %v2117 = vsel %vm2058, %v2033, 0
      %v2120 = vsel %vm2058, %v2034, 0
      %v2123 = vsel %vm2058, %v2035, 0
      %v2126 = vsel %vm2058, %v2036, 0
      %v2129 = vsel %vm2058, %v2037, 0
      %v2132 = vsel %vm2058, %v2038, 0
      %v2135 = vsel %vm2058, %v2039, 0
      %v2138 = vsel %vm2058, %v2040, 0
      %v2141 = vsel %vm2058, %v2041, 0
      %v2144 = vsel %vm2058, %v2042, 0
      %v2147 = vsel %vm2058, %v2043, 0
      %v2150 = vsel %vm2058, %v2044, 0
      %v2153 = vsel %vm2058, %v2045, 0
      %vm2155 = vcmask 1043456
      %v2157 = vsel %vm2155, %v2050, 0
      %2159 = vmatprep.subr.mxu0 0.0
      %2160 = vmatpush1.msra.mxu0 0.0
      %2161 = vmatprep.subr.mxu0 0.0
      %2162 = vmatpush1.msra.mxu0 0.0
      %2163 = vmatprep.subr.mxu0 0.0
      %2164 = vmatpush1.msra.mxu0 0.0
      %2165 = vmatprep.subr.mxu0 0.0
      %2166 = vmatpush1.msra.mxu0 0.0
      %2167 = vmatprep.subr.mxu0 0.0
      %2168 = vmatpush1.msra.mxu0 0.0
      %2169 = vmatprep.subr.mxu0 0.0
      %2170 = vmatpush1.msra.mxu0 0.0
      %2171 = vmatprep.subr.mxu0 0.0
      %2172 = vmatpush1.msra.mxu0 0.0
      %2173 = vmatprep.subr.mxu0 0.0
      %2174 = vmatpush1.msra.mxu0 0.0
      %2175 = vmatprep.subr.mxu0 0.0
      %2176 = vmatpush1.msra.mxu0 0.0
      %2177 = vmatprep.subr.mxu0 0.0
      %2178 = vmatpush1.msra.mxu0 0.0
      %2179 = vmatprep.subr.mxu0 0.0
      %2180 = vmatpush1.msra.mxu0 0.0
      %2181 = vmatprep.subr.mxu0 0.0
      %2182 = vmatpush1.msra.mxu0 %v2157
      %2183 = vmatprep.subr.mxu0 0.0
      %2184 = vmatpush1.msra.mxu0 %v2049
      %2185 = vmatprep.subr.mxu0 0.0
      %2186 = vmatpush1.msra.mxu0 %v2048
      %2187 = vmatprep.subr.mxu0 0.0
      %2188 = vmatpush1.msra.mxu0 %v2047
      %2189 = vmatprep.subr.mxu0 0.0
      %2190 = vmatpush1.msra.mxu0 %v2046
      %2191 = vmatprep.subr.mxu0 0.0
      %2192 = vmatpush2.msra.mxu0 0.0
      %2193 = vmatprep.subr.mxu0 0.0
      %2194 = vmatpush2.msra.mxu0 0.0
      %2195 = vmatprep.subr.mxu0 0.0
      %2196 = vmatpush2.msra.mxu0 0.0
      %2197 = vmatprep.subr.mxu0 0.0
      %2198 = vmatpush2.msra.mxu0 0.0
      %2199 = vmatprep.subr.mxu0 0.0
      %2200 = vmatpush2.msra.mxu0 0.0
      %2201 = vmatprep.subr.mxu0 0.0
      %2202 = vmatpush2.msra.mxu0 0.0
      %2203 = vmatprep.subr.mxu0 0.0
      %2204 = vmatpush2.msra.mxu0 0.0
      %2205 = vmatprep.subr.mxu0 0.0
      %2206 = vmatpush2.msra.mxu0 0.0
      %2207 = vmatprep.subr.mxu0 0.0
      %2208 = vmatpush2.msra.mxu0 0.0
      %2209 = vmatprep.subr.mxu0 0.0
      %2210 = vmatpush2.msra.mxu0 0.0
      %2211 = vmatprep.subr.mxu0 0.0
      %2212 = vmatpush2.msra.mxu0 0.0
      %2213 = vmatprep.subr.mxu0 0.0
      %2214 = vmatpush2.msra.mxu0 0.0
      %2215 = vmatprep.subr.mxu0 0.0
      %2216 = vmatpush2.msra.mxu0 0.0
      %2217 = vmatprep.subr.mxu0 0.0
      %2218 = vmatpush2.msra.mxu0 0.0
      %2219 = vmatprep.subr.mxu0 0.0
      %2220 = vmatpush2.msra.mxu0 0.0
      %2221 = vmatprep.subr.mxu0 0.0
      %2222 = vmatpush2.msra.mxu0 0.0
      %2223 = vmatprep.mubr.f32.mxu0 0.0
      %2224 = vmatmul.mubr.f32.gmra.mxu0 %v2060
      %v2225 = vpop.f32.mrf.mxu0
      %v2226 = vadd.f32 %v2056, %v2225
      %v2227 = vpop.f32.mrf.mxu0
      %2228 = vmatprep.mubr.f32.mxu0 0.0
      %2229 = vmatmul.mubr.f32.gmra.mxu0 %v2063
      %v2230 = vpop.f32.mrf.mxu0
      %v2231 = vadd.f32 %v2056, %v2230
      %v2232 = vpop.f32.mrf.mxu0
      %2233 = vmatprep.mubr.f32.mxu0 0.0
      %2234 = vmatmul.mubr.f32.gmra.mxu0 %v2066
      %v2235 = vpop.f32.mrf.mxu0
      %v2236 = vadd.f32 %v2056, %v2235
      %v2237 = vpop.f32.mrf.mxu0
      %2238 = vmatprep.mubr.f32.mxu0 0.0
      %2239 = vmatmul.mubr.f32.gmra.mxu0 %v2069
      %v2240 = vpop.f32.mrf.mxu0
      %v2241 = vadd.f32 %v2056, %v2240
      %v2242 = vpop.f32.mrf.mxu0
      %2243 = vmatprep.mubr.f32.mxu0 0.0
      %2244 = vmatmul.mubr.f32.gmra.mxu0 %v2072
      %v2245 = vpop.f32.mrf.mxu0
      %v2246 = vadd.f32 %v2056, %v2245
      %v2247 = vpop.f32.mrf.mxu0
      %2248 = vmatprep.mubr.f32.mxu0 0.0
      %2249 = vmatmul.mubr.f32.gmra.mxu0 %v2075
      %v2250 = vpop.f32.mrf.mxu0
      %v2251 = vadd.f32 %v2056, %v2250
      %v2252 = vpop.f32.mrf.mxu0
      %2253 = vmatprep.mubr.f32.mxu0 0.0
      %2254 = vmatmul.mubr.f32.gmra.mxu0 %v2078
      %v2255 = vpop.f32.mrf.mxu0
      %v2256 = vadd.f32 %v2056, %v2255
      %v2257 = vpop.f32.mrf.mxu0
      %2258 = vmatprep.mubr.f32.mxu0 0.0
      %2259 = vmatmul.mubr.f32.gmra.mxu0 %v2081
      %v2260 = vpop.f32.mrf.mxu0
      %v2261 = vadd.f32 %v2056, %v2260
      %v2262 = vpop.f32.mrf.mxu0
      %2263 = vmatprep.mubr.f32.mxu0 0.0
      %2264 = vmatmul.mubr.f32.gmra.mxu0 %v2084
      %v2265 = vpop.f32.mrf.mxu0
      %v2266 = vadd.f32 %v2056, %v2265
      %v2267 = vpop.f32.mrf.mxu0
      %2268 = vmatprep.mubr.f32.mxu0 0.0
      %2269 = vmatmul.mubr.f32.gmra.mxu0 %v2087
      %v2270 = vpop.f32.mrf.mxu0
      %v2271 = vadd.f32 %v2056, %v2270
      %v2272 = vpop.f32.mrf.mxu0
      %2273 = vmatprep.mubr.f32.mxu0 0.0
      %2274 = vmatmul.mubr.f32.gmra.mxu0 %v2090
      %v2275 = vpop.f32.mrf.mxu0
      %v2276 = vadd.f32 %v2056, %v2275
      %v2277 = vpop.f32.mrf.mxu0
      %2278 = vmatprep.mubr.f32.mxu0 0.0
      %2279 = vmatmul.mubr.f32.gmra.mxu0 %v2093
      %v2280 = vpop.f32.mrf.mxu0
      %v2281 = vadd.f32 %v2056, %v2280
      %v2282 = vpop.f32.mrf.mxu0
      %2283 = vmatprep.mubr.f32.mxu0 0.0
      %2284 = vmatmul.mubr.f32.gmra.mxu0 %v2096
      %v2285 = vpop.f32.mrf.mxu0
      %v2286 = vadd.f32 %v2056, %v2285
      %v2287 = vpop.f32.mrf.mxu0
      %2288 = vmatprep.mubr.f32.mxu0 0.0
      %2289 = vmatmul.mubr.f32.gmra.mxu0 %v2099
      %v2290 = vpop.f32.mrf.mxu0
      %v2291 = vadd.f32 %v2056, %v2290
      %v2292 = vpop.f32.mrf.mxu0
      %2293 = vmatprep.mubr.f32.mxu0 0.0
      %2294 = vmatmul.mubr.f32.gmra.mxu0 %v2102
      %v2295 = vpop.f32.mrf.mxu0
      %v2296 = vadd.f32 %v2056, %v2295
      %v2297 = vpop.f32.mrf.mxu0
      %2298 = vmatprep.mubr.f32.mxu0 0.0
      %2299 = vmatmul.mubr.f32.gmra.mxu0 %v2105
      %v2300 = vpop.f32.mrf.mxu0
      %v2301 = vadd.f32 %v2056, %v2300
      %v2302 = vpop.f32.mrf.mxu0
      %2303 = vmatprep.mubr.f32.mxu0 0.0
      %2304 = vmatmul.mubr.f32.gmra.mxu0 %v2108
      %v2305 = vpop.f32.mrf.mxu0
      %v2306 = vadd.f32 %v2056, %v2305
      %v2307 = vpop.f32.mrf.mxu0
      %2308 = vmatprep.mubr.f32.mxu0 0.0
      %2309 = vmatmul.mubr.f32.gmra.mxu0 %v2111
      %v2310 = vpop.f32.mrf.mxu0
      %v2311 = vadd.f32 %v2056, %v2310
      %v2312 = vpop.f32.mrf.mxu0
      %2313 = vmatprep.mubr.f32.mxu0 0.0
      %2314 = vmatmul.mubr.f32.gmra.mxu0 %v2114
      %v2315 = vpop.f32.mrf.mxu0
      %v2316 = vadd.f32 %v2056, %v2315
      %v2317 = vpop.f32.mrf.mxu0
      %2318 = vmatprep.mubr.f32.mxu0 0.0
      %2319 = vmatmul.mubr.f32.gmra.mxu0 %v2117
      %v2320 = vpop.f32.mrf.mxu0
      %v2321 = vadd.f32 %v2056, %v2320
      %v2322 = vpop.f32.mrf.mxu0
      %2323 = vmatprep.mubr.f32.mxu0 0.0
      %2324 = vmatmul.mubr.f32.gmra.mxu0 %v2120
      %v2325 = vpop.f32.mrf.mxu0
      %v2326 = vadd.f32 %v2056, %v2325
      %v2327 = vpop.f32.mrf.mxu0
      %2328 = vmatprep.mubr.f32.mxu0 0.0
      %2329 = vmatmul.mubr.f32.gmra.mxu0 %v2123
      %v2330 = vpop.f32.mrf.mxu0
      %v2331 = vadd.f32 %v2056, %v2330
      %v2332 = vpop.f32.mrf.mxu0
      %2333 = vmatprep.mubr.f32.mxu0 0.0
      %2334 = vmatmul.mubr.f32.gmra.mxu0 %v2126
      %v2335 = vpop.f32.mrf.mxu0
      %v2336 = vadd.f32 %v2056, %v2335
      %v2337 = vpop.f32.mrf.mxu0
      %2338 = vmatprep.mubr.f32.mxu0 0.0
      %2339 = vmatmul.mubr.f32.gmra.mxu0 %v2129
      %v2340 = vpop.f32.mrf.mxu0
      %v2341 = vadd.f32 %v2056, %v2340
      %v2342 = vpop.f32.mrf.mxu0
      %2343 = vmatprep.mubr.f32.mxu0 0.0
      %2344 = vmatmul.mubr.f32.gmra.mxu0 %v2132
      %v2345 = vpop.f32.mrf.mxu0
      %v2346 = vadd.f32 %v2056, %v2345
      %v2347 = vpop.f32.mrf.mxu0
      %2348 = vmatprep.mubr.f32.mxu0 0.0
      %2349 = vmatmul.mubr.f32.gmra.mxu0 %v2135
      %v2350 = vpop.f32.mrf.mxu0
      %v2351 = vadd.f32 %v2056, %v2350
      %v2352 = vpop.f32.mrf.mxu0
      %2353 = vmatprep.mubr.f32.mxu0 0.0
      %2354 = vmatmul.mubr.f32.gmra.mxu0 %v2138
      %v2355 = vpop.f32.mrf.mxu0
      %v2356 = vadd.f32 %v2056, %v2355
      %v2357 = vpop.f32.mrf.mxu0
      %2358 = vmatprep.mubr.f32.mxu0 0.0
      %2359 = vmatmul.mubr.f32.gmra.mxu0 %v2141
      %v2360 = vpop.f32.mrf.mxu0
      %v2361 = vadd.f32 %v2056, %v2360
      %v2362 = vpop.f32.mrf.mxu0
      %2363 = vmatprep.mubr.f32.mxu0 0.0
      %2364 = vmatmul.mubr.f32.gmra.mxu0 %v2144
      %v2365 = vpop.f32.mrf.mxu0
      %v2366 = vadd.f32 %v2056, %v2365
      %v2367 = vpop.f32.mrf.mxu0
      %2368 = vmatprep.mubr.f32.mxu0 0.0
      %2369 = vmatmul.mubr.f32.gmra.mxu0 %v2147
      %v2370 = vpop.f32.mrf.mxu0
      %v2371 = vadd.f32 %v2056, %v2370
      %v2372 = vpop.f32.mrf.mxu0
      %2373 = vmatprep.mubr.f32.mxu0 0.0
      %2374 = vmatmul.mubr.f32.gmra.mxu0 %v2150
      %v2375 = vpop.f32.mrf.mxu0
      %v2376 = vadd.f32 %v2056, %v2375
      %v2377 = vpop.f32.mrf.mxu0
      %2378 = vmatprep.mubr.f32.mxu0 0.0
      %2379 = vmatmul.mubr.f32.gmra.mxu0 %v2153
      %v2380 = vpop.f32.mrf.mxu0
      %v2381 = vadd.f32 %v2056, %v2380
      %v2382 = vpop.f32.mrf.mxu0
      %2383 = vdwg.mxu0
      %2416 = vrot.lane.b32.xlu0 %v2226, 124
      %v2417 = vpop.permute.xlu0 %2416
      %2418 = vrot.lane.b32.xlu0 %v2231, 124
      %v2419 = vpop.permute.xlu0 %2418
      %2420 = vrot.lane.b32.xlu0 %v2236, 124
      %v2421 = vpop.permute.xlu0 %2420
      %2422 = vrot.lane.b32.xlu0 %v2241, 124
      %v2423 = vpop.permute.xlu0 %2422
      %2424 = vrot.lane.b32.xlu0 %v2246, 124
      %v2425 = vpop.permute.xlu0 %2424
      %2426 = vrot.lane.b32.xlu0 %v2251, 124
      %v2427 = vpop.permute.xlu0 %2426
      %2428 = vrot.lane.b32.xlu0 %v2256, 124
      %v2429 = vpop.permute.xlu0 %2428
      %2430 = vrot.lane.b32.xlu0 %v2261, 124
      %v2431 = vpop.permute.xlu0 %2430
      %2432 = vrot.lane.b32.xlu0 %v2266, 124
      %v2433 = vpop.permute.xlu0 %2432
      %2434 = vrot.lane.b32.xlu0 %v2271, 124
      %v2435 = vpop.permute.xlu0 %2434
      %2436 = vrot.lane.b32.xlu0 %v2276, 124
      %v2437 = vpop.permute.xlu0 %2436
      %2438 = vrot.lane.b32.xlu0 %v2281, 124
      %v2439 = vpop.permute.xlu0 %2438
      %2440 = vrot.lane.b32.xlu0 %v2286, 124
      %v2441 = vpop.permute.xlu0 %2440
      %2442 = vrot.lane.b32.xlu0 %v2291, 124
      %v2443 = vpop.permute.xlu0 %2442
      %2444 = vrot.lane.b32.xlu0 %v2296, 124
      %v2445 = vpop.permute.xlu0 %2444
      %2446 = vrot.lane.b32.xlu0 %v2301, 124
      %v2447 = vpop.permute.xlu0 %2446
      %2448 = vrot.lane.b32.xlu0 %v2306, 124
      %v2449 = vpop.permute.xlu0 %2448
      %2450 = vrot.lane.b32.xlu0 %v2311, 124
      %v2451 = vpop.permute.xlu0 %2450
      %2452 = vrot.lane.b32.xlu0 %v2316, 124
      %v2453 = vpop.permute.xlu0 %2452
      %2454 = vrot.lane.b32.xlu0 %v2321, 124
      %v2455 = vpop.permute.xlu0 %2454
      %2456 = vrot.lane.b32.xlu0 %v2326, 124
      %v2457 = vpop.permute.xlu0 %2456
      %2458 = vrot.lane.b32.xlu0 %v2331, 124
      %v2459 = vpop.permute.xlu0 %2458
      %2460 = vrot.lane.b32.xlu0 %v2336, 124
      %v2461 = vpop.permute.xlu0 %2460
      %2462 = vrot.lane.b32.xlu0 %v2341, 124
      %v2463 = vpop.permute.xlu0 %2462
      %2464 = vrot.lane.b32.xlu0 %v2346, 124
      %v2465 = vpop.permute.xlu0 %2464
      %2466 = vrot.lane.b32.xlu0 %v2351, 124
      %v2467 = vpop.permute.xlu0 %2466
      %2468 = vrot.lane.b32.xlu0 %v2356, 124
      %v2469 = vpop.permute.xlu0 %2468
      %2470 = vrot.lane.b32.xlu0 %v2361, 124
      %v2471 = vpop.permute.xlu0 %2470
      %2472 = vrot.lane.b32.xlu0 %v2366, 124
      %v2473 = vpop.permute.xlu0 %2472
      %2474 = vrot.lane.b32.xlu0 %v2371, 124
      %v2475 = vpop.permute.xlu0 %2474
      %2476 = vrot.lane.b32.xlu0 %v2376, 124
      %v2477 = vpop.permute.xlu0 %2476
      %2478 = vrot.lane.b32.xlu0 %v2381, 124
      %v2479 = vpop.permute.xlu0 %2478
      %v2512 = vmax.f32 %v2226, %v2417
      %v2513 = vmax.f32 %v2231, %v2419
      %v2514 = vmax.f32 %v2236, %v2421
      %v2515 = vmax.f32 %v2241, %v2423
      %v2516 = vmax.f32 %v2246, %v2425
      %v2517 = vmax.f32 %v2251, %v2427
      %v2518 = vmax.f32 %v2256, %v2429
      %v2519 = vmax.f32 %v2261, %v2431
      %v2520 = vmax.f32 %v2266, %v2433
      %v2521 = vmax.f32 %v2271, %v2435
      %v2522 = vmax.f32 %v2276, %v2437
      %v2523 = vmax.f32 %v2281, %v2439
      %v2524 = vmax.f32 %v2286, %v2441
      %v2525 = vmax.f32 %v2291, %v2443
      %v2526 = vmax.f32 %v2296, %v2445
      %v2527 = vmax.f32 %v2301, %v2447
      %v2528 = vmax.f32 %v2306, %v2449
      %v2529 = vmax.f32 %v2311, %v2451
      %v2530 = vmax.f32 %v2316, %v2453
      %v2531 = vmax.f32 %v2321, %v2455
      %v2532 = vmax.f32 %v2326, %v2457
      %v2533 = vmax.f32 %v2331, %v2459
      %v2534 = vmax.f32 %v2336, %v2461
      %v2535 = vmax.f32 %v2341, %v2463
      %v2536 = vmax.f32 %v2346, %v2465
      %v2537 = vmax.f32 %v2351, %v2467
      %v2538 = vmax.f32 %v2356, %v2469
      %v2539 = vmax.f32 %v2361, %v2471
      %v2540 = vmax.f32 %v2366, %v2473
      %v2541 = vmax.f32 %v2371, %v2475
      %v2542 = vmax.f32 %v2376, %v2477
      %v2543 = vmax.f32 %v2381, %v2479
      %s2544 = scalar_lea.vmem [#allocation3], 24
      %2545 = vst.msk [vmem:[%s2544 + $0x1] sm:$0xff] %vm372, %v2512
      %2546 = vst.msk [vmem:[%s2544 + $0x9] sm:$0xff] %vm372, %v2513
      %2547 = vst.msk [vmem:[%s2544 + $0x19] sm:$0xff] %vm372, %v2514
      %2548 = vst.msk [vmem:[%s2544 + $0x21] sm:$0xff] %vm372, %v2515
      %2549 = vst.msk [vmem:[%s2544 + $0x31] sm:$0xff] %vm372, %v2516
      %2550 = vst.msk [vmem:[%s2544 + $0x39] sm:$0xff] %vm372, %v2517
      %2551 = vst.msk [vmem:[%s2544 + $0x49] sm:$0xff] %vm372, %v2518
      %2552 = vst.msk [vmem:[%s2544 + $0x51] sm:$0xff] %vm372, %v2519
      %2553 = vst.msk [vmem:[%s2544 + $0x61] sm:$0xff] %vm372, %v2520
      %2554 = vst.msk [vmem:[%s2544 + $0x69] sm:$0xff] %vm372, %v2521
      %2555 = vst.msk [vmem:[%s2544 + $0x79] sm:$0xff] %vm372, %v2522
      %2556 = vst.msk [vmem:[%s2544 + $0x81] sm:$0xff] %vm372, %v2523
      %2557 = vst.msk [vmem:[%s2544 + $0x91] sm:$0xff] %vm372, %v2524
      %2558 = vst.msk [vmem:[%s2544 + $0x99] sm:$0xff] %vm372, %v2525
      %2559 = vst.msk [vmem:[%s2544 + $0xa9] sm:$0xff] %vm372, %v2526
      %2560 = vst.msk [vmem:[%s2544 + $0xb1] sm:$0xff] %vm372, %v2527
      %2561 = vst.msk [vmem:[%s2544 + $0xc1] sm:$0xff] %vm372, %v2528
      %2562 = vst.msk [vmem:[%s2544 + $0xc9] sm:$0xff] %vm372, %v2529
      %2563 = vst.msk [vmem:[%s2544 + $0xd9] sm:$0xff] %vm372, %v2530
      %2564 = vst.msk [vmem:[%s2544 + $0xe1] sm:$0xff] %vm372, %v2531
      %2565 = vst.msk [vmem:[%s2544 + $0xf1] sm:$0xff] %vm372, %v2532
      %2566 = vst.msk [vmem:[%s2544 + $0xf9] sm:$0xff] %vm372, %v2533
      %2567 = vst.msk [vmem:[%s2544 + $0x109] sm:$0xff] %vm372, %v2534
      %2568 = vst.msk [vmem:[%s2544 + $0x111] sm:$0xff] %vm372, %v2535
      %2569 = vst.msk [vmem:[%s2544 + $0x121] sm:$0xff] %vm372, %v2536
      %2570 = vst.msk [vmem:[%s2544 + $0x129] sm:$0xff] %vm372, %v2537
      %2571 = vst.msk [vmem:[%s2544 + $0x139] sm:$0xff] %vm372, %v2538
      %2572 = vst.msk [vmem:[%s2544 + $0x141] sm:$0xff] %vm372, %v2539
      %2573 = vst.msk [vmem:[%s2544 + $0x151] sm:$0xff] %vm372, %v2540
      %2574 = vst.msk [vmem:[%s2544 + $0x159] sm:$0xff] %vm372, %v2541
      %2575 = vst.msk [vmem:[%s2544 + $0x169] sm:$0xff] %vm372, %v2542
      %2576 = vst.msk [vmem:[%s2544 + $0x171] sm:$0xff] %vm372, %v2543
      %v2577 = vld [vmem:[#allocation3] sm:$0xff]
      %v2578 = vld [vmem:[#allocation3 + $0x8] sm:$0xff]
      %v2579 = vld [vmem:[#allocation3 + $0x18] sm:$0xff]
      %v2580 = vld [vmem:[#allocation3 + $0x20] sm:$0xff]
      %v2581 = vld [vmem:[#allocation3 + $0x30] sm:$0xff]
      %v2582 = vld [vmem:[#allocation3 + $0x38] sm:$0xff]
      %v2583 = vld [vmem:[#allocation3 + $0x48] sm:$0xff]
      %v2584 = vld [vmem:[#allocation3 + $0x50] sm:$0xff]
      %v2585 = vld [vmem:[#allocation3 + $0x60] sm:$0xff]
      %v2586 = vld [vmem:[#allocation3 + $0x68] sm:$0xff]
      %v2587 = vld [vmem:[#allocation3 + $0x78] sm:$0xff]
      %v2588 = vld [vmem:[#allocation3 + $0x80] sm:$0xff]
      %v2589 = vld [vmem:[#allocation3 + $0x90] sm:$0xff]
      %v2590 = vld [vmem:[#allocation3 + $0x98] sm:$0xff]
      %v2591 = vld [vmem:[#allocation3 + $0xa8] sm:$0xff]
      %v2592 = vld [vmem:[#allocation3 + $0xb0] sm:$0xff]
      %v2593 = vld [vmem:[#allocation3 + $0xc0] sm:$0xff]
      %v2594 = vld [vmem:[#allocation3 + $0xc8] sm:$0xff]
      %v2595 = vld [vmem:[#allocation3 + $0xd8] sm:$0xff]
      %v2596 = vld [vmem:[#allocation3 + $0xe0] sm:$0xff]
      %v2597 = vld [vmem:[#allocation3 + $0xf0] sm:$0xff]
      %v2598 = vld [vmem:[#allocation3 + $0xf8] sm:$0xff]
      %v2599 = vld [vmem:[#allocation3 + $0x108] sm:$0xff]
      %v2600 = vld [vmem:[#allocation3 + $0x110] sm:$0xff]
      %v2601 = vld [vmem:[#allocation3 + $0x120] sm:$0xff]
      %v2602 = vld [vmem:[#allocation3 + $0x128] sm:$0xff]
      %v2603 = vld [vmem:[#allocation3 + $0x138] sm:$0xff]
      %v2604 = vld [vmem:[#allocation3 + $0x140] sm:$0xff]
      %v2605 = vld [vmem:[#allocation3 + $0x150] sm:$0xff]
      %v2606 = vld [vmem:[#allocation3 + $0x158] sm:$0xff]
      %v2607 = vld [vmem:[#allocation3 + $0x168] sm:$0xff]
      %v2608 = vld [vmem:[#allocation3 + $0x170] sm:$0xff]
      %2609 = vst.msk [vmem:[#allocation4] sm:$0xff] %vm372, %v2577
      %2610 = vst.msk [vmem:[#allocation4 + $0x8] sm:$0xff] %vm372, %v2578
      %2611 = vst.msk [vmem:[#allocation4 + $0x10] sm:$0xff] %vm372, %v2579
      %2612 = vst.msk [vmem:[#allocation4 + $0x18] sm:$0xff] %vm372, %v2580
      %2613 = vst.msk [vmem:[#allocation4 + $0x20] sm:$0xff] %vm372, %v2581
      %2614 = vst.msk [vmem:[#allocation4 + $0x28] sm:$0xff] %vm372, %v2582
      %2615 = vst.msk [vmem:[#allocation4 + $0x30] sm:$0xff] %vm372, %v2583
      %2616 = vst.msk [vmem:[#allocation4 + $0x38] sm:$0xff] %vm372, %v2584
      %2617 = vst.msk [vmem:[#allocation4 + $0x40] sm:$0xff] %vm372, %v2585
      %2618 = vst.msk [vmem:[#allocation4 + $0x48] sm:$0xff] %vm372, %v2586
      %2619 = vst.msk [vmem:[#allocation4 + $0x50] sm:$0xff] %vm372, %v2587
      %2620 = vst.msk [vmem:[#allocation4 + $0x58] sm:$0xff] %vm372, %v2588
      %2621 = vst.msk [vmem:[#allocation4 + $0x60] sm:$0xff] %vm372, %v2589
      %2622 = vst.msk [vmem:[#allocation4 + $0x68] sm:$0xff] %vm372, %v2590
      %2623 = vst.msk [vmem:[#allocation4 + $0x70] sm:$0xff] %vm372, %v2591
      %2624 = vst.msk [vmem:[#allocation4 + $0x78] sm:$0xff] %vm372, %v2592
      %2625 = vst.msk [vmem:[#allocation4 + $0x80] sm:$0xff] %vm372, %v2593
      %2626 = vst.msk [vmem:[#allocation4 + $0x88] sm:$0xff] %vm372, %v2594
      %2627 = vst.msk [vmem:[#allocation4 + $0x90] sm:$0xff] %vm372, %v2595
      %2628 = vst.msk [vmem:[#allocation4 + $0x98] sm:$0xff] %vm372, %v2596
      %2629 = vst.msk [vmem:[#allocation4 + $0xa0] sm:$0xff] %vm372, %v2597
      %2630 = vst.msk [vmem:[#allocation4 + $0xa8] sm:$0xff] %vm372, %v2598
      %2631 = vst.msk [vmem:[#allocation4 + $0xb0] sm:$0xff] %vm372, %v2599
      %2632 = vst.msk [vmem:[#allocation4 + $0xb8] sm:$0xff] %vm372, %v2600
      %2633 = vst.msk [vmem:[#allocation4 + $0xc0] sm:$0xff] %vm372, %v2601
      %2634 = vst.msk [vmem:[#allocation4 + $0xc8] sm:$0xff] %vm372, %v2602
      %2635 = vst.msk [vmem:[#allocation4 + $0xd0] sm:$0xff] %vm372, %v2603
      %2636 = vst.msk [vmem:[#allocation4 + $0xd8] sm:$0xff] %vm372, %v2604
      %2637 = vst.msk [vmem:[#allocation4 + $0xe0] sm:$0xff] %vm372, %v2605
      %2638 = vst.msk [vmem:[#allocation4 + $0xe8] sm:$0xff] %vm372, %v2606
      %2639 = vst.msk [vmem:[#allocation4 + $0xf0] sm:$0xff] %vm372, %v2607
      %2640 = vst.msk [vmem:[#allocation4 + $0xf8] sm:$0xff] %vm372, %v2608
      %v2641 = vld [vmem:[#allocation3 + $0x1] sm:$0xff]
      %v2642 = vld [vmem:[#allocation3 + $0x9] sm:$0xff]
      %v2643 = vld [vmem:[#allocation3 + $0x19] sm:$0xff]
      %v2644 = vld [vmem:[#allocation3 + $0x21] sm:$0xff]
      %v2645 = vld [vmem:[#allocation3 + $0x31] sm:$0xff]
      %v2646 = vld [vmem:[#allocation3 + $0x39] sm:$0xff]
      %v2647 = vld [vmem:[#allocation3 + $0x49] sm:$0xff]
      %v2648 = vld [vmem:[#allocation3 + $0x51] sm:$0xff]
      %v2649 = vld [vmem:[#allocation3 + $0x61] sm:$0xff]
      %v2650 = vld [vmem:[#allocation3 + $0x69] sm:$0xff]
      %v2651 = vld [vmem:[#allocation3 + $0x79] sm:$0xff]
      %v2652 = vld [vmem:[#allocation3 + $0x81] sm:$0xff]
      %v2653 = vld [vmem:[#allocation3 + $0x91] sm:$0xff]
      %v2654 = vld [vmem:[#allocation3 + $0x99] sm:$0xff]
      %v2655 = vld [vmem:[#allocation3 + $0xa9] sm:$0xff]
      %v2656 = vld [vmem:[#allocation3 + $0xb1] sm:$0xff]
      %v2657 = vld [vmem:[#allocation3 + $0xc1] sm:$0xff]
      %v2658 = vld [vmem:[#allocation3 + $0xc9] sm:$0xff]
      %v2659 = vld [vmem:[#allocation3 + $0xd9] sm:$0xff]
      %v2660 = vld [vmem:[#allocation3 + $0xe1] sm:$0xff]
      %v2661 = vld [vmem:[#allocation3 + $0xf1] sm:$0xff]
      %v2662 = vld [vmem:[#allocation3 + $0xf9] sm:$0xff]
      %v2663 = vld [vmem:[#allocation3 + $0x109] sm:$0xff]
      %v2664 = vld [vmem:[#allocation3 + $0x111] sm:$0xff]
      %v2665 = vld [vmem:[#allocation3 + $0x121] sm:$0xff]
      %v2666 = vld [vmem:[#allocation3 + $0x129] sm:$0xff]
      %v2667 = vld [vmem:[#allocation3 + $0x139] sm:$0xff]
      %v2668 = vld [vmem:[#allocation3 + $0x141] sm:$0xff]
      %v2669 = vld [vmem:[#allocation3 + $0x151] sm:$0xff]
      %v2670 = vld [vmem:[#allocation3 + $0x159] sm:$0xff]
      %v2671 = vld [vmem:[#allocation3 + $0x169] sm:$0xff]
      %v2672 = vld [vmem:[#allocation3 + $0x171] sm:$0xff]
      %2705 = vrot.lane.b32.xlu0 %v2641, 4
      %v2706 = vpop.permute.xlu0 %2705
      %2707 = vrot.lane.b32.xlu0 %v2642, 4
      %v2708 = vpop.permute.xlu0 %2707
      %2709 = vrot.lane.b32.xlu0 %v2643, 4
      %v2710 = vpop.permute.xlu0 %2709
      %2711 = vrot.lane.b32.xlu0 %v2644, 4
      %v2712 = vpop.permute.xlu0 %2711
      %2713 = vrot.lane.b32.xlu0 %v2645, 4
      %v2714 = vpop.permute.xlu0 %2713
      %2715 = vrot.lane.b32.xlu0 %v2646, 4
      %v2716 = vpop.permute.xlu0 %2715
      %2717 = vrot.lane.b32.xlu0 %v2647, 4
      %v2718 = vpop.permute.xlu0 %2717
      %2719 = vrot.lane.b32.xlu0 %v2648, 4
      %v2720 = vpop.permute.xlu0 %2719
      %2721 = vrot.lane.b32.xlu0 %v2649, 4
      %v2722 = vpop.permute.xlu0 %2721
      %2723 = vrot.lane.b32.xlu0 %v2650, 4
      %v2724 = vpop.permute.xlu0 %2723
      %2725 = vrot.lane.b32.xlu0 %v2651, 4
      %v2726 = vpop.permute.xlu0 %2725
      %2727 = vrot.lane.b32.xlu0 %v2652, 4
      %v2728 = vpop.permute.xlu0 %2727
      %2729 = vrot.lane.b32.xlu0 %v2653, 4
      %v2730 = vpop.permute.xlu0 %2729
      %2731 = vrot.lane.b32.xlu0 %v2654, 4
      %v2732 = vpop.permute.xlu0 %2731
      %2733 = vrot.lane.b32.xlu0 %v2655, 4
      %v2734 = vpop.permute.xlu0 %2733
      %2735 = vrot.lane.b32.xlu0 %v2656, 4
      %v2736 = vpop.permute.xlu0 %2735
      %2737 = vrot.lane.b32.xlu0 %v2657, 4
      %v2738 = vpop.permute.xlu0 %2737
      %2739 = vrot.lane.b32.xlu0 %v2658, 4
      %v2740 = vpop.permute.xlu0 %2739
      %2741 = vrot.lane.b32.xlu0 %v2659, 4
      %v2742 = vpop.permute.xlu0 %2741
      %2743 = vrot.lane.b32.xlu0 %v2660, 4
      %v2744 = vpop.permute.xlu0 %2743
      %2745 = vrot.lane.b32.xlu0 %v2661, 4
      %v2746 = vpop.permute.xlu0 %2745
      %2747 = vrot.lane.b32.xlu0 %v2662, 4
      %v2748 = vpop.permute.xlu0 %2747
      %2749 = vrot.lane.b32.xlu0 %v2663, 4
      %v2750 = vpop.permute.xlu0 %2749
      %2751 = vrot.lane.b32.xlu0 %v2664, 4
      %v2752 = vpop.permute.xlu0 %2751
      %2753 = vrot.lane.b32.xlu0 %v2665, 4
      %v2754 = vpop.permute.xlu0 %2753
      %2755 = vrot.lane.b32.xlu0 %v2666, 4
      %v2756 = vpop.permute.xlu0 %2755
      %2757 = vrot.lane.b32.xlu0 %v2667, 4
      %v2758 = vpop.permute.xlu0 %2757
      %2759 = vrot.lane.b32.xlu0 %v2668, 4
      %v2760 = vpop.permute.xlu0 %2759
      %2761 = vrot.lane.b32.xlu0 %v2669, 4
      %v2762 = vpop.permute.xlu0 %2761
      %2763 = vrot.lane.b32.xlu0 %v2670, 4
      %v2764 = vpop.permute.xlu0 %2763
      %2765 = vrot.lane.b32.xlu0 %v2671, 4
      %v2766 = vpop.permute.xlu0 %2765
      %2767 = vrot.lane.b32.xlu0 %v2672, 4
      %v2768 = vpop.permute.xlu0 %2767
      %2801 = vst.msk [vmem:[#allocation4] sm:$0xff] %vm629, %v2706
      %2802 = vst.msk [vmem:[#allocation4 + $0x8] sm:$0xff] %vm629, %v2708
      %2803 = vst.msk [vmem:[#allocation4 + $0x10] sm:$0xff] %vm629, %v2710
      %2804 = vst.msk [vmem:[#allocation4 + $0x18] sm:$0xff] %vm629, %v2712
      %2805 = vst.msk [vmem:[#allocation4 + $0x20] sm:$0xff] %vm629, %v2714
      %2806 = vst.msk [vmem:[#allocation4 + $0x28] sm:$0xff] %vm629, %v2716
      %2807 = vst.msk [vmem:[#allocation4 + $0x30] sm:$0xff] %vm629, %v2718
      %2808 = vst.msk [vmem:[#allocation4 + $0x38] sm:$0xff] %vm629, %v2720
      %2809 = vst.msk [vmem:[#allocation4 + $0x40] sm:$0xff] %vm629, %v2722
      %2810 = vst.msk [vmem:[#allocation4 + $0x48] sm:$0xff] %vm629, %v2724
      %2811 = vst.msk [vmem:[#allocation4 + $0x50] sm:$0xff] %vm629, %v2726
      %2812 = vst.msk [vmem:[#allocation4 + $0x58] sm:$0xff] %vm629, %v2728
      %2813 = vst.msk [vmem:[#allocation4 + $0x60] sm:$0xff] %vm629, %v2730
      %2814 = vst.msk [vmem:[#allocation4 + $0x68] sm:$0xff] %vm629, %v2732
      %2815 = vst.msk [vmem:[#allocation4 + $0x70] sm:$0xff] %vm629, %v2734
      %2816 = vst.msk [vmem:[#allocation4 + $0x78] sm:$0xff] %vm629, %v2736
      %2817 = vst.msk [vmem:[#allocation4 + $0x80] sm:$0xff] %vm629, %v2738
      %2818 = vst.msk [vmem:[#allocation4 + $0x88] sm:$0xff] %vm629, %v2740
      %2819 = vst.msk [vmem:[#allocation4 + $0x90] sm:$0xff] %vm629, %v2742
      %2820 = vst.msk [vmem:[#allocation4 + $0x98] sm:$0xff] %vm629, %v2744
      %2821 = vst.msk [vmem:[#allocation4 + $0xa0] sm:$0xff] %vm629, %v2746
      %2822 = vst.msk [vmem:[#allocation4 + $0xa8] sm:$0xff] %vm629, %v2748
      %2823 = vst.msk [vmem:[#allocation4 + $0xb0] sm:$0xff] %vm629, %v2750
      %2824 = vst.msk [vmem:[#allocation4 + $0xb8] sm:$0xff] %vm629, %v2752
      %2825 = vst.msk [vmem:[#allocation4 + $0xc0] sm:$0xff] %vm629, %v2754
      %2826 = vst.msk [vmem:[#allocation4 + $0xc8] sm:$0xff] %vm629, %v2756
      %2827 = vst.msk [vmem:[#allocation4 + $0xd0] sm:$0xff] %vm629, %v2758
      %2828 = vst.msk [vmem:[#allocation4 + $0xd8] sm:$0xff] %vm629, %v2760
      %2829 = vst.msk [vmem:[#allocation4 + $0xe0] sm:$0xff] %vm629, %v2762
      %2830 = vst.msk [vmem:[#allocation4 + $0xe8] sm:$0xff] %vm629, %v2764
      %2831 = vst.msk [vmem:[#allocation4 + $0xf0] sm:$0xff] %vm629, %v2766
      %2832 = vst.msk [vmem:[#allocation4 + $0xf8] sm:$0xff] %vm629, %v2768
      %v2833 = vld [vmem:[#allocation3 + $0x2] sm:$0xff]
      %v2834 = vld [vmem:[#allocation3 + $0xa] sm:$0xff]
      %v2835 = vld [vmem:[#allocation3 + $0x1a] sm:$0xff]
      %v2836 = vld [vmem:[#allocation3 + $0x22] sm:$0xff]
      %v2837 = vld [vmem:[#allocation3 + $0x32] sm:$0xff]
      %v2838 = vld [vmem:[#allocation3 + $0x3a] sm:$0xff]
      %v2839 = vld [vmem:[#allocation3 + $0x4a] sm:$0xff]
      %v2840 = vld [vmem:[#allocation3 + $0x52] sm:$0xff]
      %v2841 = vld [vmem:[#allocation3 + $0x62] sm:$0xff]
      %v2842 = vld [vmem:[#allocation3 + $0x6a] sm:$0xff]
      %v2843 = vld [vmem:[#allocation3 + $0x7a] sm:$0xff]
      %v2844 = vld [vmem:[#allocation3 + $0x82] sm:$0xff]
      %v2845 = vld [vmem:[#allocation3 + $0x92] sm:$0xff]
      %v2846 = vld [vmem:[#allocation3 + $0x9a] sm:$0xff]
      %v2847 = vld [vmem:[#allocation3 + $0xaa] sm:$0xff]
      %v2848 = vld [vmem:[#allocation3 + $0xb2] sm:$0xff]
      %v2849 = vld [vmem:[#allocation3 + $0xc2] sm:$0xff]
      %v2850 = vld [vmem:[#allocation3 + $0xca] sm:$0xff]
      %v2851 = vld [vmem:[#allocation3 + $0xda] sm:$0xff]
      %v2852 = vld [vmem:[#allocation3 + $0xe2] sm:$0xff]
      %v2853 = vld [vmem:[#allocation3 + $0xf2] sm:$0xff]
      %v2854 = vld [vmem:[#allocation3 + $0xfa] sm:$0xff]
      %v2855 = vld [vmem:[#allocation3 + $0x10a] sm:$0xff]
      %v2856 = vld [vmem:[#allocation3 + $0x112] sm:$0xff]
      %v2857 = vld [vmem:[#allocation3 + $0x122] sm:$0xff]
      %v2858 = vld [vmem:[#allocation3 + $0x12a] sm:$0xff]
      %v2859 = vld [vmem:[#allocation3 + $0x13a] sm:$0xff]
      %v2860 = vld [vmem:[#allocation3 + $0x142] sm:$0xff]
      %v2861 = vld [vmem:[#allocation3 + $0x152] sm:$0xff]
      %v2862 = vld [vmem:[#allocation3 + $0x15a] sm:$0xff]
      %v2863 = vld [vmem:[#allocation3 + $0x16a] sm:$0xff]
      %v2864 = vld [vmem:[#allocation3 + $0x172] sm:$0xff]
      %2897 = vrot.lane.b32.xlu0 %v2833, 8
      %v2898 = vpop.permute.xlu0 %2897
      %2899 = vrot.lane.b32.xlu0 %v2834, 8
      %v2900 = vpop.permute.xlu0 %2899
      %2901 = vrot.lane.b32.xlu0 %v2835, 8
      %v2902 = vpop.permute.xlu0 %2901
      %2903 = vrot.lane.b32.xlu0 %v2836, 8
      %v2904 = vpop.permute.xlu0 %2903
      %2905 = vrot.lane.b32.xlu0 %v2837, 8
      %v2906 = vpop.permute.xlu0 %2905
      %2907 = vrot.lane.b32.xlu0 %v2838, 8
      %v2908 = vpop.permute.xlu0 %2907
      %2909 = vrot.lane.b32.xlu0 %v2839, 8
      %v2910 = vpop.permute.xlu0 %2909
      %2911 = vrot.lane.b32.xlu0 %v2840, 8
      %v2912 = vpop.permute.xlu0 %2911
      %2913 = vrot.lane.b32.xlu0 %v2841, 8
      %v2914 = vpop.permute.xlu0 %2913
      %2915 = vrot.lane.b32.xlu0 %v2842, 8
      %v2916 = vpop.permute.xlu0 %2915
      %2917 = vrot.lane.b32.xlu0 %v2843, 8
      %v2918 = vpop.permute.xlu0 %2917
      %2919 = vrot.lane.b32.xlu0 %v2844, 8
      %v2920 = vpop.permute.xlu0 %2919
      %2921 = vrot.lane.b32.xlu0 %v2845, 8
      %v2922 = vpop.permute.xlu0 %2921
      %2923 = vrot.lane.b32.xlu0 %v2846, 8
      %v2924 = vpop.permute.xlu0 %2923
      %2925 = vrot.lane.b32.xlu0 %v2847, 8
      %v2926 = vpop.permute.xlu0 %2925
      %2927 = vrot.lane.b32.xlu0 %v2848, 8
      %v2928 = vpop.permute.xlu0 %2927
      %2929 = vrot.lane.b32.xlu0 %v2849, 8
      %v2930 = vpop.permute.xlu0 %2929
      %2931 = vrot.lane.b32.xlu0 %v2850, 8
      %v2932 = vpop.permute.xlu0 %2931
      %2933 = vrot.lane.b32.xlu0 %v2851, 8
      %v2934 = vpop.permute.xlu0 %2933
      %2935 = vrot.lane.b32.xlu0 %v2852, 8
      %v2936 = vpop.permute.xlu0 %2935
      %2937 = vrot.lane.b32.xlu0 %v2853, 8
      %v2938 = vpop.permute.xlu0 %2937
      %2939 = vrot.lane.b32.xlu0 %v2854, 8
      %v2940 = vpop.permute.xlu0 %2939
      %2941 = vrot.lane.b32.xlu0 %v2855, 8
      %v2942 = vpop.permute.xlu0 %2941
      %2943 = vrot.lane.b32.xlu0 %v2856, 8
      %v2944 = vpop.permute.xlu0 %2943
      %2945 = vrot.lane.b32.xlu0 %v2857, 8
      %v2946 = vpop.permute.xlu0 %2945
      %2947 = vrot.lane.b32.xlu0 %v2858, 8
      %v2948 = vpop.permute.xlu0 %2947
      %2949 = vrot.lane.b32.xlu0 %v2859, 8
      %v2950 = vpop.permute.xlu0 %2949
      %2951 = vrot.lane.b32.xlu0 %v2860, 8
      %v2952 = vpop.permute.xlu0 %2951
      %2953 = vrot.lane.b32.xlu0 %v2861, 8
      %v2954 = vpop.permute.xlu0 %2953
      %2955 = vrot.lane.b32.xlu0 %v2862, 8
      %v2956 = vpop.permute.xlu0 %2955
      %2957 = vrot.lane.b32.xlu0 %v2863, 8
      %v2958 = vpop.permute.xlu0 %2957
      %2959 = vrot.lane.b32.xlu0 %v2864, 8
      %v2960 = vpop.permute.xlu0 %2959
      %2993 = vst.msk [vmem:[#allocation4] sm:$0xff] %vm822, %v2898
      %2994 = vst.msk [vmem:[#allocation4 + $0x8] sm:$0xff] %vm822, %v2900
      %2995 = vst.msk [vmem:[#allocation4 + $0x10] sm:$0xff] %vm822, %v2902
      %2996 = vst.msk [vmem:[#allocation4 + $0x18] sm:$0xff] %vm822, %v2904
      %2997 = vst.msk [vmem:[#allocation4 + $0x20] sm:$0xff] %vm822, %v2906
      %2998 = vst.msk [vmem:[#allocation4 + $0x28] sm:$0xff] %vm822, %v2908
      %2999 = vst.msk [vmem:[#allocation4 + $0x30] sm:$0xff] %vm822, %v2910
      %3000 = vst.msk [vmem:[#allocation4 + $0x38] sm:$0xff] %vm822, %v2912
      %3001 = vst.msk [vmem:[#allocation4 + $0x40] sm:$0xff] %vm822, %v2914
      %3002 = vst.msk [vmem:[#allocation4 + $0x48] sm:$0xff] %vm822, %v2916
      %3003 = vst.msk [vmem:[#allocation4 + $0x50] sm:$0xff] %vm822, %v2918
      %3004 = vst.msk [vmem:[#allocation4 + $0x58] sm:$0xff] %vm822, %v2920
      %3005 = vst.msk [vmem:[#allocation4 + $0x60] sm:$0xff] %vm822, %v2922
      %3006 = vst.msk [vmem:[#allocation4 + $0x68] sm:$0xff] %vm822, %v2924
      %3007 = vst.msk [vmem:[#allocation4 + $0x70] sm:$0xff] %vm822, %v2926
      %3008 = vst.msk [vmem:[#allocation4 + $0x78] sm:$0xff] %vm822, %v2928
      %3009 = vst.msk [vmem:[#allocation4 + $0x80] sm:$0xff] %vm822, %v2930
      %3010 = vst.msk [vmem:[#allocation4 + $0x88] sm:$0xff] %vm822, %v2932
      %3011 = vst.msk [vmem:[#allocation4 + $0x90] sm:$0xff] %vm822, %v2934
      %3012 = vst.msk [vmem:[#allocation4 + $0x98] sm:$0xff] %vm822, %v2936
      %3013 = vst.msk [vmem:[#allocation4 + $0xa0] sm:$0xff] %vm822, %v2938
      %3014 = vst.msk [vmem:[#allocation4 + $0xa8] sm:$0xff] %vm822, %v2940
      %3015 = vst.msk [vmem:[#allocation4 + $0xb0] sm:$0xff] %vm822, %v2942
      %3016 = vst.msk [vmem:[#allocation4 + $0xb8] sm:$0xff] %vm822, %v2944
      %3017 = vst.msk [vmem:[#allocation4 + $0xc0] sm:$0xff] %vm822, %v2946
      %3018 = vst.msk [vmem:[#allocation4 + $0xc8] sm:$0xff] %vm822, %v2948
      %3019 = vst.msk [vmem:[#allocation4 + $0xd0] sm:$0xff] %vm822, %v2950
      %3020 = vst.msk [vmem:[#allocation4 + $0xd8] sm:$0xff] %vm822, %v2952
      %3021 = vst.msk [vmem:[#allocation4 + $0xe0] sm:$0xff] %vm822, %v2954
      %3022 = vst.msk [vmem:[#allocation4 + $0xe8] sm:$0xff] %vm822, %v2956
      %3023 = vst.msk [vmem:[#allocation4 + $0xf0] sm:$0xff] %vm822, %v2958
      %3024 = vst.msk [vmem:[#allocation4 + $0xf8] sm:$0xff] %vm822, %v2960
      %v3025 = vld [vmem:[%s2544] sm:$0xff]
      %v3026 = vld [vmem:[%s2544 + $0x8] sm:$0xff]
      %v3027 = vld [vmem:[%s2544 + $0x18] sm:$0xff]
      %v3028 = vld [vmem:[%s2544 + $0x20] sm:$0xff]
      %v3029 = vld [vmem:[%s2544 + $0x30] sm:$0xff]
      %v3030 = vld [vmem:[%s2544 + $0x38] sm:$0xff]
      %v3031 = vld [vmem:[%s2544 + $0x48] sm:$0xff]
      %v3032 = vld [vmem:[%s2544 + $0x50] sm:$0xff]
      %v3033 = vld [vmem:[%s2544 + $0x60] sm:$0xff]
      %v3034 = vld [vmem:[%s2544 + $0x68] sm:$0xff]
      %v3035 = vld [vmem:[%s2544 + $0x78] sm:$0xff]
      %v3036 = vld [vmem:[%s2544 + $0x80] sm:$0xff]
      %v3037 = vld [vmem:[%s2544 + $0x90] sm:$0xff]
      %v3038 = vld [vmem:[%s2544 + $0x98] sm:$0xff]
      %v3039 = vld [vmem:[%s2544 + $0xa8] sm:$0xff]
      %v3040 = vld [vmem:[%s2544 + $0xb0] sm:$0xff]
      %v3041 = vld [vmem:[%s2544 + $0xc0] sm:$0xff]
      %v3042 = vld [vmem:[%s2544 + $0xc8] sm:$0xff]
      %v3043 = vld [vmem:[%s2544 + $0xd8] sm:$0xff]
      %v3044 = vld [vmem:[%s2544 + $0xe0] sm:$0xff]
      %v3045 = vld [vmem:[%s2544 + $0xf0] sm:$0xff]
      %v3046 = vld [vmem:[%s2544 + $0xf8] sm:$0xff]
      %v3047 = vld [vmem:[%s2544 + $0x108] sm:$0xff]
      %v3048 = vld [vmem:[%s2544 + $0x110] sm:$0xff]
      %v3049 = vld [vmem:[%s2544 + $0x120] sm:$0xff]
      %v3050 = vld [vmem:[%s2544 + $0x128] sm:$0xff]
      %v3051 = vld [vmem:[%s2544 + $0x138] sm:$0xff]
      %v3052 = vld [vmem:[%s2544 + $0x140] sm:$0xff]
      %v3053 = vld [vmem:[%s2544 + $0x150] sm:$0xff]
      %v3054 = vld [vmem:[%s2544 + $0x158] sm:$0xff]
      %v3055 = vld [vmem:[%s2544 + $0x168] sm:$0xff]
      %v3056 = vld [vmem:[%s2544 + $0x170] sm:$0xff]
      %3089 = vrot.lane.b32.xlu0 %v3025, 12
      %v3090 = vpop.permute.xlu0 %3089
      %3091 = vrot.lane.b32.xlu0 %v3026, 12
      %v3092 = vpop.permute.xlu0 %3091
      %3093 = vrot.lane.b32.xlu0 %v3027, 12
      %v3094 = vpop.permute.xlu0 %3093
      %3095 = vrot.lane.b32.xlu0 %v3028, 12
      %v3096 = vpop.permute.xlu0 %3095
      %3097 = vrot.lane.b32.xlu0 %v3029, 12
      %v3098 = vpop.permute.xlu0 %3097
      %3099 = vrot.lane.b32.xlu0 %v3030, 12
      %v3100 = vpop.permute.xlu0 %3099
      %3101 = vrot.lane.b32.xlu0 %v3031, 12
      %v3102 = vpop.permute.xlu0 %3101
      %3103 = vrot.lane.b32.xlu0 %v3032, 12
      %v3104 = vpop.permute.xlu0 %3103
      %3105 = vrot.lane.b32.xlu0 %v3033, 12
      %v3106 = vpop.permute.xlu0 %3105
      %3107 = vrot.lane.b32.xlu0 %v3034, 12
      %v3108 = vpop.permute.xlu0 %3107
      %3109 = vrot.lane.b32.xlu0 %v3035, 12
      %v3110 = vpop.permute.xlu0 %3109
      %3111 = vrot.lane.b32.xlu0 %v3036, 12
      %v3112 = vpop.permute.xlu0 %3111
      %3113 = vrot.lane.b32.xlu0 %v3037, 12
      %v3114 = vpop.permute.xlu0 %3113
      %3115 = vrot.lane.b32.xlu0 %v3038, 12
      %v3116 = vpop.permute.xlu0 %3115
      %3117 = vrot.lane.b32.xlu0 %v3039, 12
      %v3118 = vpop.permute.xlu0 %3117
      %3119 = vrot.lane.b32.xlu0 %v3040, 12
      %v3120 = vpop.permute.xlu0 %3119
      %3121 = vrot.lane.b32.xlu0 %v3041, 12
      %v3122 = vpop.permute.xlu0 %3121
      %3123 = vrot.lane.b32.xlu0 %v3042, 12
      %v3124 = vpop.permute.xlu0 %3123
      %3125 = vrot.lane.b32.xlu0 %v3043, 12
      %v3126 = vpop.permute.xlu0 %3125
      %3127 = vrot.lane.b32.xlu0 %v3044, 12
      %v3128 = vpop.permute.xlu0 %3127
      %3129 = vrot.lane.b32.xlu0 %v3045, 12
      %v3130 = vpop.permute.xlu0 %3129
      %3131 = vrot.lane.b32.xlu0 %v3046, 12
      %v3132 = vpop.permute.xlu0 %3131
      %3133 = vrot.lane.b32.xlu0 %v3047, 12
      %v3134 = vpop.permute.xlu0 %3133
      %3135 = vrot.lane.b32.xlu0 %v3048, 12
      %v3136 = vpop.permute.xlu0 %3135
      %3137 = vrot.lane.b32.xlu0 %v3049, 12
      %v3138 = vpop.permute.xlu0 %3137
      %3139 = vrot.lane.b32.xlu0 %v3050, 12
      %v3140 = vpop.permute.xlu0 %3139
      %3141 = vrot.lane.b32.xlu0 %v3051, 12
      %v3142 = vpop.permute.xlu0 %3141
      %3143 = vrot.lane.b32.xlu0 %v3052, 12
      %v3144 = vpop.permute.xlu0 %3143
      %3145 = vrot.lane.b32.xlu0 %v3053, 12
      %v3146 = vpop.permute.xlu0 %3145
      %3147 = vrot.lane.b32.xlu0 %v3054, 12
      %v3148 = vpop.permute.xlu0 %3147
      %3149 = vrot.lane.b32.xlu0 %v3055, 12
      %v3150 = vpop.permute.xlu0 %3149
      %3151 = vrot.lane.b32.xlu0 %v3056, 12
      %v3152 = vpop.permute.xlu0 %3151
      %3185 = vst.msk [vmem:[#allocation4] sm:$0xff] %vm1015, %v3090
      %3186 = vst.msk [vmem:[#allocation4 + $0x8] sm:$0xff] %vm1015, %v3092
      %3187 = vst.msk [vmem:[#allocation4 + $0x10] sm:$0xff] %vm1015, %v3094
      %3188 = vst.msk [vmem:[#allocation4 + $0x18] sm:$0xff] %vm1015, %v3096
      %3189 = vst.msk [vmem:[#allocation4 + $0x20] sm:$0xff] %vm1015, %v3098
      %3190 = vst.msk [vmem:[#allocation4 + $0x28] sm:$0xff] %vm1015, %v3100
      %3191 = vst.msk [vmem:[#allocation4 + $0x30] sm:$0xff] %vm1015, %v3102
      %3192 = vst.msk [vmem:[#allocation4 + $0x38] sm:$0xff] %vm1015, %v3104
      %3193 = vst.msk [vmem:[#allocation4 + $0x40] sm:$0xff] %vm1015, %v3106
      %3194 = vst.msk [vmem:[#allocation4 + $0x48] sm:$0xff] %vm1015, %v3108
      %3195 = vst.msk [vmem:[#allocation4 + $0x50] sm:$0xff] %vm1015, %v3110
      %3196 = vst.msk [vmem:[#allocation4 + $0x58] sm:$0xff] %vm1015, %v3112
      %3197 = vst.msk [vmem:[#allocation4 + $0x60] sm:$0xff] %vm1015, %v3114
      %3198 = vst.msk [vmem:[#allocation4 + $0x68] sm:$0xff] %vm1015, %v3116
      %3199 = vst.msk [vmem:[#allocation4 + $0x70] sm:$0xff] %vm1015, %v3118
      %3200 = vst.msk [vmem:[#allocation4 + $0x78] sm:$0xff] %vm1015, %v3120
      %3201 = vst.msk [vmem:[#allocation4 + $0x80] sm:$0xff] %vm1015, %v3122
      %3202 = vst.msk [vmem:[#allocation4 + $0x88] sm:$0xff] %vm1015, %v3124
      %3203 = vst.msk [vmem:[#allocation4 + $0x90] sm:$0xff] %vm1015, %v3126
      %3204 = vst.msk [vmem:[#allocation4 + $0x98] sm:$0xff] %vm1015, %v3128
      %3205 = vst.msk [vmem:[#allocation4 + $0xa0] sm:$0xff] %vm1015, %v3130
      %3206 = vst.msk [vmem:[#allocation4 + $0xa8] sm:$0xff] %vm1015, %v3132
      %3207 = vst.msk [vmem:[#allocation4 + $0xb0] sm:$0xff] %vm1015, %v3134
      %3208 = vst.msk [vmem:[#allocation4 + $0xb8] sm:$0xff] %vm1015, %v3136
      %3209 = vst.msk [vmem:[#allocation4 + $0xc0] sm:$0xff] %vm1015, %v3138
      %3210 = vst.msk [vmem:[#allocation4 + $0xc8] sm:$0xff] %vm1015, %v3140
      %3211 = vst.msk [vmem:[#allocation4 + $0xd0] sm:$0xff] %vm1015, %v3142
      %3212 = vst.msk [vmem:[#allocation4 + $0xd8] sm:$0xff] %vm1015, %v3144
      %3213 = vst.msk [vmem:[#allocation4 + $0xe0] sm:$0xff] %vm1015, %v3146
      %3214 = vst.msk [vmem:[#allocation4 + $0xe8] sm:$0xff] %vm1015, %v3148
      %3215 = vst.msk [vmem:[#allocation4 + $0xf0] sm:$0xff] %vm1015, %v3150
      %3216 = vst.msk [vmem:[#allocation4 + $0xf8] sm:$0xff] %vm1015, %v3152
      %v3217 = vld [vmem:[%s2544 + $0x1] sm:$0xff]
      %v3218 = vld [vmem:[%s2544 + $0x9] sm:$0xff]
      %v3219 = vld [vmem:[%s2544 + $0x19] sm:$0xff]
      %v3220 = vld [vmem:[%s2544 + $0x21] sm:$0xff]
      %v3221 = vld [vmem:[%s2544 + $0x31] sm:$0xff]
      %v3222 = vld [vmem:[%s2544 + $0x39] sm:$0xff]
      %v3223 = vld [vmem:[%s2544 + $0x49] sm:$0xff]
      %v3224 = vld [vmem:[%s2544 + $0x51] sm:$0xff]
      %v3225 = vld [vmem:[%s2544 + $0x61] sm:$0xff]
      %v3226 = vld [vmem:[%s2544 + $0x69] sm:$0xff]
      %v3227 = vld [vmem:[%s2544 + $0x79] sm:$0xff]
      %v3228 = vld [vmem:[%s2544 + $0x81] sm:$0xff]
      %v3229 = vld [vmem:[%s2544 + $0x91] sm:$0xff]
      %v3230 = vld [vmem:[%s2544 + $0x99] sm:$0xff]
      %v3231 = vld [vmem:[%s2544 + $0xa9] sm:$0xff]
      %v3232 = vld [vmem:[%s2544 + $0xb1] sm:$0xff]
      %v3233 = vld [vmem:[%s2544 + $0xc1] sm:$0xff]
      %v3234 = vld [vmem:[%s2544 + $0xc9] sm:$0xff]
      %v3235 = vld [vmem:[%s2544 + $0xd9] sm:$0xff]
      %v3236 = vld [vmem:[%s2544 + $0xe1] sm:$0xff]
      %v3237 = vld [vmem:[%s2544 + $0xf1] sm:$0xff]
      %v3238 = vld [vmem:[%s2544 + $0xf9] sm:$0xff]
      %v3239 = vld [vmem:[%s2544 + $0x109] sm:$0xff]
      %v3240 = vld [vmem:[%s2544 + $0x111] sm:$0xff]
      %v3241 = vld [vmem:[%s2544 + $0x121] sm:$0xff]
      %v3242 = vld [vmem:[%s2544 + $0x129] sm:$0xff]
      %v3243 = vld [vmem:[%s2544 + $0x139] sm:$0xff]
      %v3244 = vld [vmem:[%s2544 + $0x141] sm:$0xff]
      %v3245 = vld [vmem:[%s2544 + $0x151] sm:$0xff]
      %v3246 = vld [vmem:[%s2544 + $0x159] sm:$0xff]
      %v3247 = vld [vmem:[%s2544 + $0x169] sm:$0xff]
      %v3248 = vld [vmem:[%s2544 + $0x171] sm:$0xff]
      %3281 = vrot.lane.b32.xlu0 %v3217, 16
      %v3282 = vpop.permute.xlu0 %3281
      %3283 = vrot.lane.b32.xlu0 %v3218, 16
      %v3284 = vpop.permute.xlu0 %3283
      %3285 = vrot.lane.b32.xlu0 %v3219, 16
      %v3286 = vpop.permute.xlu0 %3285
      %3287 = vrot.lane.b32.xlu0 %v3220, 16
      %v3288 = vpop.permute.xlu0 %3287
      %3289 = vrot.lane.b32.xlu0 %v3221, 16
      %v3290 = vpop.permute.xlu0 %3289
      %3291 = vrot.lane.b32.xlu0 %v3222, 16
      %v3292 = vpop.permute.xlu0 %3291
      %3293 = vrot.lane.b32.xlu0 %v3223, 16
      %v3294 = vpop.permute.xlu0 %3293
      %3295 = vrot.lane.b32.xlu0 %v3224, 16
      %v3296 = vpop.permute.xlu0 %3295
      %3297 = vrot.lane.b32.xlu0 %v3225, 16
      %v3298 = vpop.permute.xlu0 %3297
      %3299 = vrot.lane.b32.xlu0 %v3226, 16
      %v3300 = vpop.permute.xlu0 %3299
      %3301 = vrot.lane.b32.xlu0 %v3227, 16
      %v3302 = vpop.permute.xlu0 %3301
      %3303 = vrot.lane.b32.xlu0 %v3228, 16
      %v3304 = vpop.permute.xlu0 %3303
      %3305 = vrot.lane.b32.xlu0 %v3229, 16
      %v3306 = vpop.permute.xlu0 %3305
      %3307 = vrot.lane.b32.xlu0 %v3230, 16
      %v3308 = vpop.permute.xlu0 %3307
      %3309 = vrot.lane.b32.xlu0 %v3231, 16
      %v3310 = vpop.permute.xlu0 %3309
      %3311 = vrot.lane.b32.xlu0 %v3232, 16
      %v3312 = vpop.permute.xlu0 %3311
      %3313 = vrot.lane.b32.xlu0 %v3233, 16
      %v3314 = vpop.permute.xlu0 %3313
      %3315 = vrot.lane.b32.xlu0 %v3234, 16
      %v3316 = vpop.permute.xlu0 %3315
      %3317 = vrot.lane.b32.xlu0 %v3235, 16
      %v3318 = vpop.permute.xlu0 %3317
      %3319 = vrot.lane.b32.xlu0 %v3236, 16
      %v3320 = vpop.permute.xlu0 %3319
      %3321 = vrot.lane.b32.xlu0 %v3237, 16
      %v3322 = vpop.permute.xlu0 %3321
      %3323 = vrot.lane.b32.xlu0 %v3238, 16
      %v3324 = vpop.permute.xlu0 %3323
      %3325 = vrot.lane.b32.xlu0 %v3239, 16
      %v3326 = vpop.permute.xlu0 %3325
      %3327 = vrot.lane.b32.xlu0 %v3240, 16
      %v3328 = vpop.permute.xlu0 %3327
      %3329 = vrot.lane.b32.xlu0 %v3241, 16
      %v3330 = vpop.permute.xlu0 %3329
      %3331 = vrot.lane.b32.xlu0 %v3242, 16
      %v3332 = vpop.permute.xlu0 %3331
      %3333 = vrot.lane.b32.xlu0 %v3243, 16
      %v3334 = vpop.permute.xlu0 %3333
      %3335 = vrot.lane.b32.xlu0 %v3244, 16
      %v3336 = vpop.permute.xlu0 %3335
      %3337 = vrot.lane.b32.xlu0 %v3245, 16
      %v3338 = vpop.permute.xlu0 %3337
      %3339 = vrot.lane.b32.xlu0 %v3246, 16
      %v3340 = vpop.permute.xlu0 %3339
      %3341 = vrot.lane.b32.xlu0 %v3247, 16
      %v3342 = vpop.permute.xlu0 %3341
      %3343 = vrot.lane.b32.xlu0 %v3248, 16
      %v3344 = vpop.permute.xlu0 %3343
      %3377 = vst.msk [vmem:[#allocation4] sm:$0xff] %vm1208, %v3282
      %3378 = vst.msk [vmem:[#allocation4 + $0x8] sm:$0xff] %vm1208, %v3284
      %3379 = vst.msk [vmem:[#allocation4 + $0x10] sm:$0xff] %vm1208, %v3286
      %3380 = vst.msk [vmem:[#allocation4 + $0x18] sm:$0xff] %vm1208, %v3288
      %3381 = vst.msk [vmem:[#allocation4 + $0x20] sm:$0xff] %vm1208, %v3290
      %3382 = vst.msk [vmem:[#allocation4 + $0x28] sm:$0xff] %vm1208, %v3292
      %3383 = vst.msk [vmem:[#allocation4 + $0x30] sm:$0xff] %vm1208, %v3294
      %3384 = vst.msk [vmem:[#allocation4 + $0x38] sm:$0xff] %vm1208, %v3296
      %3385 = vst.msk [vmem:[#allocation4 + $0x40] sm:$0xff] %vm1208, %v3298
      %3386 = vst.msk [vmem:[#allocation4 + $0x48] sm:$0xff] %vm1208, %v3300
      %3387 = vst.msk [vmem:[#allocation4 + $0x50] sm:$0xff] %vm1208, %v3302
      %3388 = vst.msk [vmem:[#allocation4 + $0x58] sm:$0xff] %vm1208, %v3304
      %3389 = vst.msk [vmem:[#allocation4 + $0x60] sm:$0xff] %vm1208, %v3306
      %3390 = vst.msk [vmem:[#allocation4 + $0x68] sm:$0xff] %vm1208, %v3308
      %3391 = vst.msk [vmem:[#allocation4 + $0x70] sm:$0xff] %vm1208, %v3310
      %3392 = vst.msk [vmem:[#allocation4 + $0x78] sm:$0xff] %vm1208, %v3312
      %3393 = vst.msk [vmem:[#allocation4 + $0x80] sm:$0xff] %vm1208, %v3314
      %3394 = vst.msk [vmem:[#allocation4 + $0x88] sm:$0xff] %vm1208, %v3316
      %3395 = vst.msk [vmem:[#allocation4 + $0x90] sm:$0xff] %vm1208, %v3318
      %3396 = vst.msk [vmem:[#allocation4 + $0x98] sm:$0xff] %vm1208, %v3320
      %3397 = vst.msk [vmem:[#allocation4 + $0xa0] sm:$0xff] %vm1208, %v3322
      %3398 = vst.msk [vmem:[#allocation4 + $0xa8] sm:$0xff] %vm1208, %v3324
      %3399 = vst.msk [vmem:[#allocation4 + $0xb0] sm:$0xff] %vm1208, %v3326
      %3400 = vst.msk [vmem:[#allocation4 + $0xb8] sm:$0xff] %vm1208, %v3328
      %3401 = vst.msk [vmem:[#allocation4 + $0xc0] sm:$0xff] %vm1208, %v3330
      %3402 = vst.msk [vmem:[#allocation4 + $0xc8] sm:$0xff] %vm1208, %v3332
      %3403 = vst.msk [vmem:[#allocation4 + $0xd0] sm:$0xff] %vm1208, %v3334
      %3404 = vst.msk [vmem:[#allocation4 + $0xd8] sm:$0xff] %vm1208, %v3336
      %3405 = vst.msk [vmem:[#allocation4 + $0xe0] sm:$0xff] %vm1208, %v3338
      %3406 = vst.msk [vmem:[#allocation4 + $0xe8] sm:$0xff] %vm1208, %v3340
      %3407 = vst.msk [vmem:[#allocation4 + $0xf0] sm:$0xff] %vm1208, %v3342
      %3408 = vst.msk [vmem:[#allocation4 + $0xf8] sm:$0xff] %vm1208, %v3344
      %v3409 = vld [vmem:[%s2544 + $0x2] sm:$0xff]
      %v3410 = vld [vmem:[%s2544 + $0xa] sm:$0xff]
      %v3411 = vld [vmem:[%s2544 + $0x1a] sm:$0xff]
      %v3412 = vld [vmem:[%s2544 + $0x22] sm:$0xff]
      %v3413 = vld [vmem:[%s2544 + $0x32] sm:$0xff]
      %v3414 = vld [vmem:[%s2544 + $0x3a] sm:$0xff]
      %v3415 = vld [vmem:[%s2544 + $0x4a] sm:$0xff]
      %v3416 = vld [vmem:[%s2544 + $0x52] sm:$0xff]
      %v3417 = vld [vmem:[%s2544 + $0x62] sm:$0xff]
      %v3418 = vld [vmem:[%s2544 + $0x6a] sm:$0xff]
      %v3419 = vld [vmem:[%s2544 + $0x7a] sm:$0xff]
      %v3420 = vld [vmem:[%s2544 + $0x82] sm:$0xff]
      %v3421 = vld [vmem:[%s2544 + $0x92] sm:$0xff]
      %v3422 = vld [vmem:[%s2544 + $0x9a] sm:$0xff]
      %v3423 = vld [vmem:[%s2544 + $0xaa] sm:$0xff]
      %v3424 = vld [vmem:[%s2544 + $0xb2] sm:$0xff]
      %v3425 = vld [vmem:[%s2544 + $0xc2] sm:$0xff]
      %v3426 = vld [vmem:[%s2544 + $0xca] sm:$0xff]
      %v3427 = vld [vmem:[%s2544 + $0xda] sm:$0xff]
      %v3428 = vld [vmem:[%s2544 + $0xe2] sm:$0xff]
      %v3429 = vld [vmem:[%s2544 + $0xf2] sm:$0xff]
      %v3430 = vld [vmem:[%s2544 + $0xfa] sm:$0xff]
      %v3431 = vld [vmem:[%s2544 + $0x10a] sm:$0xff]
      %v3432 = vld [vmem:[%s2544 + $0x112] sm:$0xff]
      %v3433 = vld [vmem:[%s2544 + $0x122] sm:$0xff]
      %v3434 = vld [vmem:[%s2544 + $0x12a] sm:$0xff]
      %v3435 = vld [vmem:[%s2544 + $0x13a] sm:$0xff]
      %v3436 = vld [vmem:[%s2544 + $0x142] sm:$0xff]
      %v3437 = vld [vmem:[%s2544 + $0x152] sm:$0xff]
      %v3438 = vld [vmem:[%s2544 + $0x15a] sm:$0xff]
      %v3439 = vld [vmem:[%s2544 + $0x16a] sm:$0xff]
      %v3440 = vld [vmem:[%s2544 + $0x172] sm:$0xff]
      %3473 = vrot.lane.b32.xlu0 %v3409, 20
      %v3474 = vpop.permute.xlu0 %3473
      %3475 = vrot.lane.b32.xlu0 %v3410, 20
      %v3476 = vpop.permute.xlu0 %3475
      %3477 = vrot.lane.b32.xlu0 %v3411, 20
      %v3478 = vpop.permute.xlu0 %3477
      %3479 = vrot.lane.b32.xlu0 %v3412, 20
      %v3480 = vpop.permute.xlu0 %3479
      %3481 = vrot.lane.b32.xlu0 %v3413, 20
      %v3482 = vpop.permute.xlu0 %3481
      %3483 = vrot.lane.b32.xlu0 %v3414, 20
      %v3484 = vpop.permute.xlu0 %3483
      %3485 = vrot.lane.b32.xlu0 %v3415, 20
      %v3486 = vpop.permute.xlu0 %3485
      %3487 = vrot.lane.b32.xlu0 %v3416, 20
      %v3488 = vpop.permute.xlu0 %3487
      %3489 = vrot.lane.b32.xlu0 %v3417, 20
      %v3490 = vpop.permute.xlu0 %3489
      %3491 = vrot.lane.b32.xlu0 %v3418, 20
      %v3492 = vpop.permute.xlu0 %3491
      %3493 = vrot.lane.b32.xlu0 %v3419, 20
      %v3494 = vpop.permute.xlu0 %3493
      %3495 = vrot.lane.b32.xlu0 %v3420, 20
      %v3496 = vpop.permute.xlu0 %3495
      %3497 = vrot.lane.b32.xlu0 %v3421, 20
      %v3498 = vpop.permute.xlu0 %3497
      %3499 = vrot.lane.b32.xlu0 %v3422, 20
      %v3500 = vpop.permute.xlu0 %3499
      %3501 = vrot.lane.b32.xlu0 %v3423, 20
      %v3502 = vpop.permute.xlu0 %3501
      %3503 = vrot.lane.b32.xlu0 %v3424, 20
      %v3504 = vpop.permute.xlu0 %3503
      %3505 = vrot.lane.b32.xlu0 %v3425, 20
      %v3506 = vpop.permute.xlu0 %3505
      %3507 = vrot.lane.b32.xlu0 %v3426, 20
      %v3508 = vpop.permute.xlu0 %3507
      %3509 = vrot.lane.b32.xlu0 %v3427, 20
      %v3510 = vpop.permute.xlu0 %3509
      %3511 = vrot.lane.b32.xlu0 %v3428, 20
      %v3512 = vpop.permute.xlu0 %3511
      %3513 = vrot.lane.b32.xlu0 %v3429, 20
      %v3514 = vpop.permute.xlu0 %3513
      %3515 = vrot.lane.b32.xlu0 %v3430, 20
      %v3516 = vpop.permute.xlu0 %3515
      %3517 = vrot.lane.b32.xlu0 %v3431, 20
      %v3518 = vpop.permute.xlu0 %3517
      %3519 = vrot.lane.b32.xlu0 %v3432, 20
      %v3520 = vpop.permute.xlu0 %3519
      %3521 = vrot.lane.b32.xlu0 %v3433, 20
      %v3522 = vpop.permute.xlu0 %3521
      %3523 = vrot.lane.b32.xlu0 %v3434, 20
      %v3524 = vpop.permute.xlu0 %3523
      %3525 = vrot.lane.b32.xlu0 %v3435, 20
      %v3526 = vpop.permute.xlu0 %3525
      %3527 = vrot.lane.b32.xlu0 %v3436, 20
      %v3528 = vpop.permute.xlu0 %3527
      %3529 = vrot.lane.b32.xlu0 %v3437, 20
      %v3530 = vpop.permute.xlu0 %3529
      %3531 = vrot.lane.b32.xlu0 %v3438, 20
      %v3532 = vpop.permute.xlu0 %3531
      %3533 = vrot.lane.b32.xlu0 %v3439, 20
      %v3534 = vpop.permute.xlu0 %3533
      %3535 = vrot.lane.b32.xlu0 %v3440, 20
      %v3536 = vpop.permute.xlu0 %3535
      %3569 = vst.msk [vmem:[#allocation4] sm:$0xff] %vm1401, %v3474
      %3570 = vst.msk [vmem:[#allocation4 + $0x8] sm:$0xff] %vm1401, %v3476
      %3571 = vst.msk [vmem:[#allocation4 + $0x10] sm:$0xff] %vm1401, %v3478
      %3572 = vst.msk [vmem:[#allocation4 + $0x18] sm:$0xff] %vm1401, %v3480
      %3573 = vst.msk [vmem:[#allocation4 + $0x20] sm:$0xff] %vm1401, %v3482
      %3574 = vst.msk [vmem:[#allocation4 + $0x28] sm:$0xff] %vm1401, %v3484
      %3575 = vst.msk [vmem:[#allocation4 + $0x30] sm:$0xff] %vm1401, %v3486
      %3576 = vst.msk [vmem:[#allocation4 + $0x38] sm:$0xff] %vm1401, %v3488
      %3577 = vst.msk [vmem:[#allocation4 + $0x40] sm:$0xff] %vm1401, %v3490
      %3578 = vst.msk [vmem:[#allocation4 + $0x48] sm:$0xff] %vm1401, %v3492
      %3579 = vst.msk [vmem:[#allocation4 + $0x50] sm:$0xff] %vm1401, %v3494
      %3580 = vst.msk [vmem:[#allocation4 + $0x58] sm:$0xff] %vm1401, %v3496
      %3581 = vst.msk [vmem:[#allocation4 + $0x60] sm:$0xff] %vm1401, %v3498
      %3582 = vst.msk [vmem:[#allocation4 + $0x68] sm:$0xff] %vm1401, %v3500
      %3583 = vst.msk [vmem:[#allocation4 + $0x70] sm:$0xff] %vm1401, %v3502
      %3584 = vst.msk [vmem:[#allocation4 + $0x78] sm:$0xff] %vm1401, %v3504
      %3585 = vst.msk [vmem:[#allocation4 + $0x80] sm:$0xff] %vm1401, %v3506
      %3586 = vst.msk [vmem:[#allocation4 + $0x88] sm:$0xff] %vm1401, %v3508
      %3587 = vst.msk [vmem:[#allocation4 + $0x90] sm:$0xff] %vm1401, %v3510
      %3588 = vst.msk [vmem:[#allocation4 + $0x98] sm:$0xff] %vm1401, %v3512
      %3589 = vst.msk [vmem:[#allocation4 + $0xa0] sm:$0xff] %vm1401, %v3514
      %3590 = vst.msk [vmem:[#allocation4 + $0xa8] sm:$0xff] %vm1401, %v3516
      %3591 = vst.msk [vmem:[#allocation4 + $0xb0] sm:$0xff] %vm1401, %v3518
      %3592 = vst.msk [vmem:[#allocation4 + $0xb8] sm:$0xff] %vm1401, %v3520
      %3593 = vst.msk [vmem:[#allocation4 + $0xc0] sm:$0xff] %vm1401, %v3522
      %3594 = vst.msk [vmem:[#allocation4 + $0xc8] sm:$0xff] %vm1401, %v3524
      %3595 = vst.msk [vmem:[#allocation4 + $0xd0] sm:$0xff] %vm1401, %v3526
      %3596 = vst.msk [vmem:[#allocation4 + $0xd8] sm:$0xff] %vm1401, %v3528
      %3597 = vst.msk [vmem:[#allocation4 + $0xe0] sm:$0xff] %vm1401, %v3530
      %3598 = vst.msk [vmem:[#allocation4 + $0xe8] sm:$0xff] %vm1401, %v3532
      %3599 = vst.msk [vmem:[#allocation4 + $0xf0] sm:$0xff] %vm1401, %v3534
      %3600 = vst.msk [vmem:[#allocation4 + $0xf8] sm:$0xff] %vm1401, %v3536
      %s3601 = scalar_lea.vmem [#allocation3], 48
      %v3602 = vld [vmem:[%s3601] sm:$0xff]
      %v3603 = vld [vmem:[%s3601 + $0x8] sm:$0xff]
      %v3604 = vld [vmem:[%s3601 + $0x18] sm:$0xff]
      %v3605 = vld [vmem:[%s3601 + $0x20] sm:$0xff]
      %v3606 = vld [vmem:[%s3601 + $0x30] sm:$0xff]
      %v3607 = vld [vmem:[%s3601 + $0x38] sm:$0xff]
      %v3608 = vld [vmem:[%s3601 + $0x48] sm:$0xff]
      %v3609 = vld [vmem:[%s3601 + $0x50] sm:$0xff]
      %v3610 = vld [vmem:[%s3601 + $0x60] sm:$0xff]
      %v3611 = vld [vmem:[%s3601 + $0x68] sm:$0xff]
      %v3612 = vld [vmem:[%s3601 + $0x78] sm:$0xff]
      %v3613 = vld [vmem:[%s3601 + $0x80] sm:$0xff]
      %v3614 = vld [vmem:[%s3601 + $0x90] sm:$0xff]
      %v3615 = vld [vmem:[%s3601 + $0x98] sm:$0xff]
      %v3616 = vld [vmem:[%s3601 + $0xa8] sm:$0xff]
      %v3617 = vld [vmem:[%s3601 + $0xb0] sm:$0xff]
      %v3618 = vld [vmem:[%s3601 + $0xc0] sm:$0xff]
      %v3619 = vld [vmem:[%s3601 + $0xc8] sm:$0xff]
      %v3620 = vld [vmem:[%s3601 + $0xd8] sm:$0xff]
      %v3621 = vld [vmem:[%s3601 + $0xe0] sm:$0xff]
      %v3622 = vld [vmem:[%s3601 + $0xf0] sm:$0xff]
      %v3623 = vld [vmem:[%s3601 + $0xf8] sm:$0xff]
      %v3624 = vld [vmem:[%s3601 + $0x108] sm:$0xff]
      %v3625 = vld [vmem:[%s3601 + $0x110] sm:$0xff]
      %v3626 = vld [vmem:[%s3601 + $0x120] sm:$0xff]
      %v3627 = vld [vmem:[%s3601 + $0x128] sm:$0xff]
      %v3628 = vld [vmem:[%s3601 + $0x138] sm:$0xff]
      %v3629 = vld [vmem:[%s3601 + $0x140] sm:$0xff]
      %v3630 = vld [vmem:[%s3601 + $0x150] sm:$0xff]
      %v3631 = vld [vmem:[%s3601 + $0x158] sm:$0xff]
      %v3632 = vld [vmem:[%s3601 + $0x168] sm:$0xff]
      %v3633 = vld [vmem:[%s3601 + $0x170] sm:$0xff]
      %3666 = vrot.lane.b32.xlu0 %v3602, 24
      %v3667 = vpop.permute.xlu0 %3666
      %3668 = vrot.lane.b32.xlu0 %v3603, 24
      %v3669 = vpop.permute.xlu0 %3668
      %3670 = vrot.lane.b32.xlu0 %v3604, 24
      %v3671 = vpop.permute.xlu0 %3670
      %3672 = vrot.lane.b32.xlu0 %v3605, 24
      %v3673 = vpop.permute.xlu0 %3672
      %3674 = vrot.lane.b32.xlu0 %v3606, 24
      %v3675 = vpop.permute.xlu0 %3674
      %3676 = vrot.lane.b32.xlu0 %v3607, 24
      %v3677 = vpop.permute.xlu0 %3676
      %3678 = vrot.lane.b32.xlu0 %v3608, 24
      %v3679 = vpop.permute.xlu0 %3678
      %3680 = vrot.lane.b32.xlu0 %v3609, 24
      %v3681 = vpop.permute.xlu0 %3680
      %3682 = vrot.lane.b32.xlu0 %v3610, 24
      %v3683 = vpop.permute.xlu0 %3682
      %3684 = vrot.lane.b32.xlu0 %v3611, 24
      %v3685 = vpop.permute.xlu0 %3684
      %3686 = vrot.lane.b32.xlu0 %v3612, 24
      %v3687 = vpop.permute.xlu0 %3686
      %3688 = vrot.lane.b32.xlu0 %v3613, 24
      %v3689 = vpop.permute.xlu0 %3688
      %3690 = vrot.lane.b32.xlu0 %v3614, 24
      %v3691 = vpop.permute.xlu0 %3690
      %3692 = vrot.lane.b32.xlu0 %v3615, 24
      %v3693 = vpop.permute.xlu0 %3692
      %3694 = vrot.lane.b32.xlu0 %v3616, 24
      %v3695 = vpop.permute.xlu0 %3694
      %3696 = vrot.lane.b32.xlu0 %v3617, 24
      %v3697 = vpop.permute.xlu0 %3696
      %3698 = vrot.lane.b32.xlu0 %v3618, 24
      %v3699 = vpop.permute.xlu0 %3698
      %3700 = vrot.lane.b32.xlu0 %v3619, 24
      %v3701 = vpop.permute.xlu0 %3700
      %3702 = vrot.lane.b32.xlu0 %v3620, 24
      %v3703 = vpop.permute.xlu0 %3702
      %3704 = vrot.lane.b32.xlu0 %v3621, 24
      %v3705 = vpop.permute.xlu0 %3704
      %3706 = vrot.lane.b32.xlu0 %v3622, 24
      %v3707 = vpop.permute.xlu0 %3706
      %3708 = vrot.lane.b32.xlu0 %v3623, 24
      %v3709 = vpop.permute.xlu0 %3708
      %3710 = vrot.lane.b32.xlu0 %v3624, 24
      %v3711 = vpop.permute.xlu0 %3710
      %3712 = vrot.lane.b32.xlu0 %v3625, 24
      %v3713 = vpop.permute.xlu0 %3712
      %3714 = vrot.lane.b32.xlu0 %v3626, 24
      %v3715 = vpop.permute.xlu0 %3714
      %3716 = vrot.lane.b32.xlu0 %v3627, 24
      %v3717 = vpop.permute.xlu0 %3716
      %3718 = vrot.lane.b32.xlu0 %v3628, 24
      %v3719 = vpop.permute.xlu0 %3718
      %3720 = vrot.lane.b32.xlu0 %v3629, 24
      %v3721 = vpop.permute.xlu0 %3720
      %3722 = vrot.lane.b32.xlu0 %v3630, 24
      %v3723 = vpop.permute.xlu0 %3722
      %3724 = vrot.lane.b32.xlu0 %v3631, 24
      %v3725 = vpop.permute.xlu0 %3724
      %3726 = vrot.lane.b32.xlu0 %v3632, 24
      %v3727 = vpop.permute.xlu0 %3726
      %3728 = vrot.lane.b32.xlu0 %v3633, 24
      %v3729 = vpop.permute.xlu0 %3728
      %3762 = vst.msk [vmem:[#allocation4] sm:$0xff] %vm1595, %v3667
      %3763 = vst.msk [vmem:[#allocation4 + $0x8] sm:$0xff] %vm1595, %v3669
      %3764 = vst.msk [vmem:[#allocation4 + $0x10] sm:$0xff] %vm1595, %v3671
      %3765 = vst.msk [vmem:[#allocation4 + $0x18] sm:$0xff] %vm1595, %v3673
      %3766 = vst.msk [vmem:[#allocation4 + $0x20] sm:$0xff] %vm1595, %v3675
      %3767 = vst.msk [vmem:[#allocation4 + $0x28] sm:$0xff] %vm1595, %v3677
      %3768 = vst.msk [vmem:[#allocation4 + $0x30] sm:$0xff] %vm1595, %v3679
      %3769 = vst.msk [vmem:[#allocation4 + $0x38] sm:$0xff] %vm1595, %v3681
      %3770 = vst.msk [vmem:[#allocation4 + $0x40] sm:$0xff] %vm1595, %v3683
      %3771 = vst.msk [vmem:[#allocation4 + $0x48] sm:$0xff] %vm1595, %v3685
      %3772 = vst.msk [vmem:[#allocation4 + $0x50] sm:$0xff] %vm1595, %v3687
      %3773 = vst.msk [vmem:[#allocation4 + $0x58] sm:$0xff] %vm1595, %v3689
      %3774 = vst.msk [vmem:[#allocation4 + $0x60] sm:$0xff] %vm1595, %v3691
      %3775 = vst.msk [vmem:[#allocation4 + $0x68] sm:$0xff] %vm1595, %v3693
      %3776 = vst.msk [vmem:[#allocation4 + $0x70] sm:$0xff] %vm1595, %v3695
      %3777 = vst.msk [vmem:[#allocation4 + $0x78] sm:$0xff] %vm1595, %v3697
      %3778 = vst.msk [vmem:[#allocation4 + $0x80] sm:$0xff] %vm1595, %v3699
      %3779 = vst.msk [vmem:[#allocation4 + $0x88] sm:$0xff] %vm1595, %v3701
      %3780 = vst.msk [vmem:[#allocation4 + $0x90] sm:$0xff] %vm1595, %v3703
      %3781 = vst.msk [vmem:[#allocation4 + $0x98] sm:$0xff] %vm1595, %v3705
      %3782 = vst.msk [vmem:[#allocation4 + $0xa0] sm:$0xff] %vm1595, %v3707
      %3783 = vst.msk [vmem:[#allocation4 + $0xa8] sm:$0xff] %vm1595, %v3709
      %3784 = vst.msk [vmem:[#allocation4 + $0xb0] sm:$0xff] %vm1595, %v3711
      %3785 = vst.msk [vmem:[#allocation4 + $0xb8] sm:$0xff] %vm1595, %v3713
      %3786 = vst.msk [vmem:[#allocation4 + $0xc0] sm:$0xff] %vm1595, %v3715
      %3787 = vst.msk [vmem:[#allocation4 + $0xc8] sm:$0xff] %vm1595, %v3717
      %3788 = vst.msk [vmem:[#allocation4 + $0xd0] sm:$0xff] %vm1595, %v3719
      %3789 = vst.msk [vmem:[#allocation4 + $0xd8] sm:$0xff] %vm1595, %v3721
      %3790 = vst.msk [vmem:[#allocation4 + $0xe0] sm:$0xff] %vm1595, %v3723
      %3791 = vst.msk [vmem:[#allocation4 + $0xe8] sm:$0xff] %vm1595, %v3725
      %3792 = vst.msk [vmem:[#allocation4 + $0xf0] sm:$0xff] %vm1595, %v3727
      %3793 = vst.msk [vmem:[#allocation4 + $0xf8] sm:$0xff] %vm1595, %v3729
      %v3794 = vld [vmem:[%s3601 + $0x1] sm:$0xff]
      %v3795 = vld [vmem:[%s3601 + $0x9] sm:$0xff]
      %v3796 = vld [vmem:[%s3601 + $0x19] sm:$0xff]
      %v3797 = vld [vmem:[%s3601 + $0x21] sm:$0xff]
      %v3798 = vld [vmem:[%s3601 + $0x31] sm:$0xff]
      %v3799 = vld [vmem:[%s3601 + $0x39] sm:$0xff]
      %v3800 = vld [vmem:[%s3601 + $0x49] sm:$0xff]
      %v3801 = vld [vmem:[%s3601 + $0x51] sm:$0xff]
      %v3802 = vld [vmem:[%s3601 + $0x61] sm:$0xff]
      %v3803 = vld [vmem:[%s3601 + $0x69] sm:$0xff]
      %v3804 = vld [vmem:[%s3601 + $0x79] sm:$0xff]
      %v3805 = vld [vmem:[%s3601 + $0x81] sm:$0xff]
      %v3806 = vld [vmem:[%s3601 + $0x91] sm:$0xff]
      %v3807 = vld [vmem:[%s3601 + $0x99] sm:$0xff]
      %v3808 = vld [vmem:[%s3601 + $0xa9] sm:$0xff]
      %v3809 = vld [vmem:[%s3601 + $0xb1] sm:$0xff]
      %v3810 = vld [vmem:[%s3601 + $0xc1] sm:$0xff]
      %v3811 = vld [vmem:[%s3601 + $0xc9] sm:$0xff]
      %v3812 = vld [vmem:[%s3601 + $0xd9] sm:$0xff]
      %v3813 = vld [vmem:[%s3601 + $0xe1] sm:$0xff]
      %v3814 = vld [vmem:[%s3601 + $0xf1] sm:$0xff]
      %v3815 = vld [vmem:[%s3601 + $0xf9] sm:$0xff]
      %v3816 = vld [vmem:[%s3601 + $0x109] sm:$0xff]
      %v3817 = vld [vmem:[%s3601 + $0x111] sm:$0xff]
      %v3818 = vld [vmem:[%s3601 + $0x121] sm:$0xff]
      %v3819 = vld [vmem:[%s3601 + $0x129] sm:$0xff]
      %v3820 = vld [vmem:[%s3601 + $0x139] sm:$0xff]
      %v3821 = vld [vmem:[%s3601 + $0x141] sm:$0xff]
      %v3822 = vld [vmem:[%s3601 + $0x151] sm:$0xff]
      %v3823 = vld [vmem:[%s3601 + $0x159] sm:$0xff]
      %v3824 = vld [vmem:[%s3601 + $0x169] sm:$0xff]
      %v3825 = vld [vmem:[%s3601 + $0x171] sm:$0xff]
      %3858 = vrot.lane.b32.xlu0 %v3794, 28
      %v3859 = vpop.permute.xlu0 %3858
      %3860 = vrot.lane.b32.xlu0 %v3795, 28
      %v3861 = vpop.permute.xlu0 %3860
      %3862 = vrot.lane.b32.xlu0 %v3796, 28
      %v3863 = vpop.permute.xlu0 %3862
      %3864 = vrot.lane.b32.xlu0 %v3797, 28
      %v3865 = vpop.permute.xlu0 %3864
      %3866 = vrot.lane.b32.xlu0 %v3798, 28
      %v3867 = vpop.permute.xlu0 %3866
      %3868 = vrot.lane.b32.xlu0 %v3799, 28
      %v3869 = vpop.permute.xlu0 %3868
      %3870 = vrot.lane.b32.xlu0 %v3800, 28
      %v3871 = vpop.permute.xlu0 %3870
      %3872 = vrot.lane.b32.xlu0 %v3801, 28
      %v3873 = vpop.permute.xlu0 %3872
      %3874 = vrot.lane.b32.xlu0 %v3802, 28
      %v3875 = vpop.permute.xlu0 %3874
      %3876 = vrot.lane.b32.xlu0 %v3803, 28
      %v3877 = vpop.permute.xlu0 %3876
      %3878 = vrot.lane.b32.xlu0 %v3804, 28
      %v3879 = vpop.permute.xlu0 %3878
      %3880 = vrot.lane.b32.xlu0 %v3805, 28
      %v3881 = vpop.permute.xlu0 %3880
      %3882 = vrot.lane.b32.xlu0 %v3806, 28
      %v3883 = vpop.permute.xlu0 %3882
      %3884 = vrot.lane.b32.xlu0 %v3807, 28
      %v3885 = vpop.permute.xlu0 %3884
      %3886 = vrot.lane.b32.xlu0 %v3808, 28
      %v3887 = vpop.permute.xlu0 %3886
      %3888 = vrot.lane.b32.xlu0 %v3809, 28
      %v3889 = vpop.permute.xlu0 %3888
      %3890 = vrot.lane.b32.xlu0 %v3810, 28
      %v3891 = vpop.permute.xlu0 %3890
      %3892 = vrot.lane.b32.xlu0 %v3811, 28
      %v3893 = vpop.permute.xlu0 %3892
      %3894 = vrot.lane.b32.xlu0 %v3812, 28
      %v3895 = vpop.permute.xlu0 %3894
      %3896 = vrot.lane.b32.xlu0 %v3813, 28
      %v3897 = vpop.permute.xlu0 %3896
      %3898 = vrot.lane.b32.xlu0 %v3814, 28
      %v3899 = vpop.permute.xlu0 %3898
      %3900 = vrot.lane.b32.xlu0 %v3815, 28
      %v3901 = vpop.permute.xlu0 %3900
      %3902 = vrot.lane.b32.xlu0 %v3816, 28
      %v3903 = vpop.permute.xlu0 %3902
      %3904 = vrot.lane.b32.xlu0 %v3817, 28
      %v3905 = vpop.permute.xlu0 %3904
      %3906 = vrot.lane.b32.xlu0 %v3818, 28
      %v3907 = vpop.permute.xlu0 %3906
      %3908 = vrot.lane.b32.xlu0 %v3819, 28
      %v3909 = vpop.permute.xlu0 %3908
      %3910 = vrot.lane.b32.xlu0 %v3820, 28
      %v3911 = vpop.permute.xlu0 %3910
      %3912 = vrot.lane.b32.xlu0 %v3821, 28
      %v3913 = vpop.permute.xlu0 %3912
      %3914 = vrot.lane.b32.xlu0 %v3822, 28
      %v3915 = vpop.permute.xlu0 %3914
      %3916 = vrot.lane.b32.xlu0 %v3823, 28
      %v3917 = vpop.permute.xlu0 %3916
      %3918 = vrot.lane.b32.xlu0 %v3824, 28
      %v3919 = vpop.permute.xlu0 %3918
      %3920 = vrot.lane.b32.xlu0 %v3825, 28
      %v3921 = vpop.permute.xlu0 %3920
      %3954 = vst.msk [vmem:[#allocation4] sm:$0xff] %vm1788, %v3859
      %3955 = vst.msk [vmem:[#allocation4 + $0x8] sm:$0xff] %vm1788, %v3861
      %3956 = vst.msk [vmem:[#allocation4 + $0x10] sm:$0xff] %vm1788, %v3863
      %3957 = vst.msk [vmem:[#allocation4 + $0x18] sm:$0xff] %vm1788, %v3865
      %3958 = vst.msk [vmem:[#allocation4 + $0x20] sm:$0xff] %vm1788, %v3867
      %3959 = vst.msk [vmem:[#allocation4 + $0x28] sm:$0xff] %vm1788, %v3869
      %3960 = vst.msk [vmem:[#allocation4 + $0x30] sm:$0xff] %vm1788, %v3871
      %3961 = vst.msk [vmem:[#allocation4 + $0x38] sm:$0xff] %vm1788, %v3873
      %3962 = vst.msk [vmem:[#allocation4 + $0x40] sm:$0xff] %vm1788, %v3875
      %3963 = vst.msk [vmem:[#allocation4 + $0x48] sm:$0xff] %vm1788, %v3877
      %3964 = vst.msk [vmem:[#allocation4 + $0x50] sm:$0xff] %vm1788, %v3879
      %3965 = vst.msk [vmem:[#allocation4 + $0x58] sm:$0xff] %vm1788, %v3881
      %3966 = vst.msk [vmem:[#allocation4 + $0x60] sm:$0xff] %vm1788, %v3883
      %3967 = vst.msk [vmem:[#allocation4 + $0x68] sm:$0xff] %vm1788, %v3885
      %3968 = vst.msk [vmem:[#allocation4 + $0x70] sm:$0xff] %vm1788, %v3887
      %3969 = vst.msk [vmem:[#allocation4 + $0x78] sm:$0xff] %vm1788, %v3889
      %3970 = vst.msk [vmem:[#allocation4 + $0x80] sm:$0xff] %vm1788, %v3891
      %3971 = vst.msk [vmem:[#allocation4 + $0x88] sm:$0xff] %vm1788, %v3893
      %3972 = vst.msk [vmem:[#allocation4 + $0x90] sm:$0xff] %vm1788, %v3895
      %3973 = vst.msk [vmem:[#allocation4 + $0x98] sm:$0xff] %vm1788, %v3897
      %3974 = vst.msk [vmem:[#allocation4 + $0xa0] sm:$0xff] %vm1788, %v3899
      %3975 = vst.msk [vmem:[#allocation4 + $0xa8] sm:$0xff] %vm1788, %v3901
      %3976 = vst.msk [vmem:[#allocation4 + $0xb0] sm:$0xff] %vm1788, %v3903
      %3977 = vst.msk [vmem:[#allocation4 + $0xb8] sm:$0xff] %vm1788, %v3905
      %3978 = vst.msk [vmem:[#allocation4 + $0xc0] sm:$0xff] %vm1788, %v3907
      %3979 = vst.msk [vmem:[#allocation4 + $0xc8] sm:$0xff] %vm1788, %v3909
      %3980 = vst.msk [vmem:[#allocation4 + $0xd0] sm:$0xff] %vm1788, %v3911
      %3981 = vst.msk [vmem:[#allocation4 + $0xd8] sm:$0xff] %vm1788, %v3913
      %3982 = vst.msk [vmem:[#allocation4 + $0xe0] sm:$0xff] %vm1788, %v3915
      %3983 = vst.msk [vmem:[#allocation4 + $0xe8] sm:$0xff] %vm1788, %v3917
      %3984 = vst.msk [vmem:[#allocation4 + $0xf0] sm:$0xff] %vm1788, %v3919
      %3985 = vst.msk [vmem:[#allocation4 + $0xf8] sm:$0xff] %vm1788, %v3921
      %v3986 = vld [vmem:[%s3601 + $0x2] sm:$0xff]
      %v3987 = vld [vmem:[%s3601 + $0xa] sm:$0xff]
      %v3988 = vld [vmem:[%s3601 + $0x1a] sm:$0xff]
      %v3989 = vld [vmem:[%s3601 + $0x22] sm:$0xff]
      %v3990 = vld [vmem:[%s3601 + $0x32] sm:$0xff]
      %v3991 = vld [vmem:[%s3601 + $0x3a] sm:$0xff]
      %v3992 = vld [vmem:[%s3601 + $0x4a] sm:$0xff]
      %v3993 = vld [vmem:[%s3601 + $0x52] sm:$0xff]
      %v3994 = vld [vmem:[%s3601 + $0x62] sm:$0xff]
      %v3995 = vld [vmem:[%s3601 + $0x6a] sm:$0xff]
      %v3996 = vld [vmem:[%s3601 + $0x7a] sm:$0xff]
      %v3997 = vld [vmem:[%s3601 + $0x82] sm:$0xff]
      %v3998 = vld [vmem:[%s3601 + $0x92] sm:$0xff]
      %v3999 = vld [vmem:[%s3601 + $0x9a] sm:$0xff]
      %v4000 = vld [vmem:[%s3601 + $0xaa] sm:$0xff]
      %v4001 = vld [vmem:[%s3601 + $0xb2] sm:$0xff]
      %v4002 = vld [vmem:[%s3601 + $0xc2] sm:$0xff]
      %v4003 = vld [vmem:[%s3601 + $0xca] sm:$0xff]
      %v4004 = vld [vmem:[%s3601 + $0xda] sm:$0xff]
      %v4005 = vld [vmem:[%s3601 + $0xe2] sm:$0xff]
      %v4006 = vld [vmem:[%s3601 + $0xf2] sm:$0xff]
      %v4007 = vld [vmem:[%s3601 + $0xfa] sm:$0xff]
      %v4008 = vld [vmem:[%s3601 + $0x10a] sm:$0xff]
      %v4009 = vld [vmem:[%s3601 + $0x112] sm:$0xff]
      %v4010 = vld [vmem:[%s3601 + $0x122] sm:$0xff]
      %v4011 = vld [vmem:[%s3601 + $0x12a] sm:$0xff]
      %v4012 = vld [vmem:[%s3601 + $0x13a] sm:$0xff]
      %v4013 = vld [vmem:[%s3601 + $0x142] sm:$0xff]
      %v4014 = vld [vmem:[%s3601 + $0x152] sm:$0xff]
      %v4015 = vld [vmem:[%s3601 + $0x15a] sm:$0xff]
      %v4016 = vld [vmem:[%s3601 + $0x16a] sm:$0xff]
      %v4017 = vld [vmem:[%s3601 + $0x172] sm:$0xff]
      %4050 = vrot.lane.b32.xlu0 %v3986, 32
      %v4051 = vpop.permute.xlu0 %4050
      %4052 = vrot.lane.b32.xlu0 %v3987, 32
      %v4053 = vpop.permute.xlu0 %4052
      %4054 = vrot.lane.b32.xlu0 %v3988, 32
      %v4055 = vpop.permute.xlu0 %4054
      %4056 = vrot.lane.b32.xlu0 %v3989, 32
      %v4057 = vpop.permute.xlu0 %4056
      %4058 = vrot.lane.b32.xlu0 %v3990, 32
      %v4059 = vpop.permute.xlu0 %4058
      %4060 = vrot.lane.b32.xlu0 %v3991, 32
      %v4061 = vpop.permute.xlu0 %4060
      %4062 = vrot.lane.b32.xlu0 %v3992, 32
      %v4063 = vpop.permute.xlu0 %4062
      %4064 = vrot.lane.b32.xlu0 %v3993, 32
      %v4065 = vpop.permute.xlu0 %4064
      %4066 = vrot.lane.b32.xlu0 %v3994, 32
      %v4067 = vpop.permute.xlu0 %4066
      %4068 = vrot.lane.b32.xlu0 %v3995, 32
      %v4069 = vpop.permute.xlu0 %4068
      %4070 = vrot.lane.b32.xlu0 %v3996, 32
      %v4071 = vpop.permute.xlu0 %4070
      %4072 = vrot.lane.b32.xlu0 %v3997, 32
      %v4073 = vpop.permute.xlu0 %4072
      %4074 = vrot.lane.b32.xlu0 %v3998, 32
      %v4075 = vpop.permute.xlu0 %4074
      %4076 = vrot.lane.b32.xlu0 %v3999, 32
      %v4077 = vpop.permute.xlu0 %4076
      %4078 = vrot.lane.b32.xlu0 %v4000, 32
      %v4079 = vpop.permute.xlu0 %4078
      %4080 = vrot.lane.b32.xlu0 %v4001, 32
      %v4081 = vpop.permute.xlu0 %4080
      %4082 = vrot.lane.b32.xlu0 %v4002, 32
      %v4083 = vpop.permute.xlu0 %4082
      %4084 = vrot.lane.b32.xlu0 %v4003, 32
      %v4085 = vpop.permute.xlu0 %4084
      %4086 = vrot.lane.b32.xlu0 %v4004, 32
      %v4087 = vpop.permute.xlu0 %4086
      %4088 = vrot.lane.b32.xlu0 %v4005, 32
      %v4089 = vpop.permute.xlu0 %4088
      %4090 = vrot.lane.b32.xlu0 %v4006, 32
      %v4091 = vpop.permute.xlu0 %4090
      %4092 = vrot.lane.b32.xlu0 %v4007, 32
      %v4093 = vpop.permute.xlu0 %4092
      %4094 = vrot.lane.b32.xlu0 %v4008, 32
      %v4095 = vpop.permute.xlu0 %4094
      %4096 = vrot.lane.b32.xlu0 %v4009, 32
      %v4097 = vpop.permute.xlu0 %4096
      %4098 = vrot.lane.b32.xlu0 %v4010, 32
      %v4099 = vpop.permute.xlu0 %4098
      %4100 = vrot.lane.b32.xlu0 %v4011, 32
      %v4101 = vpop.permute.xlu0 %4100
      %4102 = vrot.lane.b32.xlu0 %v4012, 32
      %v4103 = vpop.permute.xlu0 %4102
      %4104 = vrot.lane.b32.xlu0 %v4013, 32
      %v4105 = vpop.permute.xlu0 %4104
      %4106 = vrot.lane.b32.xlu0 %v4014, 32
      %v4107 = vpop.permute.xlu0 %4106
      %4108 = vrot.lane.b32.xlu0 %v4015, 32
      %v4109 = vpop.permute.xlu0 %4108
      %4110 = vrot.lane.b32.xlu0 %v4016, 32
      %v4111 = vpop.permute.xlu0 %4110
      %4112 = vrot.lane.b32.xlu0 %v4017, 32
      %v4113 = vpop.permute.xlu0 %4112
      %4146 = vst.msk [vmem:[#allocation4] sm:$0xff] %vm1981, %v4051
      %4147 = vst.msk [vmem:[#allocation4 + $0x8] sm:$0xff] %vm1981, %v4053
      %4148 = vst.msk [vmem:[#allocation4 + $0x10] sm:$0xff] %vm1981, %v4055
      %4149 = vst.msk [vmem:[#allocation4 + $0x18] sm:$0xff] %vm1981, %v4057
      %4150 = vst.msk [vmem:[#allocation4 + $0x20] sm:$0xff] %vm1981, %v4059
      %4151 = vst.msk [vmem:[#allocation4 + $0x28] sm:$0xff] %vm1981, %v4061
      %4152 = vst.msk [vmem:[#allocation4 + $0x30] sm:$0xff] %vm1981, %v4063
      %4153 = vst.msk [vmem:[#allocation4 + $0x38] sm:$0xff] %vm1981, %v4065
      %4154 = vst.msk [vmem:[#allocation4 + $0x40] sm:$0xff] %vm1981, %v4067
      %4155 = vst.msk [vmem:[#allocation4 + $0x48] sm:$0xff] %vm1981, %v4069
      %4156 = vst.msk [vmem:[#allocation4 + $0x50] sm:$0xff] %vm1981, %v4071
      %4157 = vst.msk [vmem:[#allocation4 + $0x58] sm:$0xff] %vm1981, %v4073
      %4158 = vst.msk [vmem:[#allocation4 + $0x60] sm:$0xff] %vm1981, %v4075
      %4159 = vst.msk [vmem:[#allocation4 + $0x68] sm:$0xff] %vm1981, %v4077
      %4160 = vst.msk [vmem:[#allocation4 + $0x70] sm:$0xff] %vm1981, %v4079
      %4161 = vst.msk [vmem:[#allocation4 + $0x78] sm:$0xff] %vm1981, %v4081
      %4162 = vst.msk [vmem:[#allocation4 + $0x80] sm:$0xff] %vm1981, %v4083
      %4163 = vst.msk [vmem:[#allocation4 + $0x88] sm:$0xff] %vm1981, %v4085
      %4164 = vst.msk [vmem:[#allocation4 + $0x90] sm:$0xff] %vm1981, %v4087
      %4165 = vst.msk [vmem:[#allocation4 + $0x98] sm:$0xff] %vm1981, %v4089
      %4166 = vst.msk [vmem:[#allocation4 + $0xa0] sm:$0xff] %vm1981, %v4091
      %4167 = vst.msk [vmem:[#allocation4 + $0xa8] sm:$0xff] %vm1981, %v4093
      %4168 = vst.msk [vmem:[#allocation4 + $0xb0] sm:$0xff] %vm1981, %v4095
      %4169 = vst.msk [vmem:[#allocation4 + $0xb8] sm:$0xff] %vm1981, %v4097
      %4170 = vst.msk [vmem:[#allocation4 + $0xc0] sm:$0xff] %vm1981, %v4099
      %4171 = vst.msk [vmem:[#allocation4 + $0xc8] sm:$0xff] %vm1981, %v4101
      %4172 = vst.msk [vmem:[#allocation4 + $0xd0] sm:$0xff] %vm1981, %v4103
      %4173 = vst.msk [vmem:[#allocation4 + $0xd8] sm:$0xff] %vm1981, %v4105
      %4174 = vst.msk [vmem:[#allocation4 + $0xe0] sm:$0xff] %vm1981, %v4107
      %4175 = vst.msk [vmem:[#allocation4 + $0xe8] sm:$0xff] %vm1981, %v4109
      %4176 = vst.msk [vmem:[#allocation4 + $0xf0] sm:$0xff] %vm1981, %v4111
      %4177 = vst.msk [vmem:[#allocation4 + $0xf8] sm:$0xff] %vm1981, %v4113
      %v4178 = vld [vmem:[#allocation4] sm:$0xff]
      %v4179 = vld [vmem:[#allocation4 + $0x8] sm:$0xff]
      %v4180 = vld [vmem:[#allocation4 + $0x10] sm:$0xff]
      %v4181 = vld [vmem:[#allocation4 + $0x18] sm:$0xff]
      %v4182 = vld [vmem:[#allocation4 + $0x20] sm:$0xff]
      %v4183 = vld [vmem:[#allocation4 + $0x28] sm:$0xff]
      %v4184 = vld [vmem:[#allocation4 + $0x30] sm:$0xff]
      %v4185 = vld [vmem:[#allocation4 + $0x38] sm:$0xff]
      %v4186 = vld [vmem:[#allocation4 + $0x40] sm:$0xff]
      %v4187 = vld [vmem:[#allocation4 + $0x48] sm:$0xff]
      %v4188 = vld [vmem:[#allocation4 + $0x50] sm:$0xff]
      %v4189 = vld [vmem:[#allocation4 + $0x58] sm:$0xff]
      %v4190 = vld [vmem:[#allocation4 + $0x60] sm:$0xff]
      %v4191 = vld [vmem:[#allocation4 + $0x68] sm:$0xff]
      %v4192 = vld [vmem:[#allocation4 + $0x70] sm:$0xff]
      %v4193 = vld [vmem:[#allocation4 + $0x78] sm:$0xff]
      %v4194 = vld [vmem:[#allocation4 + $0x80] sm:$0xff]
      %v4195 = vld [vmem:[#allocation4 + $0x88] sm:$0xff]
      %v4196 = vld [vmem:[#allocation4 + $0x90] sm:$0xff]
      %v4197 = vld [vmem:[#allocation4 + $0x98] sm:$0xff]
      %v4198 = vld [vmem:[#allocation4 + $0xa0] sm:$0xff]
      %v4199 = vld [vmem:[#allocation4 + $0xa8] sm:$0xff]
      %v4200 = vld [vmem:[#allocation4 + $0xb0] sm:$0xff]
      %v4201 = vld [vmem:[#allocation4 + $0xb8] sm:$0xff]
      %v4202 = vld [vmem:[#allocation4 + $0xc0] sm:$0xff]
      %v4203 = vld [vmem:[#allocation4 + $0xc8] sm:$0xff]
      %v4204 = vld [vmem:[#allocation4 + $0xd0] sm:$0xff]
      %v4205 = vld [vmem:[#allocation4 + $0xd8] sm:$0xff]
      %v4206 = vld [vmem:[#allocation4 + $0xe0] sm:$0xff]
      %v4207 = vld [vmem:[#allocation4 + $0xe8] sm:$0xff]
      %v4208 = vld [vmem:[#allocation4 + $0xf0] sm:$0xff]
      %v4209 = vld [vmem:[#allocation4 + $0xf8] sm:$0xff]
      %v4210 = vld [vmem:[%s3] sm:$0xff]
      %v4211 = vld [vmem:[%s3 + $0x8] sm:$0xff]
      %v4212 = vld [vmem:[%s3 + $0x10] sm:$0xff]
      %v4213 = vld [vmem:[%s3 + $0x18] sm:$0xff]
      %v4214 = vld [vmem:[%s3 + $0x20] sm:$0xf]
      %v4215 = vld [vmem:[%s4] sm:$0x1]
      %v4217 = vlaneseq
      %v4218 = vshrl.u32 %v4217, 7
      %v4219 = vsub.s32 0, %v4218
      %v4220 = vrot.slane %v4215, %v4219
      %v4223 = vsel %vm2058, %v4178, 0
      %v4226 = vsel %vm2058, %v4179, 0
      %v4229 = vsel %vm2058, %v4180, 0
      %v4232 = vsel %vm2058, %v4181, 0
      %v4235 = vsel %vm2058, %v4182, 0
      %v4238 = vsel %vm2058, %v4183, 0
      %v4241 = vsel %vm2058, %v4184, 0
      %v4244 = vsel %vm2058, %v4185, 0
      %v4247 = vsel %vm2058, %v4186, 0
      %v4250 = vsel %vm2058, %v4187, 0
      %v4253 = vsel %vm2058, %v4188, 0
      %v4256 = vsel %vm2058, %v4189, 0
      %v4259 = vsel %vm2058, %v4190, 0
      %v4262 = vsel %vm2058, %v4191, 0
      %v4265 = vsel %vm2058, %v4192, 0
      %v4268 = vsel %vm2058, %v4193, 0
      %v4271 = vsel %vm2058, %v4194, 0
      %v4274 = vsel %vm2058, %v4195, 0
      %v4277 = vsel %vm2058, %v4196, 0
      %v4280 = vsel %vm2058, %v4197, 0
      %v4283 = vsel %vm2058, %v4198, 0
      %v4286 = vsel %vm2058, %v4199, 0
      %v4289 = vsel %vm2058, %v4200, 0
      %v4292 = vsel %vm2058, %v4201, 0
      %v4295 = vsel %vm2058, %v4202, 0
      %v4298 = vsel %vm2058, %v4203, 0
      %v4301 = vsel %vm2058, %v4204, 0
      %v4304 = vsel %vm2058, %v4205, 0
      %v4307 = vsel %vm2058, %v4206, 0
      %v4310 = vsel %vm2058, %v4207, 0
      %v4313 = vsel %vm2058, %v4208, 0
      %v4316 = vsel %vm2058, %v4209, 0
      %v4319 = vsel %vm2155, %v4214, 0
      %4321 = vmatprep.subr.mxu0 0.0
      %4322 = vmatpush1.msra.mxu0 0.0
      %4323 = vmatprep.subr.mxu0 0.0
      %4324 = vmatpush1.msra.mxu0 0.0
      %4325 = vmatprep.subr.mxu0 0.0
      %4326 = vmatpush1.msra.mxu0 0.0
      %4327 = vmatprep.subr.mxu0 0.0
      %4328 = vmatpush1.msra.mxu0 0.0
      %4329 = vmatprep.subr.mxu0 0.0
      %4330 = vmatpush1.msra.mxu0 0.0
      %4331 = vmatprep.subr.mxu0 0.0
      %4332 = vmatpush1.msra.mxu0 0.0
      %4333 = vmatprep.subr.mxu0 0.0
      %4334 = vmatpush1.msra.mxu0 0.0
      %4335 = vmatprep.subr.mxu0 0.0
      %4336 = vmatpush1.msra.mxu0 0.0
      %4337 = vmatprep.subr.mxu0 0.0
      %4338 = vmatpush1.msra.mxu0 0.0
      %4339 = vmatprep.subr.mxu0 0.0
      %4340 = vmatpush1.msra.mxu0 0.0
      %4341 = vmatprep.subr.mxu0 0.0
      %4342 = vmatpush1.msra.mxu0 0.0
      %4343 = vmatprep.subr.mxu0 0.0
      %4344 = vmatpush1.msra.mxu0 %v4319
      %4345 = vmatprep.subr.mxu0 0.0
      %4346 = vmatpush1.msra.mxu0 %v4213
      %4347 = vmatprep.subr.mxu0 0.0
      %4348 = vmatpush1.msra.mxu0 %v4212
      %4349 = vmatprep.subr.mxu0 0.0
      %4350 = vmatpush1.msra.mxu0 %v4211
      %4351 = vmatprep.subr.mxu0 0.0
      %4352 = vmatpush1.msra.mxu0 %v4210
      %4353 = vmatprep.subr.mxu0 0.0
      %4354 = vmatpush2.msra.mxu0 0.0
      %4355 = vmatprep.subr.mxu0 0.0
      %4356 = vmatpush2.msra.mxu0 0.0
      %4357 = vmatprep.subr.mxu0 0.0
      %4358 = vmatpush2.msra.mxu0 0.0
      %4359 = vmatprep.subr.mxu0 0.0
      %4360 = vmatpush2.msra.mxu0 0.0
      %4361 = vmatprep.subr.mxu0 0.0
      %4362 = vmatpush2.msra.mxu0 0.0
      %4363 = vmatprep.subr.mxu0 0.0
      %4364 = vmatpush2.msra.mxu0 0.0
      %4365 = vmatprep.subr.mxu0 0.0
      %4366 = vmatpush2.msra.mxu0 0.0
      %4367 = vmatprep.subr.mxu0 0.0
      %4368 = vmatpush2.msra.mxu0 0.0
      %4369 = vmatprep.subr.mxu0 0.0
      %4370 = vmatpush2.msra.mxu0 0.0
      %4371 = vmatprep.subr.mxu0 0.0
      %4372 = vmatpush2.msra.mxu0 0.0
      %4373 = vmatprep.subr.mxu0 0.0
      %4374 = vmatpush2.msra.mxu0 0.0
      %4375 = vmatprep.subr.mxu0 0.0
      %4376 = vmatpush2.msra.mxu0 0.0
      %4377 = vmatprep.subr.mxu0 0.0
      %4378 = vmatpush2.msra.mxu0 0.0
      %4379 = vmatprep.subr.mxu0 0.0
      %4380 = vmatpush2.msra.mxu0 0.0
      %4381 = vmatprep.subr.mxu0 0.0
      %4382 = vmatpush2.msra.mxu0 0.0
      %4383 = vmatprep.subr.mxu0 0.0
      %4384 = vmatpush2.msra.mxu0 0.0
      %4385 = vmatprep.mubr.f32.mxu0 0.0
      %4386 = vmatmul.mubr.f32.gmra.mxu0 %v4223
      %v4387 = vpop.f32.mrf.mxu0
      %v4388 = vadd.f32 %v4220, %v4387
      %v4389 = vpop.f32.mrf.mxu0
      %4390 = vmatprep.mubr.f32.mxu0 0.0
      %4391 = vmatmul.mubr.f32.gmra.mxu0 %v4226
      %v4392 = vpop.f32.mrf.mxu0
      %v4393 = vadd.f32 %v4220, %v4392
      %v4394 = vpop.f32.mrf.mxu0
      %4395 = vmatprep.mubr.f32.mxu0 0.0
      %4396 = vmatmul.mubr.f32.gmra.mxu0 %v4229
      %v4397 = vpop.f32.mrf.mxu0
      %v4398 = vadd.f32 %v4220, %v4397
      %v4399 = vpop.f32.mrf.mxu0
      %4400 = vmatprep.mubr.f32.mxu0 0.0
      %4401 = vmatmul.mubr.f32.gmra.mxu0 %v4232
      %v4402 = vpop.f32.mrf.mxu0
      %v4403 = vadd.f32 %v4220, %v4402
      %v4404 = vpop.f32.mrf.mxu0
      %4405 = vmatprep.mubr.f32.mxu0 0.0
      %4406 = vmatmul.mubr.f32.gmra.mxu0 %v4235
      %v4407 = vpop.f32.mrf.mxu0
      %v4408 = vadd.f32 %v4220, %v4407
      %v4409 = vpop.f32.mrf.mxu0
      %4410 = vmatprep.mubr.f32.mxu0 0.0
      %4411 = vmatmul.mubr.f32.gmra.mxu0 %v4238
      %v4412 = vpop.f32.mrf.mxu0
      %v4413 = vadd.f32 %v4220, %v4412
      %v4414 = vpop.f32.mrf.mxu0
      %4415 = vmatprep.mubr.f32.mxu0 0.0
      %4416 = vmatmul.mubr.f32.gmra.mxu0 %v4241
      %v4417 = vpop.f32.mrf.mxu0
      %v4418 = vadd.f32 %v4220, %v4417
      %v4419 = vpop.f32.mrf.mxu0
      %4420 = vmatprep.mubr.f32.mxu0 0.0
      %4421 = vmatmul.mubr.f32.gmra.mxu0 %v4244
      %v4422 = vpop.f32.mrf.mxu0
      %v4423 = vadd.f32 %v4220, %v4422
      %v4424 = vpop.f32.mrf.mxu0
      %4425 = vmatprep.mubr.f32.mxu0 0.0
      %4426 = vmatmul.mubr.f32.gmra.mxu0 %v4247
      %v4427 = vpop.f32.mrf.mxu0
      %v4428 = vadd.f32 %v4220, %v4427
      %v4429 = vpop.f32.mrf.mxu0
      %4430 = vmatprep.mubr.f32.mxu0 0.0
      %4431 = vmatmul.mubr.f32.gmra.mxu0 %v4250
      %v4432 = vpop.f32.mrf.mxu0
      %v4433 = vadd.f32 %v4220, %v4432
      %v4434 = vpop.f32.mrf.mxu0
      %4435 = vmatprep.mubr.f32.mxu0 0.0
      %4436 = vmatmul.mubr.f32.gmra.mxu0 %v4253
      %v4437 = vpop.f32.mrf.mxu0
      %v4438 = vadd.f32 %v4220, %v4437
      %v4439 = vpop.f32.mrf.mxu0
      %4440 = vmatprep.mubr.f32.mxu0 0.0
      %4441 = vmatmul.mubr.f32.gmra.mxu0 %v4256
      %v4442 = vpop.f32.mrf.mxu0
      %v4443 = vadd.f32 %v4220, %v4442
      %v4444 = vpop.f32.mrf.mxu0
      %4445 = vmatprep.mubr.f32.mxu0 0.0
      %4446 = vmatmul.mubr.f32.gmra.mxu0 %v4259
      %v4447 = vpop.f32.mrf.mxu0
      %v4448 = vadd.f32 %v4220, %v4447
      %v4449 = vpop.f32.mrf.mxu0
      %4450 = vmatprep.mubr.f32.mxu0 0.0
      %4451 = vmatmul.mubr.f32.gmra.mxu0 %v4262
      %v4452 = vpop.f32.mrf.mxu0
      %v4453 = vadd.f32 %v4220, %v4452
      %v4454 = vpop.f32.mrf.mxu0
      %4455 = vmatprep.mubr.f32.mxu0 0.0
      %4456 = vmatmul.mubr.f32.gmra.mxu0 %v4265
      %v4457 = vpop.f32.mrf.mxu0
      %v4458 = vadd.f32 %v4220, %v4457
      %v4459 = vpop.f32.mrf.mxu0
      %4460 = vmatprep.mubr.f32.mxu0 0.0
      %4461 = vmatmul.mubr.f32.gmra.mxu0 %v4268
      %v4462 = vpop.f32.mrf.mxu0
      %v4463 = vadd.f32 %v4220, %v4462
      %v4464 = vpop.f32.mrf.mxu0
      %4465 = vmatprep.mubr.f32.mxu0 0.0
      %4466 = vmatmul.mubr.f32.gmra.mxu0 %v4271
      %v4467 = vpop.f32.mrf.mxu0
      %v4468 = vadd.f32 %v4220, %v4467
      %v4469 = vpop.f32.mrf.mxu0
      %4470 = vmatprep.mubr.f32.mxu0 0.0
      %4471 = vmatmul.mubr.f32.gmra.mxu0 %v4274
      %v4472 = vpop.f32.mrf.mxu0
      %v4473 = vadd.f32 %v4220, %v4472
      %v4474 = vpop.f32.mrf.mxu0
      %4475 = vmatprep.mubr.f32.mxu0 0.0
      %4476 = vmatmul.mubr.f32.gmra.mxu0 %v4277
      %v4477 = vpop.f32.mrf.mxu0
      %v4478 = vadd.f32 %v4220, %v4477
      %v4479 = vpop.f32.mrf.mxu0
      %4480 = vmatprep.mubr.f32.mxu0 0.0
      %4481 = vmatmul.mubr.f32.gmra.mxu0 %v4280
      %v4482 = vpop.f32.mrf.mxu0
      %v4483 = vadd.f32 %v4220, %v4482
      %v4484 = vpop.f32.mrf.mxu0
      %4485 = vmatprep.mubr.f32.mxu0 0.0
      %4486 = vmatmul.mubr.f32.gmra.mxu0 %v4283
      %v4487 = vpop.f32.mrf.mxu0
      %v4488 = vadd.f32 %v4220, %v4487
      %v4489 = vpop.f32.mrf.mxu0
      %4490 = vmatprep.mubr.f32.mxu0 0.0
      %4491 = vmatmul.mubr.f32.gmra.mxu0 %v4286
      %v4492 = vpop.f32.mrf.mxu0
      %v4493 = vadd.f32 %v4220, %v4492
      %v4494 = vpop.f32.mrf.mxu0
      %4495 = vmatprep.mubr.f32.mxu0 0.0
      %4496 = vmatmul.mubr.f32.gmra.mxu0 %v4289
      %v4497 = vpop.f32.mrf.mxu0
      %v4498 = vadd.f32 %v4220, %v4497
      %v4499 = vpop.f32.mrf.mxu0
      %4500 = vmatprep.mubr.f32.mxu0 0.0
      %4501 = vmatmul.mubr.f32.gmra.mxu0 %v4292
      %v4502 = vpop.f32.mrf.mxu0
      %v4503 = vadd.f32 %v4220, %v4502
      %v4504 = vpop.f32.mrf.mxu0
      %4505 = vmatprep.mubr.f32.mxu0 0.0
      %4506 = vmatmul.mubr.f32.gmra.mxu0 %v4295
      %v4507 = vpop.f32.mrf.mxu0
      %v4508 = vadd.f32 %v4220, %v4507
      %v4509 = vpop.f32.mrf.mxu0
      %4510 = vmatprep.mubr.f32.mxu0 0.0
      %4511 = vmatmul.mubr.f32.gmra.mxu0 %v4298
      %v4512 = vpop.f32.mrf.mxu0
      %v4513 = vadd.f32 %v4220, %v4512
      %v4514 = vpop.f32.mrf.mxu0
      %4515 = vmatprep.mubr.f32.mxu0 0.0
      %4516 = vmatmul.mubr.f32.gmra.mxu0 %v4301
      %v4517 = vpop.f32.mrf.mxu0
      %v4518 = vadd.f32 %v4220, %v4517
      %v4519 = vpop.f32.mrf.mxu0
      %4520 = vmatprep.mubr.f32.mxu0 0.0
      %4521 = vmatmul.mubr.f32.gmra.mxu0 %v4304
      %v4522 = vpop.f32.mrf.mxu0
      %v4523 = vadd.f32 %v4220, %v4522
      %v4524 = vpop.f32.mrf.mxu0
      %4525 = vmatprep.mubr.f32.mxu0 0.0
      %4526 = vmatmul.mubr.f32.gmra.mxu0 %v4307
      %v4527 = vpop.f32.mrf.mxu0
      %v4528 = vadd.f32 %v4220, %v4527
      %v4529 = vpop.f32.mrf.mxu0
      %4530 = vmatprep.mubr.f32.mxu0 0.0
      %4531 = vmatmul.mubr.f32.gmra.mxu0 %v4310
      %v4532 = vpop.f32.mrf.mxu0
      %v4533 = vadd.f32 %v4220, %v4532
      %v4534 = vpop.f32.mrf.mxu0
      %4535 = vmatprep.mubr.f32.mxu0 0.0
      %4536 = vmatmul.mubr.f32.gmra.mxu0 %v4313
      %v4537 = vpop.f32.mrf.mxu0
      %v4538 = vadd.f32 %v4220, %v4537
      %v4539 = vpop.f32.mrf.mxu0
      %4540 = vmatprep.mubr.f32.mxu0 0.0
      %4541 = vmatmul.mubr.f32.gmra.mxu0 %v4316
      %v4542 = vpop.f32.mrf.mxu0
      %v4543 = vadd.f32 %v4220, %v4542
      %v4544 = vpop.f32.mrf.mxu0
      %4545 = vdwg.mxu0
      %4578 = vrot.lane.b32.xlu0 %v4388, 124
      %v4579 = vpop.permute.xlu0 %4578
      %4580 = vrot.lane.b32.xlu0 %v4393, 124
      %v4581 = vpop.permute.xlu0 %4580
      %4582 = vrot.lane.b32.xlu0 %v4398, 124
      %v4583 = vpop.permute.xlu0 %4582
      %4584 = vrot.lane.b32.xlu0 %v4403, 124
      %v4585 = vpop.permute.xlu0 %4584
      %4586 = vrot.lane.b32.xlu0 %v4408, 124
      %v4587 = vpop.permute.xlu0 %4586
      %4588 = vrot.lane.b32.xlu0 %v4413, 124
      %v4589 = vpop.permute.xlu0 %4588
      %4590 = vrot.lane.b32.xlu0 %v4418, 124
      %v4591 = vpop.permute.xlu0 %4590
      %4592 = vrot.lane.b32.xlu0 %v4423, 124
      %v4593 = vpop.permute.xlu0 %4592
      %4594 = vrot.lane.b32.xlu0 %v4428, 124
      %v4595 = vpop.permute.xlu0 %4594
      %4596 = vrot.lane.b32.xlu0 %v4433, 124
      %v4597 = vpop.permute.xlu0 %4596
      %4598 = vrot.lane.b32.xlu0 %v4438, 124
      %v4599 = vpop.permute.xlu0 %4598
      %4600 = vrot.lane.b32.xlu0 %v4443, 124
      %v4601 = vpop.permute.xlu0 %4600
      %4602 = vrot.lane.b32.xlu0 %v4448, 124
      %v4603 = vpop.permute.xlu0 %4602
      %4604 = vrot.lane.b32.xlu0 %v4453, 124
      %v4605 = vpop.permute.xlu0 %4604
      %4606 = vrot.lane.b32.xlu0 %v4458, 124
      %v4607 = vpop.permute.xlu0 %4606
      %4608 = vrot.lane.b32.xlu0 %v4463, 124
      %v4609 = vpop.permute.xlu0 %4608
      %4610 = vrot.lane.b32.xlu0 %v4468, 124
      %v4611 = vpop.permute.xlu0 %4610
      %4612 = vrot.lane.b32.xlu0 %v4473, 124
      %v4613 = vpop.permute.xlu0 %4612
      %4614 = vrot.lane.b32.xlu0 %v4478, 124
      %v4615 = vpop.permute.xlu0 %4614
      %4616 = vrot.lane.b32.xlu0 %v4483, 124
      %v4617 = vpop.permute.xlu0 %4616
      %4618 = vrot.lane.b32.xlu0 %v4488, 124
      %v4619 = vpop.permute.xlu0 %4618
      %4620 = vrot.lane.b32.xlu0 %v4493, 124
      %v4621 = vpop.permute.xlu0 %4620
      %4622 = vrot.lane.b32.xlu0 %v4498, 124
      %v4623 = vpop.permute.xlu0 %4622
      %4624 = vrot.lane.b32.xlu0 %v4503, 124
      %v4625 = vpop.permute.xlu0 %4624
      %4626 = vrot.lane.b32.xlu0 %v4508, 124
      %v4627 = vpop.permute.xlu0 %4626
      %4628 = vrot.lane.b32.xlu0 %v4513, 124
      %v4629 = vpop.permute.xlu0 %4628
      %4630 = vrot.lane.b32.xlu0 %v4518, 124
      %v4631 = vpop.permute.xlu0 %4630
      %4632 = vrot.lane.b32.xlu0 %v4523, 124
      %v4633 = vpop.permute.xlu0 %4632
      %4634 = vrot.lane.b32.xlu0 %v4528, 124
      %v4635 = vpop.permute.xlu0 %4634
      %4636 = vrot.lane.b32.xlu0 %v4533, 124
      %v4637 = vpop.permute.xlu0 %4636
      %4638 = vrot.lane.b32.xlu0 %v4538, 124
      %v4639 = vpop.permute.xlu0 %4638
      %4640 = vrot.lane.b32.xlu0 %v4543, 124
      %v4641 = vpop.permute.xlu0 %4640
      %v4674 = vmax.f32 %v4388, %v4579
      %v4675 = vmax.f32 %v4393, %v4581
      %v4676 = vmax.f32 %v4398, %v4583
      %v4677 = vmax.f32 %v4403, %v4585
      %v4678 = vmax.f32 %v4408, %v4587
      %v4679 = vmax.f32 %v4413, %v4589
      %v4680 = vmax.f32 %v4418, %v4591
      %v4681 = vmax.f32 %v4423, %v4593
      %v4682 = vmax.f32 %v4428, %v4595
      %v4683 = vmax.f32 %v4433, %v4597
      %v4684 = vmax.f32 %v4438, %v4599
      %v4685 = vmax.f32 %v4443, %v4601
      %v4686 = vmax.f32 %v4448, %v4603
      %v4687 = vmax.f32 %v4453, %v4605
      %v4688 = vmax.f32 %v4458, %v4607
      %v4689 = vmax.f32 %v4463, %v4609
      %v4690 = vmax.f32 %v4468, %v4611
      %v4691 = vmax.f32 %v4473, %v4613
      %v4692 = vmax.f32 %v4478, %v4615
      %v4693 = vmax.f32 %v4483, %v4617
      %v4694 = vmax.f32 %v4488, %v4619
      %v4695 = vmax.f32 %v4493, %v4621
      %v4696 = vmax.f32 %v4498, %v4623
      %v4697 = vmax.f32 %v4503, %v4625
      %v4698 = vmax.f32 %v4508, %v4627
      %v4699 = vmax.f32 %v4513, %v4629
      %v4700 = vmax.f32 %v4518, %v4631
      %v4701 = vmax.f32 %v4523, %v4633
      %v4702 = vmax.f32 %v4528, %v4635
      %v4703 = vmax.f32 %v4533, %v4637
      %v4704 = vmax.f32 %v4538, %v4639
      %v4705 = vmax.f32 %v4543, %v4641
      %v4706 = vld [vmem:[%s219] sm:$0xff]
      %v4707 = vld [vmem:[%s219 + $0x8] sm:$0xff]
      %v4708 = vld [vmem:[%s219 + $0x10] sm:$0xff]
      %v4709 = vld [vmem:[%s219 + $0x18] sm:$0xff]
      %v4710 = vld [vmem:[%s219 + $0x20] sm:$0xff]
      %v4711 = vld [vmem:[%s219 + $0x28] sm:$0xff]
      %v4712 = vld [vmem:[%s219 + $0x30] sm:$0xff]
      %v4713 = vld [vmem:[%s219 + $0x38] sm:$0xff]
      %v4714 = vld [vmem:[%s219 + $0x40] sm:$0xff]
      %v4715 = vld [vmem:[%s219 + $0x48] sm:$0xff]
      %v4716 = vld [vmem:[%s219 + $0x50] sm:$0xff]
      %v4717 = vld [vmem:[%s219 + $0x58] sm:$0xff]
      %v4718 = vld [vmem:[%s219 + $0x60] sm:$0xff]
      %v4719 = vld [vmem:[%s219 + $0x68] sm:$0xff]
      %v4720 = vld [vmem:[%s219 + $0x70] sm:$0xff]
      %v4721 = vld [vmem:[%s219 + $0x78] sm:$0xff]
      %v4722 = vld [vmem:[%s219 + $0x80] sm:$0xff]
      %v4723 = vld [vmem:[%s219 + $0x88] sm:$0xff]
      %v4724 = vld [vmem:[%s219 + $0x90] sm:$0xff]
      %v4725 = vld [vmem:[%s219 + $0x98] sm:$0xff]
      %v4726 = vld [vmem:[%s219 + $0xa0] sm:$0xff]
      %v4727 = vld [vmem:[%s219 + $0xa8] sm:$0xff]
      %v4728 = vld [vmem:[%s219 + $0xb0] sm:$0xff]
      %v4729 = vld [vmem:[%s219 + $0xb8] sm:$0xff]
      %v4730 = vld [vmem:[%s219 + $0xc0] sm:$0xff]
      %v4731 = vld [vmem:[%s219 + $0xc8] sm:$0xff]
      %v4732 = vld [vmem:[%s219 + $0xd0] sm:$0xff]
      %v4733 = vld [vmem:[%s219 + $0xd8] sm:$0xff]
      %v4734 = vld [vmem:[%s219 + $0xe0] sm:$0xff]
      %v4735 = vld [vmem:[%s219 + $0xe8] sm:$0xff]
      %v4736 = vld [vmem:[%s219 + $0xf0] sm:$0xff]
      %v4737 = vld [vmem:[%s219 + $0xf8] sm:$0xff]
      %v4738 = vadd.f32 %v4674, %v4706
      %v4739 = vadd.f32 %v4675, %v4707
      %v4740 = vadd.f32 %v4676, %v4708
      %v4741 = vadd.f32 %v4677, %v4709
      %v4742 = vadd.f32 %v4678, %v4710
      %v4743 = vadd.f32 %v4679, %v4711
      %v4744 = vadd.f32 %v4680, %v4712
      %v4745 = vadd.f32 %v4681, %v4713
      %v4746 = vadd.f32 %v4682, %v4714
      %v4747 = vadd.f32 %v4683, %v4715
      %v4748 = vadd.f32 %v4684, %v4716
      %v4749 = vadd.f32 %v4685, %v4717
      %v4750 = vadd.f32 %v4686, %v4718
      %v4751 = vadd.f32 %v4687, %v4719
      %v4752 = vadd.f32 %v4688, %v4720
      %v4753 = vadd.f32 %v4689, %v4721
      %v4754 = vadd.f32 %v4690, %v4722
      %v4755 = vadd.f32 %v4691, %v4723
      %v4756 = vadd.f32 %v4692, %v4724
      %v4757 = vadd.f32 %v4693, %v4725
      %v4758 = vadd.f32 %v4694, %v4726
      %v4759 = vadd.f32 %v4695, %v4727
      %v4760 = vadd.f32 %v4696, %v4728
      %v4761 = vadd.f32 %v4697, %v4729
      %v4762 = vadd.f32 %v4698, %v4730
      %v4763 = vadd.f32 %v4699, %v4731
      %v4764 = vadd.f32 %v4700, %v4732
      %v4765 = vadd.f32 %v4701, %v4733
      %v4766 = vadd.f32 %v4702, %v4734
      %v4767 = vadd.f32 %v4703, %v4735
      %v4768 = vadd.f32 %v4704, %v4736
      %v4769 = vadd.f32 %v4705, %v4737
      %4770 = vst.msk [vmem:[%s224] sm:$0xff] %vm372, %v4738
      %4771 = vst.msk [vmem:[%s224 + $0x8] sm:$0xff] %vm372, %v4739
      %4772 = vst.msk [vmem:[%s224 + $0x10] sm:$0xff] %vm372, %v4740
      %4773 = vst.msk [vmem:[%s224 + $0x18] sm:$0xff] %vm372, %v4741
      %4774 = vst.msk [vmem:[%s224 + $0x20] sm:$0xff] %vm372, %v4742
      %4775 = vst.msk [vmem:[%s224 + $0x28] sm:$0xff] %vm372, %v4743
      %4776 = vst.msk [vmem:[%s224 + $0x30] sm:$0xff] %vm372, %v4744
      %4777 = vst.msk [vmem:[%s224 + $0x38] sm:$0xff] %vm372, %v4745
      %4778 = vst.msk [vmem:[%s224 + $0x40] sm:$0xff] %vm372, %v4746
      %4779 = vst.msk [vmem:[%s224 + $0x48] sm:$0xff] %vm372, %v4747
      %4780 = vst.msk [vmem:[%s224 + $0x50] sm:$0xff] %vm372, %v4748
      %4781 = vst.msk [vmem:[%s224 + $0x58] sm:$0xff] %vm372, %v4749
      %4782 = vst.msk [vmem:[%s224 + $0x60] sm:$0xff] %vm372, %v4750
      %4783 = vst.msk [vmem:[%s224 + $0x68] sm:$0xff] %vm372, %v4751
      %4784 = vst.msk [vmem:[%s224 + $0x70] sm:$0xff] %vm372, %v4752
      %4785 = vst.msk [vmem:[%s224 + $0x78] sm:$0xff] %vm372, %v4753
      %4786 = vst.msk [vmem:[%s224 + $0x80] sm:$0xff] %vm372, %v4754
      %4787 = vst.msk [vmem:[%s224 + $0x88] sm:$0xff] %vm372, %v4755
      %4788 = vst.msk [vmem:[%s224 + $0x90] sm:$0xff] %vm372, %v4756
      %4789 = vst.msk [vmem:[%s224 + $0x98] sm:$0xff] %vm372, %v4757
      %4790 = vst.msk [vmem:[%s224 + $0xa0] sm:$0xff] %vm372, %v4758
      %4791 = vst.msk [vmem:[%s224 + $0xa8] sm:$0xff] %vm372, %v4759
      %4792 = vst.msk [vmem:[%s224 + $0xb0] sm:$0xff] %vm372, %v4760
      %4793 = vst.msk [vmem:[%s224 + $0xb8] sm:$0xff] %vm372, %v4761
      %4794 = vst.msk [vmem:[%s224 + $0xc0] sm:$0xff] %vm372, %v4762
      %4795 = vst.msk [vmem:[%s224 + $0xc8] sm:$0xff] %vm372, %v4763
      %4796 = vst.msk [vmem:[%s224 + $0xd0] sm:$0xff] %vm372, %v4764
      %4797 = vst.msk [vmem:[%s224 + $0xd8] sm:$0xff] %vm372, %v4765
      %4798 = vst.msk [vmem:[%s224 + $0xe0] sm:$0xff] %vm372, %v4766
      %4799 = vst.msk [vmem:[%s224 + $0xe8] sm:$0xff] %vm372, %v4767
      %4800 = vst.msk [vmem:[%s224 + $0xf0] sm:$0xff] %vm372, %v4768
      %4801 = vst.msk [vmem:[%s224 + $0xf8] sm:$0xff] %vm372, %v4769
      %p4802 = scmp.lt.s32.totalorder %s16, 1
      %s4803 = scalar_select %p4802, %s16, 1
      %s4804 = smul.addr %s4803, 32
      %s4805 = smul.addr %s4804, 8
      %s4806 = scalar_lea.vmem %s5, %s4805
      // Predicated region
      $region45: #{tpu_custom_call.1} parent=39 // pred_check
        %p4807 = pneg %p144
      $region46: #{tpu_custom_call.1} parent=39 // pred_check_branch
        %4809 = sbr.rel (%p4807) target = $region48
      $region47: #{tpu_custom_call.1} parent=39 // pred_region
        _
      $region48: #{tpu_custom_call.1} parent=39 // pred_fallthru
        _
    $region40: #{tpu_custom_call.1} parent=5 // pred_fallthru
      _
    %p4810 = scmp.le.s32.totalorder 2, %s11
    // Predicated region
    $region49: #{tpu_custom_call.1} parent=5 // pred_check
      %p4811 = pneg %p4810
    $region50: #{tpu_custom_call.1} parent=5 // pred_check_branch
      %4813 = sbr.rel (%p4811) target = $region52
    $region51: #{tpu_custom_call.1} parent=5 // pred_region
      %s4814 = ssub.s32 %s11, 2
      // Predicated region
      $region53: #{tpu_custom_call.1} parent=51 // pred_check
        %p4815 = pneg %p150
      $region54: #{tpu_custom_call.1} parent=51 // pred_check_branch
        %4817 = sbr.rel (%p4815) target = $region56
      $region55: #{tpu_custom_call.1} parent=51 // pred_region
        %p4818 = scmp.lt.s32.totalorder %s17, 1
        %s4819 = scalar_select %p4818, %s17, 1
        %s4820 = smul.addr %s4819, 32
        %s4821 = smul.addr %s4820, 8
        %s4822 = scalar_lea.vmem %s5, %s4821
      $region56: #{tpu_custom_call.1} parent=51 // pred_fallthru
        _
    $region52: #{tpu_custom_call.1} parent=5 // pred_fallthru
      _
  $region6: #{tpu_custom_call.1} parent=0 // loop_footer
    %s15 = sadd.s32 1, %s11
  $region7: #{tpu_custom_call.1} parent=0 // loop_footer_branch
    %10 = sbr.rel target = $region3
  $region8: #{tpu_custom_call.1} parent=0 // loop_exit
    _

</llo_original>
